<compile_context>
chip_gen: v6e
topology: v6e:2x2x1
jax: 0.10.0
libtpu: 0.0.40
codegen_flags: <defaults>
</compile_context>

<pallas_src>
import functools

import jax
import jax.numpy as jnp
from jax import lax
from jax.experimental import pallas as pl
from jax.experimental.pallas import tpu as pltpu


def _round_up(x, m):
    return (x + m - 1) // m * m


# ----------------------------------------------------------------------------
# Shared LSTM recurrence (operates on the pre-computed input projection).
# ----------------------------------------------------------------------------
def _lstm_recurrence(xp_ref, whh_ref, hs_ref, *, seq_len, batch_p, hidden_p,
                     unroll):
    """
    xp_ref : (T*Bp, 4*Hp)  X @ W_ih^T + (b_ih + b_hh), time-major rows
    whh_ref: (Hp, 4*Hp)    W_hh^T, gate blocks lane-aligned to Hp (i, f, g, o)
    hs_ref : (T*Bp, Hp)    output hidden states (time-major)
    """
    Bp, Hp, T = batch_p, hidden_p, seq_len

    def step(t, carry):
        h, c = carry
        row = t * Bp                                   # Bp % 8 == 0 -> aligned
        gates = xp_ref[pl.ds(row, Bp), :] + jnp.dot(
            h, whh_ref[...], preferred_element_type=jnp.float32)   # (Bp, 4Hp)

        # 128-lane-aligned gate blocks (PyTorch LSTM order i, f, g, o).
        i_g = jax.nn.sigmoid(gates[:, 0 * Hp:1 * Hp])
        f_g = jax.nn.sigmoid(gates[:, 1 * Hp:2 * Hp])
        g_g = jnp.tanh(gates[:, 2 * Hp:3 * Hp])
        o_g = jax.nn.sigmoid(gates[:, 3 * Hp:4 * Hp])

        c_new = f_g * c + i_g * g_g
        h_new = o_g * jnp.tanh(c_new)
        hs_ref[pl.ds(row, Bp), :] = h_new              # full (8,128)-tile store
        return (h_new, c_new)

    h0 = jnp.zeros((Bp, Hp), jnp.float32)
    lax.fori_loop(0, T, step, (h0, h0), unroll=unroll)


# ----------------------------------------------------------------------------
# Kernel 1a: fused embedding (one-hot MXU matmul) + input projection + LSTM.
# ----------------------------------------------------------------------------
def lstm_embed_kernel(tok_ref, emb_ref, wih_ref, whh_ref, b_ref, hs_ref,
                      xp_ref, *, seq_len, batch_p, hidden_p, vocab_p, unroll):
    """
    tok_ref: (T*Bp, 1)     int32 token ids, time-major rows
    emb_ref: (Vp, Ep)      padded embedding table
    wih_ref: (Ep, 4*Hp)    W_ih^T, gate blocks lane-aligned to Hp
    whh_ref: (Hp, 4*Hp)    W_hh^T
    b_ref  : (1, 4*Hp)     b_ih + b_hh (padded lanes zero)
    hs_ref : (T*Bp, Hp)    output hidden states (time-major)
    xp_ref : (T*Bp, 4*Hp)  VMEM scratch: X @ W_ih + b for all timesteps
    """
    rows = seq_len * batch_p
    # Embedding lookup as one-hot matmul: avoids any gather, runs on the MXU.
    lane_ids = lax.broadcasted_iota(jnp.int32, (rows, vocab_p), 1)
    onehot = (lane_ids == tok_ref[...]).astype(jnp.float32)        # (rows, Vp)
    x = jnp.dot(onehot, emb_ref[...],
                preferred_element_type=jnp.float32)                # (rows, Ep)
    # Hoisted input projection: one large MXU matmul + a single bias add.
    xp_ref[...] = (jnp.dot(x, wih_ref[...],
                           preferred_element_type=jnp.float32) + b_ref[...])
    _lstm_recurrence(xp_ref, whh_ref, hs_ref, seq_len=seq_len,
                     batch_p=batch_p, hidden_p=hidden_p, unroll=unroll)


# ----------------------------------------------------------------------------
# Kernel 1b: fallback (pre-embedded X from a JAX-side gather, large vocabs).
# ----------------------------------------------------------------------------
def lstm_kernel(x_ref, wih_ref, whh_ref, b_ref, hs_ref, xp_ref, *,
                seq_len, batch_p, hidden_p, unroll):
    xp_ref[...] = (jnp.dot(x_ref[...], wih_ref[...],
                           preferred_element_type=jnp.float32) + b_ref[...])
    _lstm_recurrence(xp_ref, whh_ref, hs_ref, seq_len=seq_len,
                     batch_p=batch_p, hidden_p=hidden_p, unroll=unroll)


# ----------------------------------------------------------------------------
# Kernel 2: output (vocab) projection, grid-tiled over rows and vocab lanes.
# ----------------------------------------------------------------------------
def fc_kernel(hs_ref, wfc_ref, bfc_ref, out_ref):
    out_ref[...] = (jnp.dot(hs_ref[...], wfc_ref[...],
                            preferred_element_type=jnp.float32) + bfc_ref[...])


def joke_generator_forward(tokens, params):
    """tokens: (B, T) int32 -> logits (B, T, V) float32 (matches PyTorch forward)."""
    emb_table, w_ih, w_hh, b_ih, b_hh, w_fc, b_fc = (
        params["embedding"], params["w_ih"], params["w_hh"],
        params["b_ih"], params["b_hh"], params["w_fc"], params["b_fc"])

    B, T = tokens.shape
    V, E = emb_table.shape
    H = w_hh.shape[1]

    # Pad to native TPU tiles: 8 sublanes (batch), 128 lanes (feature dims).
    Bp = _round_up(B, 8)
    Ep = _round_up(E, 128)
    Hp = _round_up(H, 128)
    Vp = _round_up(V, 128)
    rows = T * Bp

    f32 = jnp.float32
    unroll = T <= 32                       # short, static T -> fully unroll

    # ---- weight prep: padded, gate blocks lane-aligned; padded entries are
    #      zero so padded h/c lanes stay exactly zero through the recurrence.
    wih_p = jnp.zeros((Ep, 4 * Hp), f32)
    whh_p = jnp.zeros((Hp, 4 * Hp), f32)
    b_p = jnp.zeros((1, 4 * Hp), f32)
    b_comb = (b_ih + b_hh).astype(f32)
    for g in range(4):
        wih_p = wih_p.at[:E, g * Hp:g * Hp + H].set(w_ih[g * H:(g + 1) * H, :].T)
        whh_p = whh_p.at[:H, g * Hp:g * Hp + H].set(w_hh[g * H:(g + 1) * H, :].T)
        b_p = b_p.at[0, g * Hp:g * Hp + H].set(b_comb[g * H:(g + 1) * H])

    wfc_p = jnp.zeros((Hp, Vp), f32).at[:H, :V].set(w_fc.T)
    bfc_p = jnp.zeros((1, Vp), f32).at[0, :V].set(b_fc)

    vmem = pl.BlockSpec(memory_space=pltpu.MemorySpace.VMEM)

    # Fuse the embedding lookup in-kernel (one-hot MXU matmul) unless the
    # table / one-hot slab would be uncomfortably large for VMEM.
    fuse_embedding = (Vp * Ep + rows * Vp) * 4 <= 8 * 1024 * 1024

    if fuse_embedding:
        emb_p = jnp.zeros((Vp, Ep), f32).at[:V, :E].set(emb_table.astype(f32))
        tok_p = jnp.zeros((Bp, T), jnp.int32).at[:B, :].set(
            tokens.astype(jnp.int32))
        tok_tm = jnp.transpose(tok_p, (1, 0)).reshape(rows, 1)  # time-major

        hs_tm = pl.pallas_call(
            functools.partial(lstm_embed_kernel, seq_len=T, batch_p=Bp,
                              hidden_p=Hp, vocab_p=Vp, unroll=unroll),
            out_shape=jax.ShapeDtypeStruct((rows, Hp), f32),
            in_specs=[vmem] * 5,
            out_specs=vmem,
            scratch_shapes=[pltpu.VMEM((rows, 4 * Hp), f32)],
        )(tok_tm, emb_p, wih_p, whh_p, b_p)
    else:
        # Fallback: embedding gather in plain JAX for very large vocab tables.
        x = emb_table[tokens].astype(f32)                        # (B, T, E)
        x = jnp.pad(x, ((0, Bp - B), (0, 0), (0, Ep - E)))       # (Bp, T, Ep)
        x_tm = jnp.transpose(x, (1, 0, 2)).reshape(rows, Ep)     # time-major

        hs_tm = pl.pallas_call(
            functools.partial(lstm_kernel, seq_len=T, batch_p=Bp, hidden_p=Hp,
                              unroll=unroll),
            out_shape=jax.ShapeDtypeStruct((rows, Hp), f32),
            in_specs=[vmem] * 4,
            out_specs=vmem,
            scratch_shapes=[pltpu.VMEM((rows, 4 * Hp), f32)],
        )(x_tm, wih_p, whh_p, b_p)

    # Reorder only the small hidden slab to batch-major rows (b*T + t), so the
    # big logits tensor is emitted directly in (B, T, V) layout downstream.
    hs_bm = jnp.transpose(hs_tm.reshape(T, Bp, Hp), (1, 0, 2)).reshape(rows, Hp)

    # ---- kernel 2: vocab projection, tiled over rows and vocab lanes. ----
    if rows % 256 == 0:
        row_tile = 256
    elif rows % 128 == 0:
        row_tile = 128
    else:
        row_tile = rows                                           # rows % 8 == 0
    if Vp % 512 == 0:
        v_tile = 512
    elif Vp % 256 == 0:
        v_tile = 256
    else:
        v_tile = 128

    out_flat = pl.pallas_call(
        fc_kernel,
        out_shape=jax.ShapeDtypeStruct((rows, Vp), f32),
        grid=(rows // row_tile, Vp // v_tile),
        in_specs=[pl.BlockSpec((row_tile, Hp), lambda i, j: (i, 0)),
                  pl.BlockSpec((Hp, v_tile), lambda i, j: (0, j)),
                  pl.BlockSpec((1, v_tile), lambda i, j: (0, j))],
        out_specs=pl.BlockSpec((row_tile, v_tile), lambda i, j: (i, j)),
        compiler_params=pltpu.CompilerParams(
            dimension_semantics=("parallel", "parallel")),
    )(hs_bm, wfc_p, bfc_p)

    # Free reshape (row index is b*T + t) + slice away the padding.
    return out_flat.reshape(Bp, T, Vp)[:B, :, :V]


def _reference_forward(tokens, params):
    """Pure-JAX reference of the PyTorch forward (for correctness check)."""
    emb_table, w_ih, w_hh, b_ih, b_hh, w_fc, b_fc = (
        params["embedding"], params["w_ih"], params["w_hh"],
        params["b_ih"], params["b_hh"], params["w_fc"], params["b_fc"])
    B, T = tokens.shape
    H = w_hh.shape[1]
    emb = emb_table[tokens]                               # (B, T, E)

    def step(carry, x_t):
        h, c = carry
        gates = x_t @ w_ih.T + b_ih + h @ w_hh.T + b_hh
        i = jax.nn.sigmoid(gates[:, 0 * H:1 * H])
        f = jax.nn.sigmoid(gates[:, 1 * H:2 * H])
        g = jnp.tanh(gates[:, 2 * H:3 * H])
        o = jax.nn.sigmoid(gates[:, 3 * H:4 * H])
        c = f * c + i * g
        h = o * jnp.tanh(c)
        return (h, c), h

    h0 = jnp.zeros((B, H), jnp.float32)
    (_, _), hs = lax.scan(step, (h0, h0), jnp.transpose(emb, (1, 0, 2)))
    hs = jnp.transpose(hs, (1, 0, 2))                     # (B, T, H)
    return hs @ w_fc.T + b_fc


def init_params(key, vocab_size, embed_dim, hidden_dim):
    ks = jax.random.split(key, 7)
    s = 0.1
    return {
        "embedding": s * jax.random.normal(ks[0], (vocab_size, embed_dim), jnp.float32),
        "w_ih": s * jax.random.normal(ks[1], (4 * hidden_dim, embed_dim), jnp.float32),
        "w_hh": s * jax.random.normal(ks[2], (4 * hidden_dim, hidden_dim), jnp.float32),
        "b_ih": s * jax.random.normal(ks[3], (4 * hidden_dim,), jnp.float32),
        "b_hh": s * jax.random.normal(ks[4], (4 * hidden_dim,), jnp.float32),
        "w_fc": s * jax.random.normal(ks[5], (vocab_size, hidden_dim), jnp.float32),
        "b_fc": s * jax.random.normal(ks[6], (vocab_size,), jnp.float32),
    }


if __name__ == "__main__":
    VOCAB, EMBED, HIDDEN = 128, 32, 32
    B, T = 2, 8

    key = jax.random.PRNGKey(0)
    k_params, k_tok = jax.random.split(key)
    params = init_params(k_params, VOCAB, EMBED, HIDDEN)
    tokens = jax.random.randint(k_tok, (B, T), 0, VOCAB, dtype=jnp.int32)

    logits = jax.jit(joke_generator_forward)(tokens, params)
    logits = jax.block_until_ready(logits)

    ref = _reference_forward(tokens, params)
    assert logits.shape == (B, T, VOCAB)
    assert jnp.allclose(logits, ref, rtol=1e-3, atol=1e-4), "mismatch vs reference"

    print("KERNEL_OK")
</pallas_src>

<mosaic_0001>
module attributes {stable_mosaic.version = 11 : i64} {
  func.func @lstm_embed_kernel(%arg0: memref<64x1xi32, #tpu.memory_space<vmem>>, %arg1: memref<128x128xf32, #tpu.memory_space<vmem>>, %arg2: memref<128x512xf32, #tpu.memory_space<vmem>>, %arg3: memref<128x512xf32, #tpu.memory_space<vmem>>, %arg4: memref<1x512xf32, #tpu.memory_space<vmem>>, %arg5: memref<64x128xf32, #tpu.memory_space<vmem>>, %arg6: memref<64x512xf32, #tpu.memory_space<vmem>>) attributes {dimension_semantics = [], scalar_prefetch = 0 : i64, scratch_operands = 1 : i64, tpu.core_type = #tpu.core_type<tc>} {
    %0 = tpu.iota {dimensions = array<i32: 1>} : vector<64x128xi32>
    %c0 = arith.constant 0 : index
    %c0_0 = arith.constant 0 : index
    %1 = vector.load %arg0[%c0, %c0_0] : memref<64x1xi32, #tpu.memory_space<vmem>>, vector<64x1xi32>
    %2 = vector.broadcast %1 : vector<64x1xi32> to vector<64x128xi32>
    %3 = arith.cmpi eq, %0, %2 : vector<64x128xi32>
    %4 = arith.extui %3 : vector<64x128xi1> to vector<64x128xi32>
    %5 = arith.sitofp %4 : vector<64x128xi32> to vector<64x128xf32>
    %c0_1 = arith.constant 0 : index
    %c0_2 = arith.constant 0 : index
    %6 = vector.load %arg1[%c0_1, %c0_2] : memref<128x128xf32, #tpu.memory_space<vmem>>, vector<128x128xf32>
    %cst = arith.constant dense<0.000000e+00> : vector<64x128xf32>
    %7 = tpu.matmul %5, %6, %cst {dimension_numbers = #tpu.dot_dimension_numbers<[1], [0], [0], [1], [0, 0, 1, 1], [], []>} : vector<64x128xf32>, vector<128x128xf32>, vector<64x128xf32> -> vector<64x128xf32>
    %c0_3 = arith.constant 0 : index
    %c0_4 = arith.constant 0 : index
    %8 = vector.load %arg2[%c0_3, %c0_4] : memref<128x512xf32, #tpu.memory_space<vmem>>, vector<128x512xf32>
    %cst_5 = arith.constant dense<0.000000e+00> : vector<64x512xf32>
    %9 = tpu.matmul %7, %8, %cst_5 {dimension_numbers = #tpu.dot_dimension_numbers<[1], [0], [0], [1], [0, 0, 1, 1], [], []>} : vector<64x128xf32>, vector<128x512xf32>, vector<64x512xf32> -> vector<64x512xf32>
    %c0_6 = arith.constant 0 : index
    %c0_7 = arith.constant 0 : index
    %10 = vector.load %arg4[%c0_6, %c0_7] : memref<1x512xf32, #tpu.memory_space<vmem>>, vector<1x512xf32>
    %11 = vector.broadcast %10 : vector<1x512xf32> to vector<64x512xf32>
    %12 = arith.addf %9, %11 : vector<64x512xf32>
    %c0_8 = arith.constant 0 : index
    %c0_9 = arith.constant 0 : index
    %13 = vector.load %arg6[%c0_8, %c0_9] : memref<64x512xf32, #tpu.memory_space<vmem>>, vector<64x512xf32>
    tpu.vector_store %arg6[%c0_8, %c0_9], %12 {strides = array<i32>} : memref<64x512xf32, #tpu.memory_space<vmem>>, vector<64x512xf32>,
    %cst_10 = arith.constant 0.000000e+00 : f32
    %14 = vector.broadcast %cst_10 : f32 to vector<8x128xf32>
    %c0_i32 = arith.constant 0 : i32
    %c8_i32 = arith.constant 8 : i32
    %15 = arith.muli %c0_i32, %c8_i32 : i32
    %16 = arith.index_cast %15 : i32 to index
    %c0_11 = arith.constant 0 : index
    %17 = vector.load %arg6[%16, %c0_11] : memref<64x512xf32, #tpu.memory_space<vmem>>, vector<8x512xf32>
    %c0_12 = arith.constant 0 : index
    %c0_13 = arith.constant 0 : index
    %18 = vector.load %arg3[%c0_12, %c0_13] : memref<128x512xf32, #tpu.memory_space<vmem>>, vector<128x512xf32>
    %cst_14 = arith.constant dense<0.000000e+00> : vector<8x512xf32>
    %19 = tpu.matmul %14, %18, %cst_14 {dimension_numbers = #tpu.dot_dimension_numbers<[1], [0], [0], [1], [0, 0, 1, 1], [], []>} : vector<8x128xf32>, vector<128x512xf32>, vector<8x512xf32> -> vector<8x512xf32>
    %20 = arith.addf %17, %19 : vector<8x512xf32>
    %21 = vector.extract_strided_slice %20 {offsets = [0, 0], sizes = [8, 128], strides = [1, 1]} : vector<8x512xf32> to vector<8x128xf32>
    %22 = arith.negf %21 : vector<8x128xf32>
    %23 = math.exp %22 : vector<8x128xf32>
    %cst_15 = arith.constant 1.000000e+00 : f32
    %24 = vector.broadcast %cst_15 : f32 to vector<8x128xf32>
    %25 = arith.addf %24, %23 : vector<8x128xf32>
    %26 = arith.divf %24, %25 : vector<8x128xf32>
    %27 = vector.extract_strided_slice %20 {offsets = [0, 128], sizes = [8, 128], strides = [1, 1]} : vector<8x512xf32> to vector<8x128xf32>
    %28 = arith.negf %27 : vector<8x128xf32>
    %29 = math.exp %28 : vector<8x128xf32>
    %cst_16 = arith.constant 1.000000e+00 : f32
    %30 = vector.broadcast %cst_16 : f32 to vector<8x128xf32>
    %31 = arith.addf %30, %29 : vector<8x128xf32>
    %32 = arith.divf %30, %31 : vector<8x128xf32>
    %33 = vector.extract_strided_slice %20 {offsets = [0, 256], sizes = [8, 128], strides = [1, 1]} : vector<8x512xf32> to vector<8x128xf32>
    %34 = math.tanh %33 : vector<8x128xf32>
    %35 = vector.extract_strided_slice %20 {offsets = [0, 384], sizes = [8, 128], strides = [1, 1]} : vector<8x512xf32> to vector<8x128xf32>
    %36 = arith.negf %35 : vector<8x128xf32>
    %37 = math.exp %36 : vector<8x128xf32>
    %cst_17 = arith.constant 1.000000e+00 : f32
    %38 = vector.broadcast %cst_17 : f32 to vector<8x128xf32>
    %39 = arith.addf %38, %37 : vector<8x128xf32>
    %40 = arith.divf %38, %39 : vector<8x128xf32>
    %41 = arith.mulf %32, %14 : vector<8x128xf32>
    %42 = arith.mulf %26, %34 : vector<8x128xf32>
    %43 = arith.addf %41, %42 : vector<8x128xf32>
    %44 = math.tanh %43 : vector<8x128xf32>
    %45 = arith.mulf %40, %44 : vector<8x128xf32>
    %46 = arith.index_cast %15 : i32 to index
    %c0_18 = arith.constant 0 : index
    %47 = vector.load %arg5[%46, %c0_18] : memref<64x128xf32, #tpu.memory_space<vmem>>, vector<8x128xf32>
    tpu.vector_store %arg5[%46, %c0_18], %45 {strides = array<i32>} : memref<64x128xf32, #tpu.memory_space<vmem>>, vector<8x128xf32>,
    %c1_i32 = arith.constant 1 : i32
    %c8_i32_19 = arith.constant 8 : i32
    %48 = arith.muli %c1_i32, %c8_i32_19 : i32
    %49 = arith.index_cast %48 : i32 to index
    %c0_20 = arith.constant 0 : index
    %50 = vector.load %arg6[%49, %c0_20] : memref<64x512xf32, #tpu.memory_space<vmem>>, vector<8x512xf32>
    %c0_21 = arith.constant 0 : index
    %c0_22 = arith.constant 0 : index
    %51 = vector.load %arg3[%c0_21, %c0_22] : memref<128x512xf32, #tpu.memory_space<vmem>>, vector<128x512xf32>
    %cst_23 = arith.constant dense<0.000000e+00> : vector<8x512xf32>
    %52 = tpu.matmul %45, %51, %cst_23 {dimension_numbers = #tpu.dot_dimension_numbers<[1], [0], [0], [1], [0, 0, 1, 1], [], []>} : vector<8x128xf32>, vector<128x512xf32>, vector<8x512xf32> -> vector<8x512xf32>
    %53 = arith.addf %50, %52 : vector<8x512xf32>
    %54 = vector.extract_strided_slice %53 {offsets = [0, 0], sizes = [8, 128], strides = [1, 1]} : vector<8x512xf32> to vector<8x128xf32>
    %55 = arith.negf %54 : vector<8x128xf32>
    %56 = math.exp %55 : vector<8x128xf32>
    %cst_24 = arith.constant 1.000000e+00 : f32
    %57 = vector.broadcast %cst_24 : f32 to vector<8x128xf32>
    %58 = arith.addf %57, %56 : vector<8x128xf32>
    %59 = arith.divf %57, %58 : vector<8x128xf32>
    %60 = vector.extract_strided_slice %53 {offsets = [0, 128], sizes = [8, 128], strides = [1, 1]} : vector<8x512xf32> to vector<8x128xf32>
    %61 = arith.negf %60 : vector<8x128xf32>
    %62 = math.exp %61 : vector<8x128xf32>
    %cst_25 = arith.constant 1.000000e+00 : f32
    %63 = vector.broadcast %cst_25 : f32 to vector<8x128xf32>
    %64 = arith.addf %63, %62 : vector<8x128xf32>
    %65 = arith.divf %63, %64 : vector<8x128xf32>
    %66 = vector.extract_strided_slice %53 {offsets = [0, 256], sizes = [8, 128], strides = [1, 1]} : vector<8x512xf32> to vector<8x128xf32>
    %67 = math.tanh %66 : vector<8x128xf32>
    %68 = vector.extract_strided_slice %53 {offsets = [0, 384], sizes = [8, 128], strides = [1, 1]} : vector<8x512xf32> to vector<8x128xf32>
    %69 = arith.negf %68 : vector<8x128xf32>
    %70 = math.exp %69 : vector<8x128xf32>
    %cst_26 = arith.constant 1.000000e+00 : f32
    %71 = vector.broadcast %cst_26 : f32 to vector<8x128xf32>
    %72 = arith.addf %71, %70 : vector<8x128xf32>
    %73 = arith.divf %71, %72 : vector<8x128xf32>
    %74 = arith.mulf %65, %43 : vector<8x128xf32>
    %75 = arith.mulf %59, %67 : vector<8x128xf32>
    %76 = arith.addf %74, %75 : vector<8x128xf32>
    %77 = math.tanh %76 : vector<8x128xf32>
    %78 = arith.mulf %73, %77 : vector<8x128xf32>
    %79 = arith.index_cast %48 : i32 to index
    %c0_27 = arith.constant 0 : index
    %80 = vector.load %arg5[%79, %c0_27] : memref<64x128xf32, #tpu.memory_space<vmem>>, vector<8x128xf32>
    tpu.vector_store %arg5[%79, %c0_27], %78 {strides = array<i32>} : memref<64x128xf32, #tpu.memory_space<vmem>>, vector<8x128xf32>,
    %c2_i32 = arith.constant 2 : i32
    %c8_i32_28 = arith.constant 8 : i32
    %81 = arith.muli %c2_i32, %c8_i32_28 : i32
    %82 = arith.index_cast %81 : i32 to index
    %c0_29 = arith.constant 0 : index
    %83 = vector.load %arg6[%82, %c0_29] : memref<64x512xf32, #tpu.memory_space<vmem>>, vector<8x512xf32>
    %c0_30 = arith.constant 0 : index
    %c0_31 = arith.constant 0 : index
    %84 = vector.load %arg3[%c0_30, %c0_31] : memref<128x512xf32, #tpu.memory_space<vmem>>, vector<128x512xf32>
    %cst_32 = arith.constant dense<0.000000e+00> : vector<8x512xf32>
    %85 = tpu.matmul %78, %84, %cst_32 {dimension_numbers = #tpu.dot_dimension_numbers<[1], [0], [0], [1], [0, 0, 1, 1], [], []>} : vector<8x128xf32>, vector<128x512xf32>, vector<8x512xf32> -> vector<8x512xf32>
    %86 = arith.addf %83, %85 : vector<8x512xf32>
    %87 = vector.extract_strided_slice %86 {offsets = [0, 0], sizes = [8, 128], strides = [1, 1]} : vector<8x512xf32> to vector<8x128xf32>
    %88 = arith.negf %87 : vector<8x128xf32>
    %89 = math.exp %88 : vector<8x128xf32>
    %cst_33 = arith.constant 1.000000e+00 : f32
    %90 = vector.broadcast %cst_33 : f32 to vector<8x128xf32>
    %91 = arith.addf %90, %89 : vector<8x128xf32>
    %92 = arith.divf %90, %91 : vector<8x128xf32>
    %93 = vector.extract_strided_slice %86 {offsets = [0, 128], sizes = [8, 128], strides = [1, 1]} : vector<8x512xf32> to vector<8x128xf32>
    %94 = arith.negf %93 : vector<8x128xf32>
    %95 = math.exp %94 : vector<8x128xf32>
    %cst_34 = arith.constant 1.000000e+00 : f32
    %96 = vector.broadcast %cst_34 : f32 to vector<8x128xf32>
    %97 = arith.addf %96, %95 : vector<8x128xf32>
    %98 = arith.divf %96, %97 : vector<8x128xf32>
    %99 = vector.extract_strided_slice %86 {offsets = [0, 256], sizes = [8, 128], strides = [1, 1]} : vector<8x512xf32> to vector<8x128xf32>
    %100 = math.tanh %99 : vector<8x128xf32>
    %101 = vector.extract_strided_slice %86 {offsets = [0, 384], sizes = [8, 128], strides = [1, 1]} : vector<8x512xf32> to vector<8x128xf32>
    %102 = arith.negf %101 : vector<8x128xf32>
    %103 = math.exp %102 : vector<8x128xf32>
    %cst_35 = arith.constant 1.000000e+00 : f32
    %104 = vector.broadcast %cst_35 : f32 to vector<8x128xf32>
    %105 = arith.addf %104, %103 : vector<8x128xf32>
    %106 = arith.divf %104, %105 : vector<8x128xf32>
    %107 = arith.mulf %98, %76 : vector<8x128xf32>
    %108 = arith.mulf %92, %100 : vector<8x128xf32>
    %109 = arith.addf %107, %108 : vector<8x128xf32>
    %110 = math.tanh %109 : vector<8x128xf32>
    %111 = arith.mulf %106, %110 : vector<8x128xf32>
    %112 = arith.index_cast %81 : i32 to index
    %c0_36 = arith.constant 0 : index
    %113 = vector.load %arg5[%112, %c0_36] : memref<64x128xf32, #tpu.memory_space<vmem>>, vector<8x128xf32>
    tpu.vector_store %arg5[%112, %c0_36], %111 {strides = array<i32>} : memref<64x128xf32, #tpu.memory_space<vmem>>, vector<8x128xf32>,
    %c3_i32 = arith.constant 3 : i32
    %c8_i32_37 = arith.constant 8 : i32
    %114 = arith.muli %c3_i32, %c8_i32_37 : i32
    %115 = arith.index_cast %114 : i32 to index
    %c0_38 = arith.constant 0 : index
    %116 = vector.load %arg6[%115, %c0_38] : memref<64x512xf32, #tpu.memory_space<vmem>>, vector<8x512xf32>
    %c0_39 = arith.constant 0 : index
    %c0_40 = arith.constant 0 : index
    %117 = vector.load %arg3[%c0_39, %c0_40] : memref<128x512xf32, #tpu.memory_space<vmem>>, vector<128x512xf32>
    %cst_41 = arith.constant dense<0.000000e+00> : vector<8x512xf32>
    %118 = tpu.matmul %111, %117, %cst_41 {dimension_numbers = #tpu.dot_dimension_numbers<[1], [0], [0], [1], [0, 0, 1, 1], [], []>} : vector<8x128xf32>, vector<128x512xf32>, vector<8x512xf32> -> vector<8x512xf32>
    %119 = arith.addf %116, %118 : vector<8x512xf32>
    %120 = vector.extract_strided_slice %119 {offsets = [0, 0], sizes = [8, 128], strides = [1, 1]} : vector<8x512xf32> to vector<8x128xf32>
    %121 = arith.negf %120 : vector<8x128xf32>
    %122 = math.exp %121 : vector<8x128xf32>
    %cst_42 = arith.constant 1.000000e+00 : f32
    %123 = vector.broadcast %cst_42 : f32 to vector<8x128xf32>
    %124 = arith.addf %123, %122 : vector<8x128xf32>
    %125 = arith.divf %123, %124 : vector<8x128xf32>
    %126 = vector.extract_strided_slice %119 {offsets = [0, 128], sizes = [8, 128], strides = [1, 1]} : vector<8x512xf32> to vector<8x128xf32>
    %127 = arith.negf %126 : vector<8x128xf32>
    %128 = math.exp %127 : vector<8x128xf32>
    %cst_43 = arith.constant 1.000000e+00 : f32
    %129 = vector.broadcast %cst_43 : f32 to vector<8x128xf32>
    %130 = arith.addf %129, %128 : vector<8x128xf32>
    %131 = arith.divf %129, %130 : vector<8x128xf32>
    %132 = vector.extract_strided_slice %119 {offsets = [0, 256], sizes = [8, 128], strides = [1, 1]} : vector<8x512xf32> to vector<8x128xf32>
    %133 = math.tanh %132 : vector<8x128xf32>
    %134 = vector.extract_strided_slice %119 {offsets = [0, 384], sizes = [8, 128], strides = [1, 1]} : vector<8x512xf32> to vector<8x128xf32>
    %135 = arith.negf %134 : vector<8x128xf32>
    %136 = math.exp %135 : vector<8x128xf32>
    %cst_44 = arith.constant 1.000000e+00 : f32
    %137 = vector.broadcast %cst_44 : f32 to vector<8x128xf32>
    %138 = arith.addf %137, %136 : vector<8x128xf32>
    %139 = arith.divf %137, %138 : vector<8x128xf32>
    %140 = arith.mulf %131, %109 : vector<8x128xf32>
    %141 = arith.mulf %125, %133 : vector<8x128xf32>
    %142 = arith.addf %140, %141 : vector<8x128xf32>
    %143 = math.tanh %142 : vector<8x128xf32>
    %144 = arith.mulf %139, %143 : vector<8x128xf32>
    %145 = arith.index_cast %114 : i32 to index
    %c0_45 = arith.constant 0 : index
    %146 = vector.load %arg5[%145, %c0_45] : memref<64x128xf32, #tpu.memory_space<vmem>>, vector<8x128xf32>
    tpu.vector_store %arg5[%145, %c0_45], %144 {strides = array<i32>} : memref<64x128xf32, #tpu.memory_space<vmem>>, vector<8x128xf32>,
    %c4_i32 = arith.constant 4 : i32
    %c8_i32_46 = arith.constant 8 : i32
    %147 = arith.muli %c4_i32, %c8_i32_46 : i32
    %148 = arith.index_cast %147 : i32 to index
    %c0_47 = arith.constant 0 : index
    %149 = vector.load %arg6[%148, %c0_47] : memref<64x512xf32, #tpu.memory_space<vmem>>, vector<8x512xf32>
    %c0_48 = arith.constant 0 : index
    %c0_49 = arith.constant 0 : index
    %150 = vector.load %arg3[%c0_48, %c0_49] : memref<128x512xf32, #tpu.memory_space<vmem>>, vector<128x512xf32>
    %cst_50 = arith.constant dense<0.000000e+00> : vector<8x512xf32>
    %151 = tpu.matmul %144, %150, %cst_50 {dimension_numbers = #tpu.dot_dimension_numbers<[1], [0], [0], [1], [0, 0, 1, 1], [], []>} : vector<8x128xf32>, vector<128x512xf32>, vector<8x512xf32> -> vector<8x512xf32>
    %152 = arith.addf %149, %151 : vector<8x512xf32>
    %153 = vector.extract_strided_slice %152 {offsets = [0, 0], sizes = [8, 128], strides = [1, 1]} : vector<8x512xf32> to vector<8x128xf32>
    %154 = arith.negf %153 : vector<8x128xf32>
    %155 = math.exp %154 : vector<8x128xf32>
    %cst_51 = arith.constant 1.000000e+00 : f32
    %156 = vector.broadcast %cst_51 : f32 to vector<8x128xf32>
    %157 = arith.addf %156, %155 : vector<8x128xf32>
    %158 = arith.divf %156, %157 : vector<8x128xf32>
    %159 = vector.extract_strided_slice %152 {offsets = [0, 128], sizes = [8, 128], strides = [1, 1]} : vector<8x512xf32> to vector<8x128xf32>
    %160 = arith.negf %159 : vector<8x128xf32>
    %161 = math.exp %160 : vector<8x128xf32>
    %cst_52 = arith.constant 1.000000e+00 : f32
    %162 = vector.broadcast %cst_52 : f32 to vector<8x128xf32>
    %163 = arith.addf %162, %161 : vector<8x128xf32>
    %164 = arith.divf %162, %163 : vector<8x128xf32>
    %165 = vector.extract_strided_slice %152 {offsets = [0, 256], sizes = [8, 128], strides = [1, 1]} : vector<8x512xf32> to vector<8x128xf32>
    %166 = math.tanh %165 : vector<8x128xf32>
    %167 = vector.extract_strided_slice %152 {offsets = [0, 384], sizes = [8, 128], strides = [1, 1]} : vector<8x512xf32> to vector<8x128xf32>
    %168 = arith.negf %167 : vector<8x128xf32>
    %169 = math.exp %168 : vector<8x128xf32>
    %cst_53 = arith.constant 1.000000e+00 : f32
    %170 = vector.broadcast %cst_53 : f32 to vector<8x128xf32>
    %171 = arith.addf %170, %169 : vector<8x128xf32>
    %172 = arith.divf %170, %171 : vector<8x128xf32>
    %173 = arith.mulf %164, %142 : vector<8x128xf32>
    %174 = arith.mulf %158, %166 : vector<8x128xf32>
    %175 = arith.addf %173, %174 : vector<8x128xf32>
    %176 = math.tanh %175 : vector<8x128xf32>
    %177 = arith.mulf %172, %176 : vector<8x128xf32>
    %178 = arith.index_cast %147 : i32 to index
    %c0_54 = arith.constant 0 : index
    %179 = vector.load %arg5[%178, %c0_54] : memref<64x128xf32, #tpu.memory_space<vmem>>, vector<8x128xf32>
    tpu.vector_store %arg5[%178, %c0_54], %177 {strides = array<i32>} : memref<64x128xf32, #tpu.memory_space<vmem>>, vector<8x128xf32>,
    %c5_i32 = arith.constant 5 : i32
    %c8_i32_55 = arith.constant 8 : i32
    %180 = arith.muli %c5_i32, %c8_i32_55 : i32
    %181 = arith.index_cast %180 : i32 to index
    %c0_56 = arith.constant 0 : index
    %182 = vector.load %arg6[%181, %c0_56] : memref<64x512xf32, #tpu.memory_space<vmem>>, vector<8x512xf32>
    %c0_57 = arith.constant 0 : index
    %c0_58 = arith.constant 0 : index
    %183 = vector.load %arg3[%c0_57, %c0_58] : memref<128x512xf32, #tpu.memory_space<vmem>>, vector<128x512xf32>
    %cst_59 = arith.constant dense<0.000000e+00> : vector<8x512xf32>
    %184 = tpu.matmul %177, %183, %cst_59 {dimension_numbers = #tpu.dot_dimension_numbers<[1], [0], [0], [1], [0, 0, 1, 1], [], []>} : vector<8x128xf32>, vector<128x512xf32>, vector<8x512xf32> -> vector<8x512xf32>
    %185 = arith.addf %182, %184 : vector<8x512xf32>
    %186 = vector.extract_strided_slice %185 {offsets = [0, 0], sizes = [8, 128], strides = [1, 1]} : vector<8x512xf32> to vector<8x128xf32>
    %187 = arith.negf %186 : vector<8x128xf32>
    %188 = math.exp %187 : vector<8x128xf32>
    %cst_60 = arith.constant 1.000000e+00 : f32
    %189 = vector.broadcast %cst_60 : f32 to vector<8x128xf32>
    %190 = arith.addf %189, %188 : vector<8x128xf32>
    %191 = arith.divf %189, %190 : vector<8x128xf32>
    %192 = vector.extract_strided_slice %185 {offsets = [0, 128], sizes = [8, 128], strides = [1, 1]} : vector<8x512xf32> to vector<8x128xf32>
    %193 = arith.negf %192 : vector<8x128xf32>
    %194 = math.exp %193 : vector<8x128xf32>
    %cst_61 = arith.constant 1.000000e+00 : f32
    %195 = vector.broadcast %cst_61 : f32 to vector<8x128xf32>
    %196 = arith.addf %195, %194 : vector<8x128xf32>
    %197 = arith.divf %195, %196 : vector<8x128xf32>
    %198 = vector.extract_strided_slice %185 {offsets = [0, 256], sizes = [8, 128], strides = [1, 1]} : vector<8x512xf32> to vector<8x128xf32>
    %199 = math.tanh %198 : vector<8x128xf32>
    %200 = vector.extract_strided_slice %185 {offsets = [0, 384], sizes = [8, 128], strides = [1, 1]} : vector<8x512xf32> to vector<8x128xf32>
    %201 = arith.negf %200 : vector<8x128xf32>
    %202 = math.exp %201 : vector<8x128xf32>
    %cst_62 = arith.constant 1.000000e+00 : f32
    %203 = vector.broadcast %cst_62 : f32 to vector<8x128xf32>
    %204 = arith.addf %203, %202 : vector<8x128xf32>
    %205 = arith.divf %203, %204 : vector<8x128xf32>
    %206 = arith.mulf %197, %175 : vector<8x128xf32>
    %207 = arith.mulf %191, %199 : vector<8x128xf32>
    %208 = arith.addf %206, %207 : vector<8x128xf32>
    %209 = math.tanh %208 : vector<8x128xf32>
    %210 = arith.mulf %205, %209 : vector<8x128xf32>
    %211 = arith.index_cast %180 : i32 to index
    %c0_63 = arith.constant 0 : index
    %212 = vector.load %arg5[%211, %c0_63] : memref<64x128xf32, #tpu.memory_space<vmem>>, vector<8x128xf32>
    tpu.vector_store %arg5[%211, %c0_63], %210 {strides = array<i32>} : memref<64x128xf32, #tpu.memory_space<vmem>>, vector<8x128xf32>,
    %c6_i32 = arith.constant 6 : i32
    %c8_i32_64 = arith.constant 8 : i32
    %213 = arith.muli %c6_i32, %c8_i32_64 : i32
    %214 = arith.index_cast %213 : i32 to index
    %c0_65 = arith.constant 0 : index
    %215 = vector.load %arg6[%214, %c0_65] : memref<64x512xf32, #tpu.memory_space<vmem>>, vector<8x512xf32>
    %c0_66 = arith.constant 0 : index
    %c0_67 = arith.constant 0 : index
    %216 = vector.load %arg3[%c0_66, %c0_67] : memref<128x512xf32, #tpu.memory_space<vmem>>, vector<128x512xf32>
    %cst_68 = arith.constant dense<0.000000e+00> : vector<8x512xf32>
    %217 = tpu.matmul %210, %216, %cst_68 {dimension_numbers = #tpu.dot_dimension_numbers<[1], [0], [0], [1], [0, 0, 1, 1], [], []>} : vector<8x128xf32>, vector<128x512xf32>, vector<8x512xf32> -> vector<8x512xf32>
    %218 = arith.addf %215, %217 : vector<8x512xf32>
    %219 = vector.extract_strided_slice %218 {offsets = [0, 0], sizes = [8, 128], strides = [1, 1]} : vector<8x512xf32> to vector<8x128xf32>
    %220 = arith.negf %219 : vector<8x128xf32>
    %221 = math.exp %220 : vector<8x128xf32>
    %cst_69 = arith.constant 1.000000e+00 : f32
    %222 = vector.broadcast %cst_69 : f32 to vector<8x128xf32>
    %223 = arith.addf %222, %221 : vector<8x128xf32>
    %224 = arith.divf %222, %223 : vector<8x128xf32>
    %225 = vector.extract_strided_slice %218 {offsets = [0, 128], sizes = [8, 128], strides = [1, 1]} : vector<8x512xf32> to vector<8x128xf32>
    %226 = arith.negf %225 : vector<8x128xf32>
    %227 = math.exp %226 : vector<8x128xf32>
    %cst_70 = arith.constant 1.000000e+00 : f32
    %228 = vector.broadcast %cst_70 : f32 to vector<8x128xf32>
    %229 = arith.addf %228, %227 : vector<8x128xf32>
    %230 = arith.divf %228, %229 : vector<8x128xf32>
    %231 = vector.extract_strided_slice %218 {offsets = [0, 256], sizes = [8, 128], strides = [1, 1]} : vector<8x512xf32> to vector<8x128xf32>
    %232 = math.tanh %231 : vector<8x128xf32>
    %233 = vector.extract_strided_slice %218 {offsets = [0, 384], sizes = [8, 128], strides = [1, 1]} : vector<8x512xf32> to vector<8x128xf32>
    %234 = arith.negf %233 : vector<8x128xf32>
    %235 = math.exp %234 : vector<8x128xf32>
    %cst_71 = arith.constant 1.000000e+00 : f32
    %236 = vector.broadcast %cst_71 : f32 to vector<8x128xf32>
    %237 = arith.addf %236, %235 : vector<8x128xf32>
    %238 = arith.divf %236, %237 : vector<8x128xf32>
    %239 = arith.mulf %230, %208 : vector<8x128xf32>
    %240 = arith.mulf %224, %232 : vector<8x128xf32>
    %241 = arith.addf %239, %240 : vector<8x128xf32>
    %242 = math.tanh %241 : vector<8x128xf32>
    %243 = arith.mulf %238, %242 : vector<8x128xf32>
    %244 = arith.index_cast %213 : i32 to index
    %c0_72 = arith.constant 0 : index
    %245 = vector.load %arg5[%244, %c0_72] : memref<64x128xf32, #tpu.memory_space<vmem>>, vector<8x128xf32>
    tpu.vector_store %arg5[%244, %c0_72], %243 {strides = array<i32>} : memref<64x128xf32, #tpu.memory_space<vmem>>, vector<8x128xf32>,
    %c7_i32 = arith.constant 7 : i32
    %c8_i32_73 = arith.constant 8 : i32
    %246 = arith.muli %c7_i32, %c8_i32_73 : i32
    %247 = arith.index_cast %246 : i32 to index
    %c0_74 = arith.constant 0 : index
    %248 = vector.load %arg6[%247, %c0_74] : memref<64x512xf32, #tpu.memory_space<vmem>>, vector<8x512xf32>
    %c0_75 = arith.constant 0 : index
    %c0_76 = arith.constant 0 : index
    %249 = vector.load %arg3[%c0_75, %c0_76] : memref<128x512xf32, #tpu.memory_space<vmem>>, vector<128x512xf32>
    %cst_77 = arith.constant dense<0.000000e+00> : vector<8x512xf32>
    %250 = tpu.matmul %243, %249, %cst_77 {dimension_numbers = #tpu.dot_dimension_numbers<[1], [0], [0], [1], [0, 0, 1, 1], [], []>} : vector<8x128xf32>, vector<128x512xf32>, vector<8x512xf32> -> vector<8x512xf32>
    %251 = arith.addf %248, %250 : vector<8x512xf32>
    %252 = vector.extract_strided_slice %251 {offsets = [0, 0], sizes = [8, 128], strides = [1, 1]} : vector<8x512xf32> to vector<8x128xf32>
    %253 = arith.negf %252 : vector<8x128xf32>
    %254 = math.exp %253 : vector<8x128xf32>
    %cst_78 = arith.constant 1.000000e+00 : f32
    %255 = vector.broadcast %cst_78 : f32 to vector<8x128xf32>
    %256 = arith.addf %255, %254 : vector<8x128xf32>
    %257 = arith.divf %255, %256 : vector<8x128xf32>
    %258 = vector.extract_strided_slice %251 {offsets = [0, 128], sizes = [8, 128], strides = [1, 1]} : vector<8x512xf32> to vector<8x128xf32>
    %259 = arith.negf %258 : vector<8x128xf32>
    %260 = math.exp %259 : vector<8x128xf32>
    %cst_79 = arith.constant 1.000000e+00 : f32
    %261 = vector.broadcast %cst_79 : f32 to vector<8x128xf32>
    %262 = arith.addf %261, %260 : vector<8x128xf32>
    %263 = arith.divf %261, %262 : vector<8x128xf32>
    %264 = vector.extract_strided_slice %251 {offsets = [0, 256], sizes = [8, 128], strides = [1, 1]} : vector<8x512xf32> to vector<8x128xf32>
    %265 = math.tanh %264 : vector<8x128xf32>
    %266 = vector.extract_strided_slice %251 {offsets = [0, 384], sizes = [8, 128], strides = [1, 1]} : vector<8x512xf32> to vector<8x128xf32>
    %267 = arith.negf %266 : vector<8x128xf32>
    %268 = math.exp %267 : vector<8x128xf32>
    %cst_80 = arith.constant 1.000000e+00 : f32
    %269 = vector.broadcast %cst_80 : f32 to vector<8x128xf32>
    %270 = arith.addf %269, %268 : vector<8x128xf32>
    %271 = arith.divf %269, %270 : vector<8x128xf32>
    %272 = arith.mulf %263, %241 : vector<8x128xf32>
    %273 = arith.mulf %257, %265 : vector<8x128xf32>
    %274 = arith.addf %272, %273 : vector<8x128xf32>
    %275 = math.tanh %274 : vector<8x128xf32>
    %276 = arith.mulf %271, %275 : vector<8x128xf32>
    %277 = arith.index_cast %246 : i32 to index
    %c0_81 = arith.constant 0 : index
    %278 = vector.load %arg5[%277, %c0_81] : memref<64x128xf32, #tpu.memory_space<vmem>>, vector<8x128xf32>
    tpu.vector_store %arg5[%277, %c0_81], %276 {strides = array<i32>} : memref<64x128xf32, #tpu.memory_space<vmem>>, vector<8x128xf32>,
    %c8_i32_82 = arith.constant 8 : i32
    return
  }
}

module attributes {stable_mosaic.version = 11 : i64} {
  func.func @fc_kernel(%arg0: i32, %arg1: i32, %arg2: memref<64x128xf32, #tpu.memory_space<vmem>>, %arg3: memref<128x128xf32, #tpu.memory_space<vmem>>, %arg4: memref<1x128xf32, #tpu.memory_space<vmem>>, %arg5: memref<64x128xf32, #tpu.memory_space<vmem>>) attributes {dimension_semantics = [#tpu.dimension_semantics<parallel>, #tpu.dimension_semantics<parallel>], iteration_bounds = array<i64: 1, 1>, scalar_prefetch = 0 : i64, scratch_operands = 0 : i64, tpu.core_type = #tpu.core_type<tc>, window_params = [{transform_indices = @transform_0, window_bounds = array<i64: 64, 128>}, {transform_indices = @transform_1, window_bounds = array<i64: 128, 128>}, {transform_indices = @transform_2, window_bounds = array<i64: 1, 128>}, {transform_indices = @transform_3, window_bounds = array<i64: 64, 128>}]} {
    %c0 = arith.constant 0 : index
    %c0_0 = arith.constant 0 : index
    %0 = vector.load %arg2[%c0, %c0_0] : memref<64x128xf32, #tpu.memory_space<vmem>>, vector<64x128xf32>
    %c0_1 = arith.constant 0 : index
    %c0_2 = arith.constant 0 : index
    %1 = vector.load %arg3[%c0_1, %c0_2] : memref<128x128xf32, #tpu.memory_space<vmem>>, vector<128x128xf32>
    %cst = arith.constant dense<0.000000e+00> : vector<64x128xf32>
    %2 = tpu.matmul %0, %1, %cst {dimension_numbers = #tpu.dot_dimension_numbers<[1], [0], [0], [1], [0, 0, 1, 1], [], []>} : vector<64x128xf32>, vector<128x128xf32>, vector<64x128xf32> -> vector<64x128xf32>
    %c0_3 = arith.constant 0 : index
    %c0_4 = arith.constant 0 : index
    %3 = vector.load %arg4[%c0_3, %c0_4] : memref<1x128xf32, #tpu.memory_space<vmem>>, vector<1x128xf32>
    %4 = vector.broadcast %3 : vector<1x128xf32> to vector<64x128xf32>
    %5 = arith.addf %2, %4 : vector<64x128xf32>
    %c0_5 = arith.constant 0 : index
    %c0_6 = arith.constant 0 : index
    %6 = vector.load %arg5[%c0_5, %c0_6] : memref<64x128xf32, #tpu.memory_space<vmem>>, vector<64x128xf32>
    tpu.vector_store %arg5[%c0_5, %c0_6], %5 {strides = array<i32>} : memref<64x128xf32, #tpu.memory_space<vmem>>, vector<64x128xf32>,
    return
  }
  func.func @transform_0(%arg0: i32, %arg1: i32) -> (i32, i32) {
    %c0_i32 = arith.constant 0 : i32
    %c0_i32_0 = arith.constant 0 : i32
    return %arg0, %c0_i32 : i32, i32
  }
  func.func @transform_1(%arg0: i32, %arg1: i32) -> (i32, i32) {
    %c0_i32 = arith.constant 0 : i32
    %c0_i32_0 = arith.constant 0 : i32
    return %c0_i32, %arg1 : i32, i32
  }
  func.func @transform_2(%arg0: i32, %arg1: i32) -> (i32, i32) {
    %c0_i32 = arith.constant 0 : i32
    %c0_i32_0 = arith.constant 0 : i32
    return %c0_i32, %arg1 : i32, i32
  }
  func.func @transform_3(%arg0: i32, %arg1: i32) -> (i32, i32) {
    %c0_i32 = arith.constant 0 : i32
    return %arg0, %arg1 : i32, i32
  }
}

</mosaic_0001>

<llo_original>
// kernel: joke_generator_forward.3
$region0: #{joke_generator_forward.3}
  #allocation0 [shape = 'u32[]', space=smem, size = 0x4, offset = 0x4, fixed_abs, tag = 'smem constant byte address 0x4 - core index']
  #allocation1 [shape = 'u32[144,128]{1,0:T(1,128)}', space=vmem, size = 0x12000, scoped, tag = 'internal scratch']
  %s0 = inlined_call_operand.vmem [shape: f32[64,128], index: 0, kind: input, shape index: {}]
  %s1 = inlined_call_operand.vmem [shape: f32[128,128], index: 1, kind: input, shape index: {}]
  %s2 = inlined_call_operand.vmem [shape: f32[1,128], index: 2, kind: input, shape index: {}]
  %s3 = inlined_call_operand.vmem [shape: f32[64,128], index: 3, kind: output, shape index: {}]
  %s4 = sld [smem:[#allocation0]]
  $region22: #{joke_generator_forward.3} parent=0
    _
  %s6 = ssub.s32 1, %s4
  %s7 = scalar_select 0, %s6, %s4
  // Predicated region
  $region2: #{joke_generator_forward.3} parent=0 // pred_check
    _
  $region3: #{joke_generator_forward.3} parent=0 // pred_check_branch
    %9 = sbr.rel (0) target = $region5
  $region4: #{joke_generator_forward.3} parent=0 // pred_region
    _
  $region5: #{joke_generator_forward.3} parent=0 // pred_fallthru
    _
  // Predicated region
  $region6: #{joke_generator_forward.3} parent=0 // pred_check
    _
  $region7: #{joke_generator_forward.3} parent=0 // pred_check_branch
    %11 = sbr.rel (0) target = $region9
  $region8: #{joke_generator_forward.3} parent=0 // pred_region
    _
  $region9: #{joke_generator_forward.3} parent=0 // pred_fallthru
    _
  // Predicated region
  $region10: #{joke_generator_forward.3} parent=0 // pred_check
    _
  $region11: #{joke_generator_forward.3} parent=0 // pred_check_branch
    %13 = sbr.rel (0) target = $region13
  $region12: #{joke_generator_forward.3} parent=0 // pred_region
    _
  $region13: #{joke_generator_forward.3} parent=0 // pred_fallthru
    _
  %v14 = vld [vmem:[%s0] sm:$0xff]
  %v15 = vld [vmem:[%s0 + $0x8] sm:$0xff]
  %v16 = vld [vmem:[%s0 + $0x10] sm:$0xff]
  %v17 = vld [vmem:[%s0 + $0x18] sm:$0xff]
  %v18 = vld [vmem:[%s0 + $0x20] sm:$0xff]
  %v19 = vld [vmem:[%s0 + $0x28] sm:$0xff]
  %v20 = vld [vmem:[%s0 + $0x30] sm:$0xff]
  %v21 = vld [vmem:[%s0 + $0x38] sm:$0xff]
  %v22 = vld [vmem:[%s1] sm:$0xff]
  %v23 = vld [vmem:[%s1 + $0x8] sm:$0xff]
  %v24 = vld [vmem:[%s1 + $0x10] sm:$0xff]
  %v25 = vld [vmem:[%s1 + $0x18] sm:$0xff]
  %v26 = vld [vmem:[%s1 + $0x20] sm:$0xff]
  %v27 = vld [vmem:[%s1 + $0x28] sm:$0xff]
  %v28 = vld [vmem:[%s1 + $0x30] sm:$0xff]
  %v29 = vld [vmem:[%s1 + $0x38] sm:$0xff]
  %v30 = vld [vmem:[%s1 + $0x40] sm:$0xff]
  %v31 = vld [vmem:[%s1 + $0x48] sm:$0xff]
  %v32 = vld [vmem:[%s1 + $0x50] sm:$0xff]
  %v33 = vld [vmem:[%s1 + $0x58] sm:$0xff]
  %v34 = vld [vmem:[%s1 + $0x60] sm:$0xff]
  %v35 = vld [vmem:[%s1 + $0x68] sm:$0xff]
  %v36 = vld [vmem:[%s1 + $0x70] sm:$0xff]
  %v37 = vld [vmem:[%s1 + $0x78] sm:$0xff]
  %v38 = vld [vmem:[%s2] sm:$0x1]
  %v40 = vlaneseq
  %v41 = vshrl.u32 %v40, 7
  %v42 = vsub.s32 0, %v41
  %v43 = vrot.slane %v38, %v42
  %45 = vmatprep.subr.mxu0 0.0
  %46 = vmatpush1.msra.mxu0 %v37
  %47 = vmatprep.subr.mxu0 0.0
  %48 = vmatpush1.msra.mxu0 %v36
  %49 = vmatprep.subr.mxu0 0.0
  %50 = vmatpush1.msra.mxu0 %v35
  %51 = vmatprep.subr.mxu0 0.0
  %52 = vmatpush1.msra.mxu0 %v34
  %53 = vmatprep.subr.mxu0 0.0
  %54 = vmatpush1.msra.mxu0 %v33
  %55 = vmatprep.subr.mxu0 0.0
  %56 = vmatpush1.msra.mxu0 %v32
  %57 = vmatprep.subr.mxu0 0.0
  %58 = vmatpush1.msra.mxu0 %v31
  %59 = vmatprep.subr.mxu0 0.0
  %60 = vmatpush1.msra.mxu0 %v30
  %61 = vmatprep.subr.mxu0 0.0
  %62 = vmatpush1.msra.mxu0 %v29
  %63 = vmatprep.subr.mxu0 0.0
  %64 = vmatpush1.msra.mxu0 %v28
  %65 = vmatprep.subr.mxu0 0.0
  %66 = vmatpush1.msra.mxu0 %v27
  %67 = vmatprep.subr.mxu0 0.0
  %68 = vmatpush1.msra.mxu0 %v26
  %69 = vmatprep.subr.mxu0 0.0
  %70 = vmatpush1.msra.mxu0 %v25
  %71 = vmatprep.subr.mxu0 0.0
  %72 = vmatpush1.msra.mxu0 %v24
  %73 = vmatprep.subr.mxu0 0.0
  %74 = vmatpush1.msra.mxu0 %v23
  %75 = vmatprep.subr.mxu0 0.0
  %76 = vmatpush1.msra.mxu0 %v22
  %77 = vmatprep.subr.mxu0 0.0
  %78 = vmatpush2.msra.mxu0 0.0
  %79 = vmatprep.subr.mxu0 0.0
  %80 = vmatpush2.msra.mxu0 0.0
  %81 = vmatprep.subr.mxu0 0.0
  %82 = vmatpush2.msra.mxu0 0.0
  %83 = vmatprep.subr.mxu0 0.0
  %84 = vmatpush2.msra.mxu0 0.0
  %85 = vmatprep.subr.mxu0 0.0
  %86 = vmatpush2.msra.mxu0 0.0
  %87 = vmatprep.subr.mxu0 0.0
  %88 = vmatpush2.msra.mxu0 0.0
  %89 = vmatprep.subr.mxu0 0.0
  %90 = vmatpush2.msra.mxu0 0.0
  %91 = vmatprep.subr.mxu0 0.0
  %92 = vmatpush2.msra.mxu0 0.0
  %93 = vmatprep.subr.mxu0 0.0
  %94 = vmatpush2.msra.mxu0 0.0
  %95 = vmatprep.subr.mxu0 0.0
  %96 = vmatpush2.msra.mxu0 0.0
  %97 = vmatprep.subr.mxu0 0.0
  %98 = vmatpush2.msra.mxu0 0.0
  %99 = vmatprep.subr.mxu0 0.0
  %100 = vmatpush2.msra.mxu0 0.0
  %101 = vmatprep.subr.mxu0 0.0
  %102 = vmatpush2.msra.mxu0 0.0
  %103 = vmatprep.subr.mxu0 0.0
  %104 = vmatpush2.msra.mxu0 0.0
  %105 = vmatprep.subr.mxu0 0.0
  %106 = vmatpush2.msra.mxu0 0.0
  %107 = vmatprep.subr.mxu0 0.0
  %108 = vmatpush2.msra.mxu0 0.0
  %109 = vmatprep.mubr.f32.mxu0 0.0
  %110 = vmatmul.mubr.f32.gmra.mxu0 %v14
  %v111 = vpop.f32.mrf.mxu0
  %v112 = vadd.f32 %v43, %v111
  %v113 = vpop.f32.mrf.mxu0
  %114 = vmatprep.mubr.f32.mxu0 0.0
  %115 = vmatmul.mubr.f32.gmra.mxu0 %v15
  %v116 = vpop.f32.mrf.mxu0
  %v117 = vadd.f32 %v43, %v116
  %v118 = vpop.f32.mrf.mxu0
  %119 = vmatprep.mubr.f32.mxu0 0.0
  %120 = vmatmul.mubr.f32.gmra.mxu0 %v16
  %v121 = vpop.f32.mrf.mxu0
  %v122 = vadd.f32 %v43, %v121
  %v123 = vpop.f32.mrf.mxu0
  %124 = vmatprep.mubr.f32.mxu0 0.0
  %125 = vmatmul.mubr.f32.gmra.mxu0 %v17
  %v126 = vpop.f32.mrf.mxu0
  %v127 = vadd.f32 %v43, %v126
  %v128 = vpop.f32.mrf.mxu0
  %129 = vmatprep.mubr.f32.mxu0 0.0
  %130 = vmatmul.mubr.f32.gmra.mxu0 %v18
  %v131 = vpop.f32.mrf.mxu0
  %v132 = vadd.f32 %v43, %v131
  %v133 = vpop.f32.mrf.mxu0
  %134 = vmatprep.mubr.f32.mxu0 0.0
  %135 = vmatmul.mubr.f32.gmra.mxu0 %v19
  %v136 = vpop.f32.mrf.mxu0
  %v137 = vadd.f32 %v43, %v136
  %v138 = vpop.f32.mrf.mxu0
  %139 = vmatprep.mubr.f32.mxu0 0.0
  %140 = vmatmul.mubr.f32.gmra.mxu0 %v20
  %v141 = vpop.f32.mrf.mxu0
  %v142 = vadd.f32 %v43, %v141
  %v143 = vpop.f32.mrf.mxu0
  %144 = vmatprep.mubr.f32.mxu0 0.0
  %145 = vmatmul.mubr.f32.gmra.mxu0 %v21
  %v146 = vpop.f32.mrf.mxu0
  %v147 = vadd.f32 %v43, %v146
  %v148 = vpop.f32.mrf.mxu0
  %149 = vdwg.mxu0
  %150 = vst [vmem:[%s3] sm:$0xff] %v112
  %151 = vst [vmem:[%s3 + $0x8] sm:$0xff] %v117
  %152 = vst [vmem:[%s3 + $0x10] sm:$0xff] %v122
  %153 = vst [vmem:[%s3 + $0x18] sm:$0xff] %v127
  %154 = vst [vmem:[%s3 + $0x20] sm:$0xff] %v132
  %155 = vst [vmem:[%s3 + $0x28] sm:$0xff] %v137
  %156 = vst [vmem:[%s3 + $0x30] sm:$0xff] %v142
  %157 = vst [vmem:[%s3 + $0x38] sm:$0xff] %v147
  // Predicated region
  $region14: #{joke_generator_forward.3} parent=0 // pred_check
    _
  $region15: #{joke_generator_forward.3} parent=0 // pred_check_branch
    %159 = sbr.rel (0) target = $region17
  $region16: #{joke_generator_forward.3} parent=0 // pred_region
    _
  $region17: #{joke_generator_forward.3} parent=0 // pred_fallthru
    _
  // Predicated region
  $region18: #{joke_generator_forward.3} parent=0 // pred_check
    _
  $region19: #{joke_generator_forward.3} parent=0 // pred_check_branch
    %161 = sbr.rel (0) target = $region21
  $region20: #{joke_generator_forward.3} parent=0 // pred_region
    _
  $region21: #{joke_generator_forward.3} parent=0 // pred_fallthru
    _

// kernel: joke_generator_forward.2
$region0: #{joke_generator_forward.2}
  #allocation0 [shape = 'u32[]', space=smem, size = 0x4, offset = 0x4, fixed_abs, tag = 'smem constant byte address 0x4 - core index']
  #allocation1 [shape = 'u32[144,128]{1,0:T(1,128)}', space=vmem, size = 0x12000, scoped, tag = 'internal scratch']
  #allocation2 [shape = 'f32[64,512]{1,0:T(8,128)}', space=vmem, size = 0x20000, scoped, tag = 'scratch operand']
  %s0 = inlined_call_operand.vmem [shape: s32[64,1], index: 0, kind: input, shape index: {}]
  %s1 = inlined_call_operand.vmem [shape: f32[128,128], index: 1, kind: input, shape index: {}]
  %s2 = inlined_call_operand.vmem [shape: f32[128,512], index: 2, kind: input, shape index: {}]
  %s3 = inlined_call_operand.vmem [shape: f32[128,512], index: 3, kind: input, shape index: {}]
  %s4 = inlined_call_operand.vmem [shape: f32[1,512], index: 4, kind: input, shape index: {}]
  %s5 = inlined_call_operand.vmem [shape: f32[64,128], index: 5, kind: output, shape index: {}]
  %s6 = sld [smem:[#allocation0]]
  $region30: #{joke_generator_forward.2} parent=0
    _
  %s8 = ssub.s32 1, %s6
  %s9 = scalar_select 0, %s8, %s6
  // Predicated region
  $region2: #{joke_generator_forward.2} parent=0 // pred_check
    _
  $region3: #{joke_generator_forward.2} parent=0 // pred_check_branch
    %11 = sbr.rel (0) target = $region5
  $region4: #{joke_generator_forward.2} parent=0 // pred_region
    _
  $region5: #{joke_generator_forward.2} parent=0 // pred_fallthru
    _
  // Predicated region
  $region6: #{joke_generator_forward.2} parent=0 // pred_check
    _
  $region7: #{joke_generator_forward.2} parent=0 // pred_check_branch
    %13 = sbr.rel (0) target = $region9
  $region8: #{joke_generator_forward.2} parent=0 // pred_region
    _
  $region9: #{joke_generator_forward.2} parent=0 // pred_fallthru
    _
  // Predicated region
  $region10: #{joke_generator_forward.2} parent=0 // pred_check
    _
  $region11: #{joke_generator_forward.2} parent=0 // pred_check_branch
    %15 = sbr.rel (0) target = $region13
  $region12: #{joke_generator_forward.2} parent=0 // pred_region
    _
  $region13: #{joke_generator_forward.2} parent=0 // pred_fallthru
    _
  // Predicated region
  $region14: #{joke_generator_forward.2} parent=0 // pred_check
    _
  $region15: #{joke_generator_forward.2} parent=0 // pred_check_branch
    %17 = sbr.rel (0) target = $region17
  $region16: #{joke_generator_forward.2} parent=0 // pred_region
    _
  $region17: #{joke_generator_forward.2} parent=0 // pred_fallthru
    _
  // Predicated region
  $region18: #{joke_generator_forward.2} parent=0 // pred_check
    _
  $region19: #{joke_generator_forward.2} parent=0 // pred_check_branch
    %19 = sbr.rel (0) target = $region21
  $region20: #{joke_generator_forward.2} parent=0 // pred_region
    _
  $region21: #{joke_generator_forward.2} parent=0 // pred_fallthru
    _
  %v20 = vlaneseq
  %v21 = vand.u32 %v20, 127
  %v22 = vld [vmem:[%s0] sm:$0xff]
  %v23 = vld [vmem:[%s0 + $0x8] sm:$0xff]
  %v24 = vld [vmem:[%s0 + $0x10] sm:$0xff]
  %v25 = vld [vmem:[%s0 + $0x18] sm:$0xff]
  %v26 = vld [vmem:[%s0 + $0x20] sm:$0xff]
  %v27 = vld [vmem:[%s0 + $0x28] sm:$0xff]
  %v28 = vld [vmem:[%s0 + $0x30] sm:$0xff]
  %v29 = vld [vmem:[%s0 + $0x38] sm:$0xff]
  %30 = vset.pattern.permute.xlu0 0
  %31 = vperm.xlu0 %30, %v22
  %v32 = vpop.permute.xlu0 %31
  %33 = vset.pattern.permute.xlu0 0
  %34 = vperm.xlu0 %33, %v23
  %v35 = vpop.permute.xlu0 %34
  %36 = vset.pattern.permute.xlu0 0
  %37 = vperm.xlu0 %36, %v24
  %v38 = vpop.permute.xlu0 %37
  %39 = vset.pattern.permute.xlu0 0
  %40 = vperm.xlu0 %39, %v25
  %v41 = vpop.permute.xlu0 %40
  %42 = vset.pattern.permute.xlu0 0
  %43 = vperm.xlu0 %42, %v26
  %v44 = vpop.permute.xlu0 %43
  %45 = vset.pattern.permute.xlu0 0
  %46 = vperm.xlu0 %45, %v27
  %v47 = vpop.permute.xlu0 %46
  %48 = vset.pattern.permute.xlu0 0
  %49 = vperm.xlu0 %48, %v28
  %v50 = vpop.permute.xlu0 %49
  %51 = vset.pattern.permute.xlu0 0
  %52 = vperm.xlu0 %51, %v29
  %v53 = vpop.permute.xlu0 %52
  %vm54 = vcmp.eq.s32.totalorder %v21, %v32
  %vm55 = vcmp.eq.s32.totalorder %v21, %v35
  %vm56 = vcmp.eq.s32.totalorder %v21, %v38
  %vm57 = vcmp.eq.s32.totalorder %v21, %v41
  %vm58 = vcmp.eq.s32.totalorder %v21, %v44
  %vm59 = vcmp.eq.s32.totalorder %v21, %v47
  %vm60 = vcmp.eq.s32.totalorder %v21, %v50
  %vm61 = vcmp.eq.s32.totalorder %v21, %v53
  %v62 = vsel %vm54, 1, 0
  %v63 = vsel %vm55, 1, 0
  %v64 = vsel %vm56, 1, 0
  %v65 = vsel %vm57, 1, 0
  %v66 = vsel %vm58, 1, 0
  %v67 = vsel %vm59, 1, 0
  %v68 = vsel %vm60, 1, 0
  %v69 = vsel %vm61, 1, 0
  %v70 = vcvt.s32.f32 %v62
  %v71 = vcvt.s32.f32 %v63
  %v72 = vcvt.s32.f32 %v64
  %v73 = vcvt.s32.f32 %v65
  %v74 = vcvt.s32.f32 %v66
  %v75 = vcvt.s32.f32 %v67
  %v76 = vcvt.s32.f32 %v68
  %v77 = vcvt.s32.f32 %v69
  %v78 = vld [vmem:[%s1] sm:$0xff]
  %v79 = vld [vmem:[%s1 + $0x8] sm:$0xff]
  %v80 = vld [vmem:[%s1 + $0x10] sm:$0xff]
  %v81 = vld [vmem:[%s1 + $0x18] sm:$0xff]
  %v82 = vld [vmem:[%s1 + $0x20] sm:$0xff]
  %v83 = vld [vmem:[%s1 + $0x28] sm:$0xff]
  %v84 = vld [vmem:[%s1 + $0x30] sm:$0xff]
  %v85 = vld [vmem:[%s1 + $0x38] sm:$0xff]
  %v86 = vld [vmem:[%s1 + $0x40] sm:$0xff]
  %v87 = vld [vmem:[%s1 + $0x48] sm:$0xff]
  %v88 = vld [vmem:[%s1 + $0x50] sm:$0xff]
  %v89 = vld [vmem:[%s1 + $0x58] sm:$0xff]
  %v90 = vld [vmem:[%s1 + $0x60] sm:$0xff]
  %v91 = vld [vmem:[%s1 + $0x68] sm:$0xff]
  %v92 = vld [vmem:[%s1 + $0x70] sm:$0xff]
  %v93 = vld [vmem:[%s1 + $0x78] sm:$0xff]
  %94 = vmatprep.subr.mxu0 0.0
  %95 = vmatpush1.msra.mxu0 %v93
  %96 = vmatprep.subr.mxu0 0.0
  %97 = vmatpush1.msra.mxu0 %v92
  %98 = vmatprep.subr.mxu0 0.0
  %99 = vmatpush1.msra.mxu0 %v91
  %100 = vmatprep.subr.mxu0 0.0
  %101 = vmatpush1.msra.mxu0 %v90
  %102 = vmatprep.subr.mxu0 0.0
  %103 = vmatpush1.msra.mxu0 %v89
  %104 = vmatprep.subr.mxu0 0.0
  %105 = vmatpush1.msra.mxu0 %v88
  %106 = vmatprep.subr.mxu0 0.0
  %107 = vmatpush1.msra.mxu0 %v87
  %108 = vmatprep.subr.mxu0 0.0
  %109 = vmatpush1.msra.mxu0 %v86
  %110 = vmatprep.subr.mxu0 0.0
  %111 = vmatpush1.msra.mxu0 %v85
  %112 = vmatprep.subr.mxu0 0.0
  %113 = vmatpush1.msra.mxu0 %v84
  %114 = vmatprep.subr.mxu0 0.0
  %115 = vmatpush1.msra.mxu0 %v83
  %116 = vmatprep.subr.mxu0 0.0
  %117 = vmatpush1.msra.mxu0 %v82
  %118 = vmatprep.subr.mxu0 0.0
  %119 = vmatpush1.msra.mxu0 %v81
  %120 = vmatprep.subr.mxu0 0.0
  %121 = vmatpush1.msra.mxu0 %v80
  %122 = vmatprep.subr.mxu0 0.0
  %123 = vmatpush1.msra.mxu0 %v79
  %124 = vmatprep.subr.mxu0 0.0
  %125 = vmatpush1.msra.mxu0 %v78
  %126 = vmatprep.subr.mxu0 0.0
  %127 = vmatpush2.msra.mxu0 0.0
  %128 = vmatprep.subr.mxu0 0.0
  %129 = vmatpush2.msra.mxu0 0.0
  %130 = vmatprep.subr.mxu0 0.0
  %131 = vmatpush2.msra.mxu0 0.0
  %132 = vmatprep.subr.mxu0 0.0
  %133 = vmatpush2.msra.mxu0 0.0
  %134 = vmatprep.subr.mxu0 0.0
  %135 = vmatpush2.msra.mxu0 0.0
  %136 = vmatprep.subr.mxu0 0.0
  %137 = vmatpush2.msra.mxu0 0.0
  %138 = vmatprep.subr.mxu0 0.0
  %139 = vmatpush2.msra.mxu0 0.0
  %140 = vmatprep.subr.mxu0 0.0
  %141 = vmatpush2.msra.mxu0 0.0
  %142 = vmatprep.subr.mxu0 0.0
  %143 = vmatpush2.msra.mxu0 0.0
  %144 = vmatprep.subr.mxu0 0.0
  %145 = vmatpush2.msra.mxu0 0.0
  %146 = vmatprep.subr.mxu0 0.0
  %147 = vmatpush2.msra.mxu0 0.0
  %148 = vmatprep.subr.mxu0 0.0
  %149 = vmatpush2.msra.mxu0 0.0
  %150 = vmatprep.subr.mxu0 0.0
  %151 = vmatpush2.msra.mxu0 0.0
  %152 = vmatprep.subr.mxu0 0.0
  %153 = vmatpush2.msra.mxu0 0.0
  %154 = vmatprep.subr.mxu0 0.0
  %155 = vmatpush2.msra.mxu0 0.0
  %156 = vmatprep.subr.mxu0 0.0
  %157 = vmatpush2.msra.mxu0 0.0
  %158 = vmatprep.mubr.f32.mxu0 0.0
  %159 = vmatmul.mubr.f32.gmra.mxu0 %v70
  %v160 = vpop.f32.mrf.mxu0
  %v161 = vadd.f32 0.0, %v160
  %v162 = vpop.f32.mrf.mxu0
  %163 = vmatprep.mubr.f32.mxu0 0.0
  %164 = vmatmul.mubr.f32.gmra.mxu0 %v71
  %v165 = vpop.f32.mrf.mxu0
  %v166 = vadd.f32 0.0, %v165
  %v167 = vpop.f32.mrf.mxu0
  %168 = vmatprep.mubr.f32.mxu0 0.0
  %169 = vmatmul.mubr.f32.gmra.mxu0 %v72
  %v170 = vpop.f32.mrf.mxu0
  %v171 = vadd.f32 0.0, %v170
  %v172 = vpop.f32.mrf.mxu0
  %173 = vmatprep.mubr.f32.mxu0 0.0
  %174 = vmatmul.mubr.f32.gmra.mxu0 %v73
  %v175 = vpop.f32.mrf.mxu0
  %v176 = vadd.f32 0.0, %v175
  %v177 = vpop.f32.mrf.mxu0
  %178 = vmatprep.mubr.f32.mxu0 0.0
  %179 = vmatmul.mubr.f32.gmra.mxu0 %v74
  %v180 = vpop.f32.mrf.mxu0
  %v181 = vadd.f32 0.0, %v180
  %v182 = vpop.f32.mrf.mxu0
  %183 = vmatprep.mubr.f32.mxu0 0.0
  %184 = vmatmul.mubr.f32.gmra.mxu0 %v75
  %v185 = vpop.f32.mrf.mxu0
  %v186 = vadd.f32 0.0, %v185
  %v187 = vpop.f32.mrf.mxu0
  %188 = vmatprep.mubr.f32.mxu0 0.0
  %189 = vmatmul.mubr.f32.gmra.mxu0 %v76
  %v190 = vpop.f32.mrf.mxu0
  %v191 = vadd.f32 0.0, %v190
  %v192 = vpop.f32.mrf.mxu0
  %193 = vmatprep.mubr.f32.mxu0 0.0
  %194 = vmatmul.mubr.f32.gmra.mxu0 %v77
  %v195 = vpop.f32.mrf.mxu0
  %v196 = vadd.f32 0.0, %v195
  %v197 = vpop.f32.mrf.mxu0
  %198 = vdwg.mxu0
  %v199 = vld [vmem:[%s2] sm:$0xff]
  %v200 = vld [vmem:[%s2 + $0x8] sm:$0xff]
  %v201 = vld [vmem:[%s2 + $0x10] sm:$0xff]
  %v202 = vld [vmem:[%s2 + $0x18] sm:$0xff]
  %v203 = vld [vmem:[%s2 + $0x20] sm:$0xff]
  %v204 = vld [vmem:[%s2 + $0x28] sm:$0xff]
  %v205 = vld [vmem:[%s2 + $0x30] sm:$0xff]
  %v206 = vld [vmem:[%s2 + $0x38] sm:$0xff]
  %v207 = vld [vmem:[%s2 + $0x40] sm:$0xff]
  %v208 = vld [vmem:[%s2 + $0x48] sm:$0xff]
  %v209 = vld [vmem:[%s2 + $0x50] sm:$0xff]
  %v210 = vld [vmem:[%s2 + $0x58] sm:$0xff]
  %v211 = vld [vmem:[%s2 + $0x60] sm:$0xff]
  %v212 = vld [vmem:[%s2 + $0x68] sm:$0xff]
  %v213 = vld [vmem:[%s2 + $0x70] sm:$0xff]
  %v214 = vld [vmem:[%s2 + $0x78] sm:$0xff]
  %v215 = vld [vmem:[%s2 + $0x80] sm:$0xff]
  %v216 = vld [vmem:[%s2 + $0x88] sm:$0xff]
  %v217 = vld [vmem:[%s2 + $0x90] sm:$0xff]
  %v218 = vld [vmem:[%s2 + $0x98] sm:$0xff]
  %v219 = vld [vmem:[%s2 + $0xa0] sm:$0xff]
  %v220 = vld [vmem:[%s2 + $0xa8] sm:$0xff]
  %v221 = vld [vmem:[%s2 + $0xb0] sm:$0xff]
  %v222 = vld [vmem:[%s2 + $0xb8] sm:$0xff]
  %v223 = vld [vmem:[%s2 + $0xc0] sm:$0xff]
  %v224 = vld [vmem:[%s2 + $0xc8] sm:$0xff]
  %v225 = vld [vmem:[%s2 + $0xd0] sm:$0xff]
  %v226 = vld [vmem:[%s2 + $0xd8] sm:$0xff]
  %v227 = vld [vmem:[%s2 + $0xe0] sm:$0xff]
  %v228 = vld [vmem:[%s2 + $0xe8] sm:$0xff]
  %v229 = vld [vmem:[%s2 + $0xf0] sm:$0xff]
  %v230 = vld [vmem:[%s2 + $0xf8] sm:$0xff]
  %v231 = vld [vmem:[%s2 + $0x100] sm:$0xff]
  %v232 = vld [vmem:[%s2 + $0x108] sm:$0xff]
  %v233 = vld [vmem:[%s2 + $0x110] sm:$0xff]
  %v234 = vld [vmem:[%s2 + $0x118] sm:$0xff]
  %v235 = vld [vmem:[%s2 + $0x120] sm:$0xff]
  %v236 = vld [vmem:[%s2 + $0x128] sm:$0xff]
  %v237 = vld [vmem:[%s2 + $0x130] sm:$0xff]
  %v238 = vld [vmem:[%s2 + $0x138] sm:$0xff]
  %v239 = vld [vmem:[%s2 + $0x140] sm:$0xff]
  %v240 = vld [vmem:[%s2 + $0x148] sm:$0xff]
  %v241 = vld [vmem:[%s2 + $0x150] sm:$0xff]
  %v242 = vld [vmem:[%s2 + $0x158] sm:$0xff]
  %v243 = vld [vmem:[%s2 + $0x160] sm:$0xff]
  %v244 = vld [vmem:[%s2 + $0x168] sm:$0xff]
  %v245 = vld [vmem:[%s2 + $0x170] sm:$0xff]
  %v246 = vld [vmem:[%s2 + $0x178] sm:$0xff]
  %v247 = vld [vmem:[%s2 + $0x180] sm:$0xff]
  %v248 = vld [vmem:[%s2 + $0x188] sm:$0xff]
  %v249 = vld [vmem:[%s2 + $0x190] sm:$0xff]
  %v250 = vld [vmem:[%s2 + $0x198] sm:$0xff]
  %v251 = vld [vmem:[%s2 + $0x1a0] sm:$0xff]
  %v252 = vld [vmem:[%s2 + $0x1a8] sm:$0xff]
  %v253 = vld [vmem:[%s2 + $0x1b0] sm:$0xff]
  %v254 = vld [vmem:[%s2 + $0x1b8] sm:$0xff]
  %v255 = vld [vmem:[%s2 + $0x1c0] sm:$0xff]
  %v256 = vld [vmem:[%s2 + $0x1c8] sm:$0xff]
  %v257 = vld [vmem:[%s2 + $0x1d0] sm:$0xff]
  %v258 = vld [vmem:[%s2 + $0x1d8] sm:$0xff]
  %v259 = vld [vmem:[%s2 + $0x1e0] sm:$0xff]
  %v260 = vld [vmem:[%s2 + $0x1e8] sm:$0xff]
  %v261 = vld [vmem:[%s2 + $0x1f0] sm:$0xff]
  %v262 = vld [vmem:[%s2 + $0x1f8] sm:$0xff]
  %v263 = vld [vmem:[%s4] sm:$0xf]
  %v265 = vlaneseq
  %v266 = vshrl.u32 %v265, 7
  %v267 = vsub.s32 0, %v266
  %v268 = vrot.slane %v263, %v267
  %v269 = vlaneseq
  %v270 = vshrl.u32 %v269, 7
  %v271 = vsub.s32 1, %v270
  %v272 = vrot.slane %v263, %v271
  %v273 = vlaneseq
  %v274 = vshrl.u32 %v273, 7
  %v275 = vsub.s32 2, %v274
  %v276 = vrot.slane %v263, %v275
  %v277 = vlaneseq
  %v278 = vshrl.u32 %v277, 7
  %v279 = vsub.s32 3, %v278
  %v280 = vrot.slane %v263, %v279
  %285 = vmatprep.subr.mxu0 %v260
  %286 = vmatpush1.msra.mxu0 %v259
  %287 = vmatprep.subr.mxu0 %v256
  %288 = vmatpush1.msra.mxu0 %v255
  %289 = vmatprep.subr.mxu0 %v252
  %290 = vmatpush1.msra.mxu0 %v251
  %291 = vmatprep.subr.mxu0 %v248
  %292 = vmatpush1.msra.mxu0 %v247
  %293 = vmatprep.subr.mxu0 %v244
  %294 = vmatpush1.msra.mxu0 %v243
  %295 = vmatprep.subr.mxu0 %v240
  %296 = vmatpush1.msra.mxu0 %v239
  %297 = vmatprep.subr.mxu0 %v236
  %298 = vmatpush1.msra.mxu0 %v235
  %299 = vmatprep.subr.mxu0 %v232
  %300 = vmatpush1.msra.mxu0 %v231
  %301 = vmatprep.subr.mxu0 %v228
  %302 = vmatpush1.msra.mxu0 %v227
  %303 = vmatprep.subr.mxu0 %v224
  %304 = vmatpush1.msra.mxu0 %v223
  %305 = vmatprep.subr.mxu0 %v220
  %306 = vmatpush1.msra.mxu0 %v219
  %307 = vmatprep.subr.mxu0 %v216
  %308 = vmatpush1.msra.mxu0 %v215
  %309 = vmatprep.subr.mxu0 %v212
  %310 = vmatpush1.msra.mxu0 %v211
  %311 = vmatprep.subr.mxu0 %v208
  %312 = vmatpush1.msra.mxu0 %v207
  %313 = vmatprep.subr.mxu0 %v204
  %314 = vmatpush1.msra.mxu0 %v203
  %315 = vmatprep.subr.mxu0 %v200
  %316 = vmatpush1.msra.mxu0 %v199
  %317 = vmatprep.subr.mxu0 0.0
  %318 = vmatpush2.msra.mxu0 0.0
  %319 = vmatprep.subr.mxu0 0.0
  %320 = vmatpush2.msra.mxu0 0.0
  %321 = vmatprep.subr.mxu0 0.0
  %322 = vmatpush2.msra.mxu0 0.0
  %323 = vmatprep.subr.mxu0 0.0
  %324 = vmatpush2.msra.mxu0 0.0
  %325 = vmatprep.subr.mxu0 0.0
  %326 = vmatpush2.msra.mxu0 0.0
  %327 = vmatprep.subr.mxu0 0.0
  %328 = vmatpush2.msra.mxu0 0.0
  %329 = vmatprep.subr.mxu0 0.0
  %330 = vmatpush2.msra.mxu0 0.0
  %331 = vmatprep.subr.mxu0 0.0
  %332 = vmatpush2.msra.mxu0 0.0
  %333 = vmatprep.subr.mxu0 0.0
  %334 = vmatpush2.msra.mxu0 0.0
  %335 = vmatprep.subr.mxu0 0.0
  %336 = vmatpush2.msra.mxu0 0.0
  %337 = vmatprep.subr.mxu0 0.0
  %338 = vmatpush2.msra.mxu0 0.0
  %339 = vmatprep.subr.mxu0 0.0
  %340 = vmatpush2.msra.mxu0 0.0
  %341 = vmatprep.subr.mxu0 0.0
  %342 = vmatpush2.msra.mxu0 0.0
  %343 = vmatprep.subr.mxu0 0.0
  %344 = vmatpush2.msra.mxu0 0.0
  %345 = vmatprep.subr.mxu0 0.0
  %346 = vmatpush2.msra.mxu0 0.0
  %347 = vmatprep.subr.mxu0 0.0
  %348 = vmatpush2.msra.mxu0 0.0
  %349 = vmatprep.mubr.f32.mxu0 0.0
  %350 = vmatmul.mubr.f32.gmra.mxu0 %v161
  %v351 = vpop.f32.mrf.mxu0
  %v352 = vadd.f32 %v268, %v351
  %v353 = vpop.f32.mrf.mxu0
  %v354 = vadd.f32 %v272, %v353
  %355 = vmatprep.mubr.f32.mxu0 0.0
  %356 = vmatmul.mubr.f32.gmra.mxu0 %v166
  %v357 = vpop.f32.mrf.mxu0
  %v358 = vadd.f32 %v268, %v357
  %v359 = vpop.f32.mrf.mxu0
  %v360 = vadd.f32 %v272, %v359
  %361 = vmatprep.mubr.f32.mxu0 0.0
  %362 = vmatmul.mubr.f32.gmra.mxu0 %v171
  %v363 = vpop.f32.mrf.mxu0
  %v364 = vadd.f32 %v268, %v363
  %v365 = vpop.f32.mrf.mxu0
  %v366 = vadd.f32 %v272, %v365
  %367 = vmatprep.mubr.f32.mxu0 0.0
  %368 = vmatmul.mubr.f32.gmra.mxu0 %v176
  %v369 = vpop.f32.mrf.mxu0
  %v370 = vadd.f32 %v268, %v369
  %v371 = vpop.f32.mrf.mxu0
  %v372 = vadd.f32 %v272, %v371
  %373 = vmatprep.mubr.f32.mxu0 0.0
  %374 = vmatmul.mubr.f32.gmra.mxu0 %v181
  %v375 = vpop.f32.mrf.mxu0
  %v376 = vadd.f32 %v268, %v375
  %v377 = vpop.f32.mrf.mxu0
  %v378 = vadd.f32 %v272, %v377
  %379 = vmatprep.mubr.f32.mxu0 0.0
  %380 = vmatmul.mubr.f32.gmra.mxu0 %v186
  %v381 = vpop.f32.mrf.mxu0
  %v382 = vadd.f32 %v268, %v381
  %v383 = vpop.f32.mrf.mxu0
  %v384 = vadd.f32 %v272, %v383
  %385 = vmatprep.mubr.f32.mxu0 0.0
  %386 = vmatmul.mubr.f32.gmra.mxu0 %v191
  %v387 = vpop.f32.mrf.mxu0
  %v388 = vadd.f32 %v268, %v387
  %v389 = vpop.f32.mrf.mxu0
  %v390 = vadd.f32 %v272, %v389
  %391 = vmatprep.mubr.f32.mxu0 0.0
  %392 = vmatmul.mubr.f32.gmra.mxu0 %v196
  %v393 = vpop.f32.mrf.mxu0
  %v394 = vadd.f32 %v268, %v393
  %v395 = vpop.f32.mrf.mxu0
  %v396 = vadd.f32 %v272, %v395
  %397 = vdwg.mxu0
  %398 = vmatprep.subr.mxu0 %v262
  %399 = vmatpush1.msra.mxu0 %v261
  %400 = vmatprep.subr.mxu0 %v258
  %401 = vmatpush1.msra.mxu0 %v257
  %402 = vmatprep.subr.mxu0 %v254
  %403 = vmatpush1.msra.mxu0 %v253
  %404 = vmatprep.subr.mxu0 %v250
  %405 = vmatpush1.msra.mxu0 %v249
  %406 = vmatprep.subr.mxu0 %v246
  %407 = vmatpush1.msra.mxu0 %v245
  %408 = vmatprep.subr.mxu0 %v242
  %409 = vmatpush1.msra.mxu0 %v241
  %410 = vmatprep.subr.mxu0 %v238
  %411 = vmatpush1.msra.mxu0 %v237
  %412 = vmatprep.subr.mxu0 %v234
  %413 = vmatpush1.msra.mxu0 %v233
  %414 = vmatprep.subr.mxu0 %v230
  %415 = vmatpush1.msra.mxu0 %v229
  %416 = vmatprep.subr.mxu0 %v226
  %417 = vmatpush1.msra.mxu0 %v225
  %418 = vmatprep.subr.mxu0 %v222
  %419 = vmatpush1.msra.mxu0 %v221
  %420 = vmatprep.subr.mxu0 %v218
  %421 = vmatpush1.msra.mxu0 %v217
  %422 = vmatprep.subr.mxu0 %v214
  %423 = vmatpush1.msra.mxu0 %v213
  %424 = vmatprep.subr.mxu0 %v210
  %425 = vmatpush1.msra.mxu0 %v209
  %426 = vmatprep.subr.mxu0 %v206
  %427 = vmatpush1.msra.mxu0 %v205
  %428 = vmatprep.subr.mxu0 %v202
  %429 = vmatpush1.msra.mxu0 %v201
  %430 = vmatprep.subr.mxu0 0.0
  %431 = vmatpush2.msra.mxu0 0.0
  %432 = vmatprep.subr.mxu0 0.0
  %433 = vmatpush2.msra.mxu0 0.0
  %434 = vmatprep.subr.mxu0 0.0
  %435 = vmatpush2.msra.mxu0 0.0
  %436 = vmatprep.subr.mxu0 0.0
  %437 = vmatpush2.msra.mxu0 0.0
  %438 = vmatprep.subr.mxu0 0.0
  %439 = vmatpush2.msra.mxu0 0.0
  %440 = vmatprep.subr.mxu0 0.0
  %441 = vmatpush2.msra.mxu0 0.0
  %442 = vmatprep.subr.mxu0 0.0
  %443 = vmatpush2.msra.mxu0 0.0
  %444 = vmatprep.subr.mxu0 0.0
  %445 = vmatpush2.msra.mxu0 0.0
  %446 = vmatprep.subr.mxu0 0.0
  %447 = vmatpush2.msra.mxu0 0.0
  %448 = vmatprep.subr.mxu0 0.0
  %449 = vmatpush2.msra.mxu0 0.0
  %450 = vmatprep.subr.mxu0 0.0
  %451 = vmatpush2.msra.mxu0 0.0
  %452 = vmatprep.subr.mxu0 0.0
  %453 = vmatpush2.msra.mxu0 0.0
  %454 = vmatprep.subr.mxu0 0.0
  %455 = vmatpush2.msra.mxu0 0.0
  %456 = vmatprep.subr.mxu0 0.0
  %457 = vmatpush2.msra.mxu0 0.0
  %458 = vmatprep.subr.mxu0 0.0
  %459 = vmatpush2.msra.mxu0 0.0
  %460 = vmatprep.subr.mxu0 0.0
  %461 = vmatpush2.msra.mxu0 0.0
  %462 = vmatprep.mubr.f32.mxu0 0.0
  %463 = vmatmul.mubr.f32.gmra.mxu0 %v161
  %v464 = vpop.f32.mrf.mxu0
  %v465 = vadd.f32 %v276, %v464
  %v466 = vpop.f32.mrf.mxu0
  %v467 = vadd.f32 %v280, %v466
  %468 = vmatprep.mubr.f32.mxu0 0.0
  %469 = vmatmul.mubr.f32.gmra.mxu0 %v166
  %v470 = vpop.f32.mrf.mxu0
  %v471 = vadd.f32 %v276, %v470
  %v472 = vpop.f32.mrf.mxu0
  %v473 = vadd.f32 %v280, %v472
  %474 = vmatprep.mubr.f32.mxu0 0.0
  %475 = vmatmul.mubr.f32.gmra.mxu0 %v171
  %v476 = vpop.f32.mrf.mxu0
  %v477 = vadd.f32 %v276, %v476
  %v478 = vpop.f32.mrf.mxu0
  %v479 = vadd.f32 %v280, %v478
  %480 = vmatprep.mubr.f32.mxu0 0.0
  %481 = vmatmul.mubr.f32.gmra.mxu0 %v176
  %v482 = vpop.f32.mrf.mxu0
  %v483 = vadd.f32 %v276, %v482
  %v484 = vpop.f32.mrf.mxu0
  %v485 = vadd.f32 %v280, %v484
  %486 = vmatprep.mubr.f32.mxu0 0.0
  %487 = vmatmul.mubr.f32.gmra.mxu0 %v181
  %v488 = vpop.f32.mrf.mxu0
  %v489 = vadd.f32 %v276, %v488
  %v490 = vpop.f32.mrf.mxu0
  %v491 = vadd.f32 %v280, %v490
  %492 = vmatprep.mubr.f32.mxu0 0.0
  %493 = vmatmul.mubr.f32.gmra.mxu0 %v186
  %v494 = vpop.f32.mrf.mxu0
  %v495 = vadd.f32 %v276, %v494
  %v496 = vpop.f32.mrf.mxu0
  %v497 = vadd.f32 %v280, %v496
  %498 = vmatprep.mubr.f32.mxu0 0.0
  %499 = vmatmul.mubr.f32.gmra.mxu0 %v191
  %v500 = vpop.f32.mrf.mxu0
  %v501 = vadd.f32 %v276, %v500
  %v502 = vpop.f32.mrf.mxu0
  %v503 = vadd.f32 %v280, %v502
  %504 = vmatprep.mubr.f32.mxu0 0.0
  %505 = vmatmul.mubr.f32.gmra.mxu0 %v196
  %v506 = vpop.f32.mrf.mxu0
  %v507 = vadd.f32 %v276, %v506
  %v508 = vpop.f32.mrf.mxu0
  %v509 = vadd.f32 %v280, %v508
  %510 = vdwg.mxu0
  %511 = vst [vmem:[#allocation2] sm:$0xff] %v352
  %512 = vst [vmem:[#allocation2 + $0x8] sm:$0xff] %v354
  %513 = vst [vmem:[#allocation2 + $0x10] sm:$0xff] %v465
  %514 = vst [vmem:[#allocation2 + $0x18] sm:$0xff] %v467
  %515 = vst [vmem:[#allocation2 + $0x20] sm:$0xff] %v358
  %516 = vst [vmem:[#allocation2 + $0x28] sm:$0xff] %v360
  %517 = vst [vmem:[#allocation2 + $0x30] sm:$0xff] %v471
  %518 = vst [vmem:[#allocation2 + $0x38] sm:$0xff] %v473
  %519 = vst [vmem:[#allocation2 + $0x40] sm:$0xff] %v364
  %520 = vst [vmem:[#allocation2 + $0x48] sm:$0xff] %v366
  %521 = vst [vmem:[#allocation2 + $0x50] sm:$0xff] %v477
  %522 = vst [vmem:[#allocation2 + $0x58] sm:$0xff] %v479
  %523 = vst [vmem:[#allocation2 + $0x60] sm:$0xff] %v370
  %524 = vst [vmem:[#allocation2 + $0x68] sm:$0xff] %v372
  %525 = vst [vmem:[#allocation2 + $0x70] sm:$0xff] %v483
  %526 = vst [vmem:[#allocation2 + $0x78] sm:$0xff] %v485
  %527 = vst [vmem:[#allocation2 + $0x80] sm:$0xff] %v376
  %528 = vst [vmem:[#allocation2 + $0x88] sm:$0xff] %v378
  %529 = vst [vmem:[#allocation2 + $0x90] sm:$0xff] %v489
  %530 = vst [vmem:[#allocation2 + $0x98] sm:$0xff] %v491
  %531 = vst [vmem:[#allocation2 + $0xa0] sm:$0xff] %v382
  %532 = vst [vmem:[#allocation2 + $0xa8] sm:$0xff] %v384
  %533 = vst [vmem:[#allocation2 + $0xb0] sm:$0xff] %v495
  %534 = vst [vmem:[#allocation2 + $0xb8] sm:$0xff] %v497
  %535 = vst [vmem:[#allocation2 + $0xc0] sm:$0xff] %v388
  %536 = vst [vmem:[#allocation2 + $0xc8] sm:$0xff] %v390
  %537 = vst [vmem:[#allocation2 + $0xd0] sm:$0xff] %v501
  %538 = vst [vmem:[#allocation2 + $0xd8] sm:$0xff] %v503
  %539 = vst [vmem:[#allocation2 + $0xe0] sm:$0xff] %v394
  %540 = vst [vmem:[#allocation2 + $0xe8] sm:$0xff] %v396
  %541 = vst [vmem:[#allocation2 + $0xf0] sm:$0xff] %v507
  %542 = vst [vmem:[#allocation2 + $0xf8] sm:$0xff] %v509
  %v543 = vld [vmem:[#allocation2] sm:$0xff]
  %v544 = vld [vmem:[#allocation2 + $0x8] sm:$0xff]
  %v545 = vld [vmem:[#allocation2 + $0x10] sm:$0xff]
  %v546 = vld [vmem:[#allocation2 + $0x18] sm:$0xff]
  %v547 = vld [vmem:[%s3] sm:$0xff]
  %v548 = vld [vmem:[%s3 + $0x8] sm:$0xff]
  %v549 = vld [vmem:[%s3 + $0x10] sm:$0xff]
  %v550 = vld [vmem:[%s3 + $0x18] sm:$0xff]
  %v551 = vld [vmem:[%s3 + $0x20] sm:$0xff]
  %v552 = vld [vmem:[%s3 + $0x28] sm:$0xff]
  %v553 = vld [vmem:[%s3 + $0x30] sm:$0xff]
  %v554 = vld [vmem:[%s3 + $0x38] sm:$0xff]
  %v555 = vld [vmem:[%s3 + $0x40] sm:$0xff]
  %v556 = vld [vmem:[%s3 + $0x48] sm:$0xff]
  %v557 = vld [vmem:[%s3 + $0x50] sm:$0xff]
  %v558 = vld [vmem:[%s3 + $0x58] sm:$0xff]
  %v559 = vld [vmem:[%s3 + $0x60] sm:$0xff]
  %v560 = vld [vmem:[%s3 + $0x68] sm:$0xff]
  %v561 = vld [vmem:[%s3 + $0x70] sm:$0xff]
  %v562 = vld [vmem:[%s3 + $0x78] sm:$0xff]
  %v563 = vld [vmem:[%s3 + $0x80] sm:$0xff]
  %v564 = vld [vmem:[%s3 + $0x88] sm:$0xff]
  %v565 = vld [vmem:[%s3 + $0x90] sm:$0xff]
  %v566 = vld [vmem:[%s3 + $0x98] sm:$0xff]
  %v567 = vld [vmem:[%s3 + $0xa0] sm:$0xff]
  %v568 = vld [vmem:[%s3 + $0xa8] sm:$0xff]
  %v569 = vld [vmem:[%s3 + $0xb0] sm:$0xff]
  %v570 = vld [vmem:[%s3 + $0xb8] sm:$0xff]
  %v571 = vld [vmem:[%s3 + $0xc0] sm:$0xff]
  %v572 = vld [vmem:[%s3 + $0xc8] sm:$0xff]
  %v573 = vld [vmem:[%s3 + $0xd0] sm:$0xff]
  %v574 = vld [vmem:[%s3 + $0xd8] sm:$0xff]
  %v575 = vld [vmem:[%s3 + $0xe0] sm:$0xff]
  %v576 = vld [vmem:[%s3 + $0xe8] sm:$0xff]
  %v577 = vld [vmem:[%s3 + $0xf0] sm:$0xff]
  %v578 = vld [vmem:[%s3 + $0xf8] sm:$0xff]
  %v579 = vld [vmem:[%s3 + $0x100] sm:$0xff]
  %v580 = vld [vmem:[%s3 + $0x108] sm:$0xff]
  %v581 = vld [vmem:[%s3 + $0x110] sm:$0xff]
  %v582 = vld [vmem:[%s3 + $0x118] sm:$0xff]
  %v583 = vld [vmem:[%s3 + $0x120] sm:$0xff]
  %v584 = vld [vmem:[%s3 + $0x128] sm:$0xff]
  %v585 = vld [vmem:[%s3 + $0x130] sm:$0xff]
  %v586 = vld [vmem:[%s3 + $0x138] sm:$0xff]
  %v587 = vld [vmem:[%s3 + $0x140] sm:$0xff]
  %v588 = vld [vmem:[%s3 + $0x148] sm:$0xff]
  %v589 = vld [vmem:[%s3 + $0x150] sm:$0xff]
  %v590 = vld [vmem:[%s3 + $0x158] sm:$0xff]
  %v591 = vld [vmem:[%s3 + $0x160] sm:$0xff]
  %v592 = vld [vmem:[%s3 + $0x168] sm:$0xff]
  %v593 = vld [vmem:[%s3 + $0x170] sm:$0xff]
  %v594 = vld [vmem:[%s3 + $0x178] sm:$0xff]
  %v595 = vld [vmem:[%s3 + $0x180] sm:$0xff]
  %v596 = vld [vmem:[%s3 + $0x188] sm:$0xff]
  %v597 = vld [vmem:[%s3 + $0x190] sm:$0xff]
  %v598 = vld [vmem:[%s3 + $0x198] sm:$0xff]
  %v599 = vld [vmem:[%s3 + $0x1a0] sm:$0xff]
  %v600 = vld [vmem:[%s3 + $0x1a8] sm:$0xff]
  %v601 = vld [vmem:[%s3 + $0x1b0] sm:$0xff]
  %v602 = vld [vmem:[%s3 + $0x1b8] sm:$0xff]
  %v603 = vld [vmem:[%s3 + $0x1c0] sm:$0xff]
  %v604 = vld [vmem:[%s3 + $0x1c8] sm:$0xff]
  %v605 = vld [vmem:[%s3 + $0x1d0] sm:$0xff]
  %v606 = vld [vmem:[%s3 + $0x1d8] sm:$0xff]
  %v607 = vld [vmem:[%s3 + $0x1e0] sm:$0xff]
  %v608 = vld [vmem:[%s3 + $0x1e8] sm:$0xff]
  %v609 = vld [vmem:[%s3 + $0x1f0] sm:$0xff]
  %v610 = vld [vmem:[%s3 + $0x1f8] sm:$0xff]
  %611 = vmatprep.subr.mxu0 %v608
  %612 = vmatpush1.msra.mxu0 %v607
  %613 = vmatprep.subr.mxu0 %v604
  %614 = vmatpush1.msra.mxu0 %v603
  %615 = vmatprep.subr.mxu0 %v600
  %616 = vmatpush1.msra.mxu0 %v599
  %617 = vmatprep.subr.mxu0 %v596
  %618 = vmatpush1.msra.mxu0 %v595
  %619 = vmatprep.subr.mxu0 %v592
  %620 = vmatpush1.msra.mxu0 %v591
  %621 = vmatprep.subr.mxu0 %v588
  %622 = vmatpush1.msra.mxu0 %v587
  %623 = vmatprep.subr.mxu0 %v584
  %624 = vmatpush1.msra.mxu0 %v583
  %625 = vmatprep.subr.mxu0 %v580
  %626 = vmatpush1.msra.mxu0 %v579
  %627 = vmatprep.subr.mxu0 %v576
  %628 = vmatpush1.msra.mxu0 %v575
  %629 = vmatprep.subr.mxu0 %v572
  %630 = vmatpush1.msra.mxu0 %v571
  %631 = vmatprep.subr.mxu0 %v568
  %632 = vmatpush1.msra.mxu0 %v567
  %633 = vmatprep.subr.mxu0 %v564
  %634 = vmatpush1.msra.mxu0 %v563
  %635 = vmatprep.subr.mxu0 %v560
  %636 = vmatpush1.msra.mxu0 %v559
  %637 = vmatprep.subr.mxu0 %v556
  %638 = vmatpush1.msra.mxu0 %v555
  %639 = vmatprep.subr.mxu0 %v552
  %640 = vmatpush1.msra.mxu0 %v551
  %641 = vmatprep.subr.mxu0 %v548
  %642 = vmatpush1.msra.mxu0 %v547
  %643 = vmatprep.subr.mxu0 0.0
  %644 = vmatpush2.msra.mxu0 0.0
  %645 = vmatprep.subr.mxu0 0.0
  %646 = vmatpush2.msra.mxu0 0.0
  %647 = vmatprep.subr.mxu0 0.0
  %648 = vmatpush2.msra.mxu0 0.0
  %649 = vmatprep.subr.mxu0 0.0
  %650 = vmatpush2.msra.mxu0 0.0
  %651 = vmatprep.subr.mxu0 0.0
  %652 = vmatpush2.msra.mxu0 0.0
  %653 = vmatprep.subr.mxu0 0.0
  %654 = vmatpush2.msra.mxu0 0.0
  %655 = vmatprep.subr.mxu0 0.0
  %656 = vmatpush2.msra.mxu0 0.0
  %657 = vmatprep.subr.mxu0 0.0
  %658 = vmatpush2.msra.mxu0 0.0
  %659 = vmatprep.subr.mxu0 0.0
  %660 = vmatpush2.msra.mxu0 0.0
  %661 = vmatprep.subr.mxu0 0.0
  %662 = vmatpush2.msra.mxu0 0.0
  %663 = vmatprep.subr.mxu0 0.0
  %664 = vmatpush2.msra.mxu0 0.0
  %665 = vmatprep.subr.mxu0 0.0
  %666 = vmatpush2.msra.mxu0 0.0
  %667 = vmatprep.subr.mxu0 0.0
  %668 = vmatpush2.msra.mxu0 0.0
  %669 = vmatprep.subr.mxu0 0.0
  %670 = vmatpush2.msra.mxu0 0.0
  %671 = vmatprep.subr.mxu0 0.0
  %672 = vmatpush2.msra.mxu0 0.0
  %673 = vmatprep.subr.mxu0 0.0
  %674 = vmatpush2.msra.mxu0 0.0
  %675 = vmatprep.mubr.f32.mxu0 0.0
  %676 = vmatmul.mubr.f32.gmra.mxu0 0.0
  %v677 = vpop.f32.mrf.mxu0
  %v678 = vadd.f32 0.0, %v677
  %v679 = vpop.f32.mrf.mxu0
  %v680 = vadd.f32 0.0, %v679
  %681 = vdwg.mxu0
  %682 = vmatprep.subr.mxu0 %v610
  %683 = vmatpush1.msra.mxu0 %v609
  %684 = vmatprep.subr.mxu0 %v606
  %685 = vmatpush1.msra.mxu0 %v605
  %686 = vmatprep.subr.mxu0 %v602
  %687 = vmatpush1.msra.mxu0 %v601
  %688 = vmatprep.subr.mxu0 %v598
  %689 = vmatpush1.msra.mxu0 %v597
  %690 = vmatprep.subr.mxu0 %v594
  %691 = vmatpush1.msra.mxu0 %v593
  %692 = vmatprep.subr.mxu0 %v590
  %693 = vmatpush1.msra.mxu0 %v589
  %694 = vmatprep.subr.mxu0 %v586
  %695 = vmatpush1.msra.mxu0 %v585
  %696 = vmatprep.subr.mxu0 %v582
  %697 = vmatpush1.msra.mxu0 %v581
  %698 = vmatprep.subr.mxu0 %v578
  %699 = vmatpush1.msra.mxu0 %v577
  %700 = vmatprep.subr.mxu0 %v574
  %701 = vmatpush1.msra.mxu0 %v573
  %702 = vmatprep.subr.mxu0 %v570
  %703 = vmatpush1.msra.mxu0 %v569
  %704 = vmatprep.subr.mxu0 %v566
  %705 = vmatpush1.msra.mxu0 %v565
  %706 = vmatprep.subr.mxu0 %v562
  %707 = vmatpush1.msra.mxu0 %v561
  %708 = vmatprep.subr.mxu0 %v558
  %709 = vmatpush1.msra.mxu0 %v557
  %710 = vmatprep.subr.mxu0 %v554
  %711 = vmatpush1.msra.mxu0 %v553
  %712 = vmatprep.subr.mxu0 %v550
  %713 = vmatpush1.msra.mxu0 %v549
  %714 = vmatprep.subr.mxu0 0.0
  %715 = vmatpush2.msra.mxu0 0.0
  %716 = vmatprep.subr.mxu0 0.0
  %717 = vmatpush2.msra.mxu0 0.0
  %718 = vmatprep.subr.mxu0 0.0
  %719 = vmatpush2.msra.mxu0 0.0
  %720 = vmatprep.subr.mxu0 0.0
  %721 = vmatpush2.msra.mxu0 0.0
  %722 = vmatprep.subr.mxu0 0.0
  %723 = vmatpush2.msra.mxu0 0.0
  %724 = vmatprep.subr.mxu0 0.0
  %725 = vmatpush2.msra.mxu0 0.0
  %726 = vmatprep.subr.mxu0 0.0
  %727 = vmatpush2.msra.mxu0 0.0
  %728 = vmatprep.subr.mxu0 0.0
  %729 = vmatpush2.msra.mxu0 0.0
  %730 = vmatprep.subr.mxu0 0.0
  %731 = vmatpush2.msra.mxu0 0.0
  %732 = vmatprep.subr.mxu0 0.0
  %733 = vmatpush2.msra.mxu0 0.0
  %734 = vmatprep.subr.mxu0 0.0
  %735 = vmatpush2.msra.mxu0 0.0
  %736 = vmatprep.subr.mxu0 0.0
  %737 = vmatpush2.msra.mxu0 0.0
  %738 = vmatprep.subr.mxu0 0.0
  %739 = vmatpush2.msra.mxu0 0.0
  %740 = vmatprep.subr.mxu0 0.0
  %741 = vmatpush2.msra.mxu0 0.0
  %742 = vmatprep.subr.mxu0 0.0
  %743 = vmatpush2.msra.mxu0 0.0
  %744 = vmatprep.subr.mxu0 0.0
  %745 = vmatpush2.msra.mxu0 0.0
  %746 = vmatprep.mubr.f32.mxu0 0.0
  %747 = vmatmul.mubr.f32.gmra.mxu0 0.0
  %v748 = vpop.f32.mrf.mxu0
  %v749 = vadd.f32 0.0, %v748
  %v750 = vpop.f32.mrf.mxu0
  %v751 = vadd.f32 0.0, %v750
  %752 = vdwg.mxu0
  %v753 = vadd.f32 %v543, %v678
  %v754 = vadd.f32 %v544, %v680
  %v755 = vadd.f32 %v545, %v749
  %v756 = vadd.f32 %v546, %v751
  %v757 = vxor.u32 %v753, 2147483648
  %v758 = vmul.f32 %v757, 1.442695
  %v759 = vpow.pop %v758
  %v760 = vadd.f32 %v759, 1.0
  %v761 = vrcp.pop %v760
  %v762 = vmul.f32 1.0, %v761
  %v763 = vxor.u32 %v754, 2147483648
  %v764 = vmul.f32 %v763, 1.442695
  %v765 = vpow.pop %v764
  %v766 = vadd.f32 %v765, 1.0
  %v767 = vrcp.pop %v766
  %v768 = vmul.f32 1.0, %v767
  %v769 = vtanh.pop %v755
  %v770 = vxor.u32 %v756, 2147483648
  %v771 = vmul.f32 %v770, 1.442695
  %v772 = vpow.pop %v771
  %v773 = vadd.f32 %v772, 1.0
  %v774 = vrcp.pop %v773
  %v775 = vmul.f32 1.0, %v774
  %v776 = vmul.f32 %v768, 0.0
  %v777 = vmul.f32 %v762, %v769
  %v778 = vadd.f32 %v776, %v777
  %v779 = vtanh.pop %v778
  %v780 = vmul.f32 %v775, %v779
  %781 = vst [vmem:[%s5] sm:$0xff] %v780
  %v782 = vld [vmem:[#allocation2 + $0x20] sm:$0xff]
  %v783 = vld [vmem:[#allocation2 + $0x28] sm:$0xff]
  %v784 = vld [vmem:[#allocation2 + $0x30] sm:$0xff]
  %v785 = vld [vmem:[#allocation2 + $0x38] sm:$0xff]
  %v786 = vld [vmem:[%s3] sm:$0xff]
  %v787 = vld [vmem:[%s3 + $0x8] sm:$0xff]
  %v788 = vld [vmem:[%s3 + $0x10] sm:$0xff]
  %v789 = vld [vmem:[%s3 + $0x18] sm:$0xff]
  %v790 = vld [vmem:[%s3 + $0x20] sm:$0xff]
  %v791 = vld [vmem:[%s3 + $0x28] sm:$0xff]
  %v792 = vld [vmem:[%s3 + $0x30] sm:$0xff]
  %v793 = vld [vmem:[%s3 + $0x38] sm:$0xff]
  %v794 = vld [vmem:[%s3 + $0x40] sm:$0xff]
  %v795 = vld [vmem:[%s3 + $0x48] sm:$0xff]
  %v796 = vld [vmem:[%s3 + $0x50] sm:$0xff]
  %v797 = vld [vmem:[%s3 + $0x58] sm:$0xff]
  %v798 = vld [vmem:[%s3 + $0x60] sm:$0xff]
  %v799 = vld [vmem:[%s3 + $0x68] sm:$0xff]
  %v800 = vld [vmem:[%s3 + $0x70] sm:$0xff]
  %v801 = vld [vmem:[%s3 + $0x78] sm:$0xff]
  %v802 = vld [vmem:[%s3 + $0x80] sm:$0xff]
  %v803 = vld [vmem:[%s3 + $0x88] sm:$0xff]
  %v804 = vld [vmem:[%s3 + $0x90] sm:$0xff]
  %v805 = vld [vmem:[%s3 + $0x98] sm:$0xff]
  %v806 = vld [vmem:[%s3 + $0xa0] sm:$0xff]
  %v807 = vld [vmem:[%s3 + $0xa8] sm:$0xff]
  %v808 = vld [vmem:[%s3 + $0xb0] sm:$0xff]
  %v809 = vld [vmem:[%s3 + $0xb8] sm:$0xff]
  %v810 = vld [vmem:[%s3 + $0xc0] sm:$0xff]
  %v811 = vld [vmem:[%s3 + $0xc8] sm:$0xff]
  %v812 = vld [vmem:[%s3 + $0xd0] sm:$0xff]
  %v813 = vld [vmem:[%s3 + $0xd8] sm:$0xff]
  %v814 = vld [vmem:[%s3 + $0xe0] sm:$0xff]
  %v815 = vld [vmem:[%s3 + $0xe8] sm:$0xff]
  %v816 = vld [vmem:[%s3 + $0xf0] sm:$0xff]
  %v817 = vld [vmem:[%s3 + $0xf8] sm:$0xff]
  %v818 = vld [vmem:[%s3 + $0x100] sm:$0xff]
  %v819 = vld [vmem:[%s3 + $0x108] sm:$0xff]
  %v820 = vld [vmem:[%s3 + $0x110] sm:$0xff]
  %v821 = vld [vmem:[%s3 + $0x118] sm:$0xff]
  %v822 = vld [vmem:[%s3 + $0x120] sm:$0xff]
  %v823 = vld [vmem:[%s3 + $0x128] sm:$0xff]
  %v824 = vld [vmem:[%s3 + $0x130] sm:$0xff]
  %v825 = vld [vmem:[%s3 + $0x138] sm:$0xff]
  %v826 = vld [vmem:[%s3 + $0x140] sm:$0xff]
  %v827 = vld [vmem:[%s3 + $0x148] sm:$0xff]
  %v828 = vld [vmem:[%s3 + $0x150] sm:$0xff]
  %v829 = vld [vmem:[%s3 + $0x158] sm:$0xff]
  %v830 = vld [vmem:[%s3 + $0x160] sm:$0xff]
  %v831 = vld [vmem:[%s3 + $0x168] sm:$0xff]
  %v832 = vld [vmem:[%s3 + $0x170] sm:$0xff]
  %v833 = vld [vmem:[%s3 + $0x178] sm:$0xff]
  %v834 = vld [vmem:[%s3 + $0x180] sm:$0xff]
  %v835 = vld [vmem:[%s3 + $0x188] sm:$0xff]
  %v836 = vld [vmem:[%s3 + $0x190] sm:$0xff]
  %v837 = vld [vmem:[%s3 + $0x198] sm:$0xff]
  %v838 = vld [vmem:[%s3 + $0x1a0] sm:$0xff]
  %v839 = vld [vmem:[%s3 + $0x1a8] sm:$0xff]
  %v840 = vld [vmem:[%s3 + $0x1b0] sm:$0xff]
  %v841 = vld [vmem:[%s3 + $0x1b8] sm:$0xff]
  %v842 = vld [vmem:[%s3 + $0x1c0] sm:$0xff]
  %v843 = vld [vmem:[%s3 + $0x1c8] sm:$0xff]
  %v844 = vld [vmem:[%s3 + $0x1d0] sm:$0xff]
  %v845 = vld [vmem:[%s3 + $0x1d8] sm:$0xff]
  %v846 = vld [vmem:[%s3 + $0x1e0] sm:$0xff]
  %v847 = vld [vmem:[%s3 + $0x1e8] sm:$0xff]
  %v848 = vld [vmem:[%s3 + $0x1f0] sm:$0xff]
  %v849 = vld [vmem:[%s3 + $0x1f8] sm:$0xff]
  %850 = vmatprep.subr.mxu0 %v847
  %851 = vmatpush1.msra.mxu0 %v846
  %852 = vmatprep.subr.mxu0 %v843
  %853 = vmatpush1.msra.mxu0 %v842
  %854 = vmatprep.subr.mxu0 %v839
  %855 = vmatpush1.msra.mxu0 %v838
  %856 = vmatprep.subr.mxu0 %v835
  %857 = vmatpush1.msra.mxu0 %v834
  %858 = vmatprep.subr.mxu0 %v831
  %859 = vmatpush1.msra.mxu0 %v830
  %860 = vmatprep.subr.mxu0 %v827
  %861 = vmatpush1.msra.mxu0 %v826
  %862 = vmatprep.subr.mxu0 %v823
  %863 = vmatpush1.msra.mxu0 %v822
  %864 = vmatprep.subr.mxu0 %v819
  %865 = vmatpush1.msra.mxu0 %v818
  %866 = vmatprep.subr.mxu0 %v815
  %867 = vmatpush1.msra.mxu0 %v814
  %868 = vmatprep.subr.mxu0 %v811
  %869 = vmatpush1.msra.mxu0 %v810
  %870 = vmatprep.subr.mxu0 %v807
  %871 = vmatpush1.msra.mxu0 %v806
  %872 = vmatprep.subr.mxu0 %v803
  %873 = vmatpush1.msra.mxu0 %v802
  %874 = vmatprep.subr.mxu0 %v799
  %875 = vmatpush1.msra.mxu0 %v798
  %876 = vmatprep.subr.mxu0 %v795
  %877 = vmatpush1.msra.mxu0 %v794
  %878 = vmatprep.subr.mxu0 %v791
  %879 = vmatpush1.msra.mxu0 %v790
  %880 = vmatprep.subr.mxu0 %v787
  %881 = vmatpush1.msra.mxu0 %v786
  %882 = vmatprep.subr.mxu0 0.0
  %883 = vmatpush2.msra.mxu0 0.0
  %884 = vmatprep.subr.mxu0 0.0
  %885 = vmatpush2.msra.mxu0 0.0
  %886 = vmatprep.subr.mxu0 0.0
  %887 = vmatpush2.msra.mxu0 0.0
  %888 = vmatprep.subr.mxu0 0.0
  %889 = vmatpush2.msra.mxu0 0.0
  %890 = vmatprep.subr.mxu0 0.0
  %891 = vmatpush2.msra.mxu0 0.0
  %892 = vmatprep.subr.mxu0 0.0
  %893 = vmatpush2.msra.mxu0 0.0
  %894 = vmatprep.subr.mxu0 0.0
  %895 = vmatpush2.msra.mxu0 0.0
  %896 = vmatprep.subr.mxu0 0.0
  %897 = vmatpush2.msra.mxu0 0.0
  %898 = vmatprep.subr.mxu0 0.0
  %899 = vmatpush2.msra.mxu0 0.0
  %900 = vmatprep.subr.mxu0 0.0
  %901 = vmatpush2.msra.mxu0 0.0
  %902 = vmatprep.subr.mxu0 0.0
  %903 = vmatpush2.msra.mxu0 0.0
  %904 = vmatprep.subr.mxu0 0.0
  %905 = vmatpush2.msra.mxu0 0.0
  %906 = vmatprep.subr.mxu0 0.0
  %907 = vmatpush2.msra.mxu0 0.0
  %908 = vmatprep.subr.mxu0 0.0
  %909 = vmatpush2.msra.mxu0 0.0
  %910 = vmatprep.subr.mxu0 0.0
  %911 = vmatpush2.msra.mxu0 0.0
  %912 = vmatprep.subr.mxu0 0.0
  %913 = vmatpush2.msra.mxu0 0.0
  %914 = vmatprep.mubr.f32.mxu0 0.0
  %915 = vmatmul.mubr.f32.gmra.mxu0 %v780
  %v916 = vpop.f32.mrf.mxu0
  %v917 = vadd.f32 0.0, %v916
  %v918 = vpop.f32.mrf.mxu0
  %v919 = vadd.f32 0.0, %v918
  %920 = vdwg.mxu0
  %921 = vmatprep.subr.mxu0 %v849
  %922 = vmatpush1.msra.mxu0 %v848
  %923 = vmatprep.subr.mxu0 %v845
  %924 = vmatpush1.msra.mxu0 %v844
  %925 = vmatprep.subr.mxu0 %v841
  %926 = vmatpush1.msra.mxu0 %v840
  %927 = vmatprep.subr.mxu0 %v837
  %928 = vmatpush1.msra.mxu0 %v836
  %929 = vmatprep.subr.mxu0 %v833
  %930 = vmatpush1.msra.mxu0 %v832
  %931 = vmatprep.subr.mxu0 %v829
  %932 = vmatpush1.msra.mxu0 %v828
  %933 = vmatprep.subr.mxu0 %v825
  %934 = vmatpush1.msra.mxu0 %v824
  %935 = vmatprep.subr.mxu0 %v821
  %936 = vmatpush1.msra.mxu0 %v820
  %937 = vmatprep.subr.mxu0 %v817
  %938 = vmatpush1.msra.mxu0 %v816
  %939 = vmatprep.subr.mxu0 %v813
  %940 = vmatpush1.msra.mxu0 %v812
  %941 = vmatprep.subr.mxu0 %v809
  %942 = vmatpush1.msra.mxu0 %v808
  %943 = vmatprep.subr.mxu0 %v805
  %944 = vmatpush1.msra.mxu0 %v804
  %945 = vmatprep.subr.mxu0 %v801
  %946 = vmatpush1.msra.mxu0 %v800
  %947 = vmatprep.subr.mxu0 %v797
  %948 = vmatpush1.msra.mxu0 %v796
  %949 = vmatprep.subr.mxu0 %v793
  %950 = vmatpush1.msra.mxu0 %v792
  %951 = vmatprep.subr.mxu0 %v789
  %952 = vmatpush1.msra.mxu0 %v788
  %953 = vmatprep.subr.mxu0 0.0
  %954 = vmatpush2.msra.mxu0 0.0
  %955 = vmatprep.subr.mxu0 0.0
  %956 = vmatpush2.msra.mxu0 0.0
  %957 = vmatprep.subr.mxu0 0.0
  %958 = vmatpush2.msra.mxu0 0.0
  %959 = vmatprep.subr.mxu0 0.0
  %960 = vmatpush2.msra.mxu0 0.0
  %961 = vmatprep.subr.mxu0 0.0
  %962 = vmatpush2.msra.mxu0 0.0
  %963 = vmatprep.subr.mxu0 0.0
  %964 = vmatpush2.msra.mxu0 0.0
  %965 = vmatprep.subr.mxu0 0.0
  %966 = vmatpush2.msra.mxu0 0.0
  %967 = vmatprep.subr.mxu0 0.0
  %968 = vmatpush2.msra.mxu0 0.0
  %969 = vmatprep.subr.mxu0 0.0
  %970 = vmatpush2.msra.mxu0 0.0
  %971 = vmatprep.subr.mxu0 0.0
  %972 = vmatpush2.msra.mxu0 0.0
  %973 = vmatprep.subr.mxu0 0.0
  %974 = vmatpush2.msra.mxu0 0.0
  %975 = vmatprep.subr.mxu0 0.0
  %976 = vmatpush2.msra.mxu0 0.0
  %977 = vmatprep.subr.mxu0 0.0
  %978 = vmatpush2.msra.mxu0 0.0
  %979 = vmatprep.subr.mxu0 0.0
  %980 = vmatpush2.msra.mxu0 0.0
  %981 = vmatprep.subr.mxu0 0.0
  %982 = vmatpush2.msra.mxu0 0.0
  %983 = vmatprep.subr.mxu0 0.0
  %984 = vmatpush2.msra.mxu0 0.0
  %985 = vmatprep.mubr.f32.mxu0 0.0
  %986 = vmatmul.mubr.f32.gmra.mxu0 %v780
  %v987 = vpop.f32.mrf.mxu0
  %v988 = vadd.f32 0.0, %v987
  %v989 = vpop.f32.mrf.mxu0
  %v990 = vadd.f32 0.0, %v989
  %991 = vdwg.mxu0
  %v992 = vadd.f32 %v782, %v917
  %v993 = vadd.f32 %v783, %v919
  %v994 = vadd.f32 %v784, %v988
  %v995 = vadd.f32 %v785, %v990
  %v996 = vxor.u32 %v992, 2147483648
  %v997 = vmul.f32 %v996, 1.442695
  %v998 = vpow.pop %v997
  %v999 = vadd.f32 %v998, 1.0
  %v1000 = vrcp.pop %v999
  %v1001 = vmul.f32 1.0, %v1000
  %v1002 = vxor.u32 %v993, 2147483648
  %v1003 = vmul.f32 %v1002, 1.442695
  %v1004 = vpow.pop %v1003
  %v1005 = vadd.f32 %v1004, 1.0
  %v1006 = vrcp.pop %v1005
  %v1007 = vmul.f32 1.0, %v1006
  %v1008 = vtanh.pop %v994
  %v1009 = vxor.u32 %v995, 2147483648
  %v1010 = vmul.f32 %v1009, 1.442695
  %v1011 = vpow.pop %v1010
  %v1012 = vadd.f32 %v1011, 1.0
  %v1013 = vrcp.pop %v1012
  %v1014 = vmul.f32 1.0, %v1013
  %v1015 = vmul.f32 %v1007, %v778
  %v1016 = vmul.f32 %v1001, %v1008
  %v1017 = vadd.f32 %v1015, %v1016
  %v1018 = vtanh.pop %v1017
  %v1019 = vmul.f32 %v1014, %v1018
  %1020 = vst [vmem:[%s5 + $0x8] sm:$0xff] %v1019
  %v1021 = vld [vmem:[#allocation2 + $0x40] sm:$0xff]
  %v1022 = vld [vmem:[#allocation2 + $0x48] sm:$0xff]
  %v1023 = vld [vmem:[#allocation2 + $0x50] sm:$0xff]
  %v1024 = vld [vmem:[#allocation2 + $0x58] sm:$0xff]
  %v1025 = vld [vmem:[%s3] sm:$0xff]
  %v1026 = vld [vmem:[%s3 + $0x8] sm:$0xff]
  %v1027 = vld [vmem:[%s3 + $0x10] sm:$0xff]
  %v1028 = vld [vmem:[%s3 + $0x18] sm:$0xff]
  %v1029 = vld [vmem:[%s3 + $0x20] sm:$0xff]
  %v1030 = vld [vmem:[%s3 + $0x28] sm:$0xff]
  %v1031 = vld [vmem:[%s3 + $0x30] sm:$0xff]
  %v1032 = vld [vmem:[%s3 + $0x38] sm:$0xff]
  %v1033 = vld [vmem:[%s3 + $0x40] sm:$0xff]
  %v1034 = vld [vmem:[%s3 + $0x48] sm:$0xff]
  %v1035 = vld [vmem:[%s3 + $0x50] sm:$0xff]
  %v1036 = vld [vmem:[%s3 + $0x58] sm:$0xff]
  %v1037 = vld [vmem:[%s3 + $0x60] sm:$0xff]
  %v1038 = vld [vmem:[%s3 + $0x68] sm:$0xff]
  %v1039 = vld [vmem:[%s3 + $0x70] sm:$0xff]
  %v1040 = vld [vmem:[%s3 + $0x78] sm:$0xff]
  %v1041 = vld [vmem:[%s3 + $0x80] sm:$0xff]
  %v1042 = vld [vmem:[%s3 + $0x88] sm:$0xff]
  %v1043 = vld [vmem:[%s3 + $0x90] sm:$0xff]
  %v1044 = vld [vmem:[%s3 + $0x98] sm:$0xff]
  %v1045 = vld [vmem:[%s3 + $0xa0] sm:$0xff]
  %v1046 = vld [vmem:[%s3 + $0xa8] sm:$0xff]
  %v1047 = vld [vmem:[%s3 + $0xb0] sm:$0xff]
  %v1048 = vld [vmem:[%s3 + $0xb8] sm:$0xff]
  %v1049 = vld [vmem:[%s3 + $0xc0] sm:$0xff]
  %v1050 = vld [vmem:[%s3 + $0xc8] sm:$0xff]
  %v1051 = vld [vmem:[%s3 + $0xd0] sm:$0xff]
  %v1052 = vld [vmem:[%s3 + $0xd8] sm:$0xff]
  %v1053 = vld [vmem:[%s3 + $0xe0] sm:$0xff]
  %v1054 = vld [vmem:[%s3 + $0xe8] sm:$0xff]
  %v1055 = vld [vmem:[%s3 + $0xf0] sm:$0xff]
  %v1056 = vld [vmem:[%s3 + $0xf8] sm:$0xff]
  %v1057 = vld [vmem:[%s3 + $0x100] sm:$0xff]
  %v1058 = vld [vmem:[%s3 + $0x108] sm:$0xff]
  %v1059 = vld [vmem:[%s3 + $0x110] sm:$0xff]
  %v1060 = vld [vmem:[%s3 + $0x118] sm:$0xff]
  %v1061 = vld [vmem:[%s3 + $0x120] sm:$0xff]
  %v1062 = vld [vmem:[%s3 + $0x128] sm:$0xff]
  %v1063 = vld [vmem:[%s3 + $0x130] sm:$0xff]
  %v1064 = vld [vmem:[%s3 + $0x138] sm:$0xff]
  %v1065 = vld [vmem:[%s3 + $0x140] sm:$0xff]
  %v1066 = vld [vmem:[%s3 + $0x148] sm:$0xff]
  %v1067 = vld [vmem:[%s3 + $0x150] sm:$0xff]
  %v1068 = vld [vmem:[%s3 + $0x158] sm:$0xff]
  %v1069 = vld [vmem:[%s3 + $0x160] sm:$0xff]
  %v1070 = vld [vmem:[%s3 + $0x168] sm:$0xff]
  %v1071 = vld [vmem:[%s3 + $0x170] sm:$0xff]
  %v1072 = vld [vmem:[%s3 + $0x178] sm:$0xff]
  %v1073 = vld [vmem:[%s3 + $0x180] sm:$0xff]
  %v1074 = vld [vmem:[%s3 + $0x188] sm:$0xff]
  %v1075 = vld [vmem:[%s3 + $0x190] sm:$0xff]
  %v1076 = vld [vmem:[%s3 + $0x198] sm:$0xff]
  %v1077 = vld [vmem:[%s3 + $0x1a0] sm:$0xff]
  %v1078 = vld [vmem:[%s3 + $0x1a8] sm:$0xff]
  %v1079 = vld [vmem:[%s3 + $0x1b0] sm:$0xff]
  %v1080 = vld [vmem:[%s3 + $0x1b8] sm:$0xff]
  %v1081 = vld [vmem:[%s3 + $0x1c0] sm:$0xff]
  %v1082 = vld [vmem:[%s3 + $0x1c8] sm:$0xff]
  %v1083 = vld [vmem:[%s3 + $0x1d0] sm:$0xff]
  %v1084 = vld [vmem:[%s3 + $0x1d8] sm:$0xff]
  %v1085 = vld [vmem:[%s3 + $0x1e0] sm:$0xff]
  %v1086 = vld [vmem:[%s3 + $0x1e8] sm:$0xff]
  %v1087 = vld [vmem:[%s3 + $0x1f0] sm:$0xff]
  %v1088 = vld [vmem:[%s3 + $0x1f8] sm:$0xff]
  %1089 = vmatprep.subr.mxu0 %v1086
  %1090 = vmatpush1.msra.mxu0 %v1085
  %1091 = vmatprep.subr.mxu0 %v1082
  %1092 = vmatpush1.msra.mxu0 %v1081
  %1093 = vmatprep.subr.mxu0 %v1078
  %1094 = vmatpush1.msra.mxu0 %v1077
  %1095 = vmatprep.subr.mxu0 %v1074
  %1096 = vmatpush1.msra.mxu0 %v1073
  %1097 = vmatprep.subr.mxu0 %v1070
  %1098 = vmatpush1.msra.mxu0 %v1069
  %1099 = vmatprep.subr.mxu0 %v1066
  %1100 = vmatpush1.msra.mxu0 %v1065
  %1101 = vmatprep.subr.mxu0 %v1062
  %1102 = vmatpush1.msra.mxu0 %v1061
  %1103 = vmatprep.subr.mxu0 %v1058
  %1104 = vmatpush1.msra.mxu0 %v1057
  %1105 = vmatprep.subr.mxu0 %v1054
  %1106 = vmatpush1.msra.mxu0 %v1053
  %1107 = vmatprep.subr.mxu0 %v1050
  %1108 = vmatpush1.msra.mxu0 %v1049
  %1109 = vmatprep.subr.mxu0 %v1046
  %1110 = vmatpush1.msra.mxu0 %v1045
  %1111 = vmatprep.subr.mxu0 %v1042
  %1112 = vmatpush1.msra.mxu0 %v1041
  %1113 = vmatprep.subr.mxu0 %v1038
  %1114 = vmatpush1.msra.mxu0 %v1037
  %1115 = vmatprep.subr.mxu0 %v1034
  %1116 = vmatpush1.msra.mxu0 %v1033
  %1117 = vmatprep.subr.mxu0 %v1030
  %1118 = vmatpush1.msra.mxu0 %v1029
  %1119 = vmatprep.subr.mxu0 %v1026
  %1120 = vmatpush1.msra.mxu0 %v1025
  %1121 = vmatprep.subr.mxu0 0.0
  %1122 = vmatpush2.msra.mxu0 0.0
  %1123 = vmatprep.subr.mxu0 0.0
  %1124 = vmatpush2.msra.mxu0 0.0
  %1125 = vmatprep.subr.mxu0 0.0
  %1126 = vmatpush2.msra.mxu0 0.0
  %1127 = vmatprep.subr.mxu0 0.0
  %1128 = vmatpush2.msra.mxu0 0.0
  %1129 = vmatprep.subr.mxu0 0.0
  %1130 = vmatpush2.msra.mxu0 0.0
  %1131 = vmatprep.subr.mxu0 0.0
  %1132 = vmatpush2.msra.mxu0 0.0
  %1133 = vmatprep.subr.mxu0 0.0
  %1134 = vmatpush2.msra.mxu0 0.0
  %1135 = vmatprep.subr.mxu0 0.0
  %1136 = vmatpush2.msra.mxu0 0.0
  %1137 = vmatprep.subr.mxu0 0.0
  %1138 = vmatpush2.msra.mxu0 0.0
  %1139 = vmatprep.subr.mxu0 0.0
  %1140 = vmatpush2.msra.mxu0 0.0
  %1141 = vmatprep.subr.mxu0 0.0
  %1142 = vmatpush2.msra.mxu0 0.0
  %1143 = vmatprep.subr.mxu0 0.0
  %1144 = vmatpush2.msra.mxu0 0.0
  %1145 = vmatprep.subr.mxu0 0.0
  %1146 = vmatpush2.msra.mxu0 0.0
  %1147 = vmatprep.subr.mxu0 0.0
  %1148 = vmatpush2.msra.mxu0 0.0
  %1149 = vmatprep.subr.mxu0 0.0
  %1150 = vmatpush2.msra.mxu0 0.0
  %1151 = vmatprep.subr.mxu0 0.0
  %1152 = vmatpush2.msra.mxu0 0.0
  %1153 = vmatprep.mubr.f32.mxu0 0.0
  %1154 = vmatmul.mubr.f32.gmra.mxu0 %v1019
  %v1155 = vpop.f32.mrf.mxu0
  %v1156 = vadd.f32 0.0, %v1155
  %v1157 = vpop.f32.mrf.mxu0
  %v1158 = vadd.f32 0.0, %v1157
  %1159 = vdwg.mxu0
  %1160 = vmatprep.subr.mxu0 %v1088
  %1161 = vmatpush1.msra.mxu0 %v1087
  %1162 = vmatprep.subr.mxu0 %v1084
  %1163 = vmatpush1.msra.mxu0 %v1083
  %1164 = vmatprep.subr.mxu0 %v1080
  %1165 = vmatpush1.msra.mxu0 %v1079
  %1166 = vmatprep.subr.mxu0 %v1076
  %1167 = vmatpush1.msra.mxu0 %v1075
  %1168 = vmatprep.subr.mxu0 %v1072
  %1169 = vmatpush1.msra.mxu0 %v1071
  %1170 = vmatprep.subr.mxu0 %v1068
  %1171 = vmatpush1.msra.mxu0 %v1067
  %1172 = vmatprep.subr.mxu0 %v1064
  %1173 = vmatpush1.msra.mxu0 %v1063
  %1174 = vmatprep.subr.mxu0 %v1060
  %1175 = vmatpush1.msra.mxu0 %v1059
  %1176 = vmatprep.subr.mxu0 %v1056
  %1177 = vmatpush1.msra.mxu0 %v1055
  %1178 = vmatprep.subr.mxu0 %v1052
  %1179 = vmatpush1.msra.mxu0 %v1051
  %1180 = vmatprep.subr.mxu0 %v1048
  %1181 = vmatpush1.msra.mxu0 %v1047
  %1182 = vmatprep.subr.mxu0 %v1044
  %1183 = vmatpush1.msra.mxu0 %v1043
  %1184 = vmatprep.subr.mxu0 %v1040
  %1185 = vmatpush1.msra.mxu0 %v1039
  %1186 = vmatprep.subr.mxu0 %v1036
  %1187 = vmatpush1.msra.mxu0 %v1035
  %1188 = vmatprep.subr.mxu0 %v1032
  %1189 = vmatpush1.msra.mxu0 %v1031
  %1190 = vmatprep.subr.mxu0 %v1028
  %1191 = vmatpush1.msra.mxu0 %v1027
  %1192 = vmatprep.subr.mxu0 0.0
  %1193 = vmatpush2.msra.mxu0 0.0
  %1194 = vmatprep.subr.mxu0 0.0
  %1195 = vmatpush2.msra.mxu0 0.0
  %1196 = vmatprep.subr.mxu0 0.0
  %1197 = vmatpush2.msra.mxu0 0.0
  %1198 = vmatprep.subr.mxu0 0.0
  %1199 = vmatpush2.msra.mxu0 0.0
  %1200 = vmatprep.subr.mxu0 0.0
  %1201 = vmatpush2.msra.mxu0 0.0
  %1202 = vmatprep.subr.mxu0 0.0
  %1203 = vmatpush2.msra.mxu0 0.0
  %1204 = vmatprep.subr.mxu0 0.0
  %1205 = vmatpush2.msra.mxu0 0.0
  %1206 = vmatprep.subr.mxu0 0.0
  %1207 = vmatpush2.msra.mxu0 0.0
  %1208 = vmatprep.subr.mxu0 0.0
  %1209 = vmatpush2.msra.mxu0 0.0
  %1210 = vmatprep.subr.mxu0 0.0
  %1211 = vmatpush2.msra.mxu0 0.0
  %1212 = vmatprep.subr.mxu0 0.0
  %1213 = vmatpush2.msra.mxu0 0.0
  %1214 = vmatprep.subr.mxu0 0.0
  %1215 = vmatpush2.msra.mxu0 0.0
  %1216 = vmatprep.subr.mxu0 0.0
  %1217 = vmatpush2.msra.mxu0 0.0
  %1218 = vmatprep.subr.mxu0 0.0
  %1219 = vmatpush2.msra.mxu0 0.0
  %1220 = vmatprep.subr.mxu0 0.0
  %1221 = vmatpush2.msra.mxu0 0.0
  %1222 = vmatprep.subr.mxu0 0.0
  %1223 = vmatpush2.msra.mxu0 0.0
  %1224 = vmatprep.mubr.f32.mxu0 0.0
  %1225 = vmatmul.mubr.f32.gmra.mxu0 %v1019
  %v1226 = vpop.f32.mrf.mxu0
  %v1227 = vadd.f32 0.0, %v1226
  %v1228 = vpop.f32.mrf.mxu0
  %v1229 = vadd.f32 0.0, %v1228
  %1230 = vdwg.mxu0
  %v1231 = vadd.f32 %v1021, %v1156
  %v1232 = vadd.f32 %v1022, %v1158
  %v1233 = vadd.f32 %v1023, %v1227
  %v1234 = vadd.f32 %v1024, %v1229
  %v1235 = vxor.u32 %v1231, 2147483648
  %v1236 = vmul.f32 %v1235, 1.442695
  %v1237 = vpow.pop %v1236
  %v1238 = vadd.f32 %v1237, 1.0
  %v1239 = vrcp.pop %v1238
  %v1240 = vmul.f32 1.0, %v1239
  %v1241 = vxor.u32 %v1232, 2147483648
  %v1242 = vmul.f32 %v1241, 1.442695
  %v1243 = vpow.pop %v1242
  %v1244 = vadd.f32 %v1243, 1.0
  %v1245 = vrcp.pop %v1244
  %v1246 = vmul.f32 1.0, %v1245
  %v1247 = vtanh.pop %v1233
  %v1248 = vxor.u32 %v1234, 2147483648
  %v1249 = vmul.f32 %v1248, 1.442695
  %v1250 = vpow.pop %v1249
  %v1251 = vadd.f32 %v1250, 1.0
  %v1252 = vrcp.pop %v1251
  %v1253 = vmul.f32 1.0, %v1252
  %v1254 = vmul.f32 %v1246, %v1017
  %v1255 = vmul.f32 %v1240, %v1247
  %v1256 = vadd.f32 %v1254, %v1255
  %v1257 = vtanh.pop %v1256
  %v1258 = vmul.f32 %v1253, %v1257
  %1259 = vst [vmem:[%s5 + $0x10] sm:$0xff] %v1258
  %v1260 = vld [vmem:[#allocation2 + $0x60] sm:$0xff]
  %v1261 = vld [vmem:[#allocation2 + $0x68] sm:$0xff]
  %v1262 = vld [vmem:[#allocation2 + $0x70] sm:$0xff]
  %v1263 = vld [vmem:[#allocation2 + $0x78] sm:$0xff]
  %v1264 = vld [vmem:[%s3] sm:$0xff]
  %v1265 = vld [vmem:[%s3 + $0x8] sm:$0xff]
  %v1266 = vld [vmem:[%s3 + $0x10] sm:$0xff]
  %v1267 = vld [vmem:[%s3 + $0x18] sm:$0xff]
  %v1268 = vld [vmem:[%s3 + $0x20] sm:$0xff]
  %v1269 = vld [vmem:[%s3 + $0x28] sm:$0xff]
  %v1270 = vld [vmem:[%s3 + $0x30] sm:$0xff]
  %v1271 = vld [vmem:[%s3 + $0x38] sm:$0xff]
  %v1272 = vld [vmem:[%s3 + $0x40] sm:$0xff]
  %v1273 = vld [vmem:[%s3 + $0x48] sm:$0xff]
  %v1274 = vld [vmem:[%s3 + $0x50] sm:$0xff]
  %v1275 = vld [vmem:[%s3 + $0x58] sm:$0xff]
  %v1276 = vld [vmem:[%s3 + $0x60] sm:$0xff]
  %v1277 = vld [vmem:[%s3 + $0x68] sm:$0xff]
  %v1278 = vld [vmem:[%s3 + $0x70] sm:$0xff]
  %v1279 = vld [vmem:[%s3 + $0x78] sm:$0xff]
  %v1280 = vld [vmem:[%s3 + $0x80] sm:$0xff]
  %v1281 = vld [vmem:[%s3 + $0x88] sm:$0xff]
  %v1282 = vld [vmem:[%s3 + $0x90] sm:$0xff]
  %v1283 = vld [vmem:[%s3 + $0x98] sm:$0xff]
  %v1284 = vld [vmem:[%s3 + $0xa0] sm:$0xff]
  %v1285 = vld [vmem:[%s3 + $0xa8] sm:$0xff]
  %v1286 = vld [vmem:[%s3 + $0xb0] sm:$0xff]
  %v1287 = vld [vmem:[%s3 + $0xb8] sm:$0xff]
  %v1288 = vld [vmem:[%s3 + $0xc0] sm:$0xff]
  %v1289 = vld [vmem:[%s3 + $0xc8] sm:$0xff]
  %v1290 = vld [vmem:[%s3 + $0xd0] sm:$0xff]
  %v1291 = vld [vmem:[%s3 + $0xd8] sm:$0xff]
  %v1292 = vld [vmem:[%s3 + $0xe0] sm:$0xff]
  %v1293 = vld [vmem:[%s3 + $0xe8] sm:$0xff]
  %v1294 = vld [vmem:[%s3 + $0xf0] sm:$0xff]
  %v1295 = vld [vmem:[%s3 + $0xf8] sm:$0xff]
  %v1296 = vld [vmem:[%s3 + $0x100] sm:$0xff]
  %v1297 = vld [vmem:[%s3 + $0x108] sm:$0xff]
  %v1298 = vld [vmem:[%s3 + $0x110] sm:$0xff]
  %v1299 = vld [vmem:[%s3 + $0x118] sm:$0xff]
  %v1300 = vld [vmem:[%s3 + $0x120] sm:$0xff]
  %v1301 = vld [vmem:[%s3 + $0x128] sm:$0xff]
  %v1302 = vld [vmem:[%s3 + $0x130] sm:$0xff]
  %v1303 = vld [vmem:[%s3 + $0x138] sm:$0xff]
  %v1304 = vld [vmem:[%s3 + $0x140] sm:$0xff]
  %v1305 = vld [vmem:[%s3 + $0x148] sm:$0xff]
  %v1306 = vld [vmem:[%s3 + $0x150] sm:$0xff]
  %v1307 = vld [vmem:[%s3 + $0x158] sm:$0xff]
  %v1308 = vld [vmem:[%s3 + $0x160] sm:$0xff]
  %v1309 = vld [vmem:[%s3 + $0x168] sm:$0xff]
  %v1310 = vld [vmem:[%s3 + $0x170] sm:$0xff]
  %v1311 = vld [vmem:[%s3 + $0x178] sm:$0xff]
  %v1312 = vld [vmem:[%s3 + $0x180] sm:$0xff]
  %v1313 = vld [vmem:[%s3 + $0x188] sm:$0xff]
  %v1314 = vld [vmem:[%s3 + $0x190] sm:$0xff]
  %v1315 = vld [vmem:[%s3 + $0x198] sm:$0xff]
  %v1316 = vld [vmem:[%s3 + $0x1a0] sm:$0xff]
  %v1317 = vld [vmem:[%s3 + $0x1a8] sm:$0xff]
  %v1318 = vld [vmem:[%s3 + $0x1b0] sm:$0xff]
  %v1319 = vld [vmem:[%s3 + $0x1b8] sm:$0xff]
  %v1320 = vld [vmem:[%s3 + $0x1c0] sm:$0xff]
  %v1321 = vld [vmem:[%s3 + $0x1c8] sm:$0xff]
  %v1322 = vld [vmem:[%s3 + $0x1d0] sm:$0xff]
  %v1323 = vld [vmem:[%s3 + $0x1d8] sm:$0xff]
  %v1324 = vld [vmem:[%s3 + $0x1e0] sm:$0xff]
  %v1325 = vld [vmem:[%s3 + $0x1e8] sm:$0xff]
  %v1326 = vld [vmem:[%s3 + $0x1f0] sm:$0xff]
  %v1327 = vld [vmem:[%s3 + $0x1f8] sm:$0xff]
  %1328 = vmatprep.subr.mxu0 %v1325
  %1329 = vmatpush1.msra.mxu0 %v1324
  %1330 = vmatprep.subr.mxu0 %v1321
  %1331 = vmatpush1.msra.mxu0 %v1320
  %1332 = vmatprep.subr.mxu0 %v1317
  %1333 = vmatpush1.msra.mxu0 %v1316
  %1334 = vmatprep.subr.mxu0 %v1313
  %1335 = vmatpush1.msra.mxu0 %v1312
  %1336 = vmatprep.subr.mxu0 %v1309
  %1337 = vmatpush1.msra.mxu0 %v1308
  %1338 = vmatprep.subr.mxu0 %v1305
  %1339 = vmatpush1.msra.mxu0 %v1304
  %1340 = vmatprep.subr.mxu0 %v1301
  %1341 = vmatpush1.msra.mxu0 %v1300
  %1342 = vmatprep.subr.mxu0 %v1297
  %1343 = vmatpush1.msra.mxu0 %v1296
  %1344 = vmatprep.subr.mxu0 %v1293
  %1345 = vmatpush1.msra.mxu0 %v1292
  %1346 = vmatprep.subr.mxu0 %v1289
  %1347 = vmatpush1.msra.mxu0 %v1288
  %1348 = vmatprep.subr.mxu0 %v1285
  %1349 = vmatpush1.msra.mxu0 %v1284
  %1350 = vmatprep.subr.mxu0 %v1281
  %1351 = vmatpush1.msra.mxu0 %v1280
  %1352 = vmatprep.subr.mxu0 %v1277
  %1353 = vmatpush1.msra.mxu0 %v1276
  %1354 = vmatprep.subr.mxu0 %v1273
  %1355 = vmatpush1.msra.mxu0 %v1272
  %1356 = vmatprep.subr.mxu0 %v1269
  %1357 = vmatpush1.msra.mxu0 %v1268
  %1358 = vmatprep.subr.mxu0 %v1265
  %1359 = vmatpush1.msra.mxu0 %v1264
  %1360 = vmatprep.subr.mxu0 0.0
  %1361 = vmatpush2.msra.mxu0 0.0
  %1362 = vmatprep.subr.mxu0 0.0
  %1363 = vmatpush2.msra.mxu0 0.0
  %1364 = vmatprep.subr.mxu0 0.0
  %1365 = vmatpush2.msra.mxu0 0.0
  %1366 = vmatprep.subr.mxu0 0.0
  %1367 = vmatpush2.msra.mxu0 0.0
  %1368 = vmatprep.subr.mxu0 0.0
  %1369 = vmatpush2.msra.mxu0 0.0
  %1370 = vmatprep.subr.mxu0 0.0
  %1371 = vmatpush2.msra.mxu0 0.0
  %1372 = vmatprep.subr.mxu0 0.0
  %1373 = vmatpush2.msra.mxu0 0.0
  %1374 = vmatprep.subr.mxu0 0.0
  %1375 = vmatpush2.msra.mxu0 0.0
  %1376 = vmatprep.subr.mxu0 0.0
  %1377 = vmatpush2.msra.mxu0 0.0
  %1378 = vmatprep.subr.mxu0 0.0
  %1379 = vmatpush2.msra.mxu0 0.0
  %1380 = vmatprep.subr.mxu0 0.0
  %1381 = vmatpush2.msra.mxu0 0.0
  %1382 = vmatprep.subr.mxu0 0.0
  %1383 = vmatpush2.msra.mxu0 0.0
  %1384 = vmatprep.subr.mxu0 0.0
  %1385 = vmatpush2.msra.mxu0 0.0
  %1386 = vmatprep.subr.mxu0 0.0
  %1387 = vmatpush2.msra.mxu0 0.0
  %1388 = vmatprep.subr.mxu0 0.0
  %1389 = vmatpush2.msra.mxu0 0.0
  %1390 = vmatprep.subr.mxu0 0.0
  %1391 = vmatpush2.msra.mxu0 0.0
  %1392 = vmatprep.mubr.f32.mxu0 0.0
  %1393 = vmatmul.mubr.f32.gmra.mxu0 %v1258
  %v1394 = vpop.f32.mrf.mxu0
  %v1395 = vadd.f32 0.0, %v1394
  %v1396 = vpop.f32.mrf.mxu0
  %v1397 = vadd.f32 0.0, %v1396
  %1398 = vdwg.mxu0
  %1399 = vmatprep.subr.mxu0 %v1327
  %1400 = vmatpush1.msra.mxu0 %v1326
  %1401 = vmatprep.subr.mxu0 %v1323
  %1402 = vmatpush1.msra.mxu0 %v1322
  %1403 = vmatprep.subr.mxu0 %v1319
  %1404 = vmatpush1.msra.mxu0 %v1318
  %1405 = vmatprep.subr.mxu0 %v1315
  %1406 = vmatpush1.msra.mxu0 %v1314
  %1407 = vmatprep.subr.mxu0 %v1311
  %1408 = vmatpush1.msra.mxu0 %v1310
  %1409 = vmatprep.subr.mxu0 %v1307
  %1410 = vmatpush1.msra.mxu0 %v1306
  %1411 = vmatprep.subr.mxu0 %v1303
  %1412 = vmatpush1.msra.mxu0 %v1302
  %1413 = vmatprep.subr.mxu0 %v1299
  %1414 = vmatpush1.msra.mxu0 %v1298
  %1415 = vmatprep.subr.mxu0 %v1295
  %1416 = vmatpush1.msra.mxu0 %v1294
  %1417 = vmatprep.subr.mxu0 %v1291
  %1418 = vmatpush1.msra.mxu0 %v1290
  %1419 = vmatprep.subr.mxu0 %v1287
  %1420 = vmatpush1.msra.mxu0 %v1286
  %1421 = vmatprep.subr.mxu0 %v1283
  %1422 = vmatpush1.msra.mxu0 %v1282
  %1423 = vmatprep.subr.mxu0 %v1279
  %1424 = vmatpush1.msra.mxu0 %v1278
  %1425 = vmatprep.subr.mxu0 %v1275
  %1426 = vmatpush1.msra.mxu0 %v1274
  %1427 = vmatprep.subr.mxu0 %v1271
  %1428 = vmatpush1.msra.mxu0 %v1270
  %1429 = vmatprep.subr.mxu0 %v1267
  %1430 = vmatpush1.msra.mxu0 %v1266
  %1431 = vmatprep.subr.mxu0 0.0
  %1432 = vmatpush2.msra.mxu0 0.0
  %1433 = vmatprep.subr.mxu0 0.0
  %1434 = vmatpush2.msra.mxu0 0.0
  %1435 = vmatprep.subr.mxu0 0.0
  %1436 = vmatpush2.msra.mxu0 0.0
  %1437 = vmatprep.subr.mxu0 0.0
  %1438 = vmatpush2.msra.mxu0 0.0
  %1439 = vmatprep.subr.mxu0 0.0
  %1440 = vmatpush2.msra.mxu0 0.0
  %1441 = vmatprep.subr.mxu0 0.0
  %1442 = vmatpush2.msra.mxu0 0.0
  %1443 = vmatprep.subr.mxu0 0.0
  %1444 = vmatpush2.msra.mxu0 0.0
  %1445 = vmatprep.subr.mxu0 0.0
  %1446 = vmatpush2.msra.mxu0 0.0
  %1447 = vmatprep.subr.mxu0 0.0
  %1448 = vmatpush2.msra.mxu0 0.0
  %1449 = vmatprep.subr.mxu0 0.0
  %1450 = vmatpush2.msra.mxu0 0.0
  %1451 = vmatprep.subr.mxu0 0.0
  %1452 = vmatpush2.msra.mxu0 0.0
  %1453 = vmatprep.subr.mxu0 0.0
  %1454 = vmatpush2.msra.mxu0 0.0
  %1455 = vmatprep.subr.mxu0 0.0
  %1456 = vmatpush2.msra.mxu0 0.0
  %1457 = vmatprep.subr.mxu0 0.0
  %1458 = vmatpush2.msra.mxu0 0.0
  %1459 = vmatprep.subr.mxu0 0.0
  %1460 = vmatpush2.msra.mxu0 0.0
  %1461 = vmatprep.subr.mxu0 0.0
  %1462 = vmatpush2.msra.mxu0 0.0
  %1463 = vmatprep.mubr.f32.mxu0 0.0
  %1464 = vmatmul.mubr.f32.gmra.mxu0 %v1258
  %v1465 = vpop.f32.mrf.mxu0
  %v1466 = vadd.f32 0.0, %v1465
  %v1467 = vpop.f32.mrf.mxu0
  %v1468 = vadd.f32 0.0, %v1467
  %1469 = vdwg.mxu0
  %v1470 = vadd.f32 %v1260, %v1395
  %v1471 = vadd.f32 %v1261, %v1397
  %v1472 = vadd.f32 %v1262, %v1466
  %v1473 = vadd.f32 %v1263, %v1468
  %v1474 = vxor.u32 %v1470, 2147483648
  %v1475 = vmul.f32 %v1474, 1.442695
  %v1476 = vpow.pop %v1475
  %v1477 = vadd.f32 %v1476, 1.0
  %v1478 = vrcp.pop %v1477
  %v1479 = vmul.f32 1.0, %v1478
  %v1480 = vxor.u32 %v1471, 2147483648
  %v1481 = vmul.f32 %v1480, 1.442695
  %v1482 = vpow.pop %v1481
  %v1483 = vadd.f32 %v1482, 1.0
  %v1484 = vrcp.pop %v1483
  %v1485 = vmul.f32 1.0, %v1484
  %v1486 = vtanh.pop %v1472
  %v1487 = vxor.u32 %v1473, 2147483648
  %v1488 = vmul.f32 %v1487, 1.442695
  %v1489 = vpow.pop %v1488
  %v1490 = vadd.f32 %v1489, 1.0
  %v1491 = vrcp.pop %v1490
  %v1492 = vmul.f32 1.0, %v1491
  %v1493 = vmul.f32 %v1485, %v1256
  %v1494 = vmul.f32 %v1479, %v1486
  %v1495 = vadd.f32 %v1493, %v1494
  %v1496 = vtanh.pop %v1495
  %v1497 = vmul.f32 %v1492, %v1496
  %1498 = vst [vmem:[%s5 + $0x18] sm:$0xff] %v1497
  %v1499 = vld [vmem:[#allocation2 + $0x80] sm:$0xff]
  %v1500 = vld [vmem:[#allocation2 + $0x88] sm:$0xff]
  %v1501 = vld [vmem:[#allocation2 + $0x90] sm:$0xff]
  %v1502 = vld [vmem:[#allocation2 + $0x98] sm:$0xff]
  %v1503 = vld [vmem:[%s3] sm:$0xff]
  %v1504 = vld [vmem:[%s3 + $0x8] sm:$0xff]
  %v1505 = vld [vmem:[%s3 + $0x10] sm:$0xff]
  %v1506 = vld [vmem:[%s3 + $0x18] sm:$0xff]
  %v1507 = vld [vmem:[%s3 + $0x20] sm:$0xff]
  %v1508 = vld [vmem:[%s3 + $0x28] sm:$0xff]
  %v1509 = vld [vmem:[%s3 + $0x30] sm:$0xff]
  %v1510 = vld [vmem:[%s3 + $0x38] sm:$0xff]
  %v1511 = vld [vmem:[%s3 + $0x40] sm:$0xff]
  %v1512 = vld [vmem:[%s3 + $0x48] sm:$0xff]
  %v1513 = vld [vmem:[%s3 + $0x50] sm:$0xff]
  %v1514 = vld [vmem:[%s3 + $0x58] sm:$0xff]
  %v1515 = vld [vmem:[%s3 + $0x60] sm:$0xff]
  %v1516 = vld [vmem:[%s3 + $0x68] sm:$0xff]
  %v1517 = vld [vmem:[%s3 + $0x70] sm:$0xff]
  %v1518 = vld [vmem:[%s3 + $0x78] sm:$0xff]
  %v1519 = vld [vmem:[%s3 + $0x80] sm:$0xff]
  %v1520 = vld [vmem:[%s3 + $0x88] sm:$0xff]
  %v1521 = vld [vmem:[%s3 + $0x90] sm:$0xff]
  %v1522 = vld [vmem:[%s3 + $0x98] sm:$0xff]
  %v1523 = vld [vmem:[%s3 + $0xa0] sm:$0xff]
  %v1524 = vld [vmem:[%s3 + $0xa8] sm:$0xff]
  %v1525 = vld [vmem:[%s3 + $0xb0] sm:$0xff]
  %v1526 = vld [vmem:[%s3 + $0xb8] sm:$0xff]
  %v1527 = vld [vmem:[%s3 + $0xc0] sm:$0xff]
  %v1528 = vld [vmem:[%s3 + $0xc8] sm:$0xff]
  %v1529 = vld [vmem:[%s3 + $0xd0] sm:$0xff]
  %v1530 = vld [vmem:[%s3 + $0xd8] sm:$0xff]
  %v1531 = vld [vmem:[%s3 + $0xe0] sm:$0xff]
  %v1532 = vld [vmem:[%s3 + $0xe8] sm:$0xff]
  %v1533 = vld [vmem:[%s3 + $0xf0] sm:$0xff]
  %v1534 = vld [vmem:[%s3 + $0xf8] sm:$0xff]
  %v1535 = vld [vmem:[%s3 + $0x100] sm:$0xff]
  %v1536 = vld [vmem:[%s3 + $0x108] sm:$0xff]
  %v1537 = vld [vmem:[%s3 + $0x110] sm:$0xff]
  %v1538 = vld [vmem:[%s3 + $0x118] sm:$0xff]
  %v1539 = vld [vmem:[%s3 + $0x120] sm:$0xff]
  %v1540 = vld [vmem:[%s3 + $0x128] sm:$0xff]
  %v1541 = vld [vmem:[%s3 + $0x130] sm:$0xff]
  %v1542 = vld [vmem:[%s3 + $0x138] sm:$0xff]
  %v1543 = vld [vmem:[%s3 + $0x140] sm:$0xff]
  %v1544 = vld [vmem:[%s3 + $0x148] sm:$0xff]
  %v1545 = vld [vmem:[%s3 + $0x150] sm:$0xff]
  %v1546 = vld [vmem:[%s3 + $0x158] sm:$0xff]
  %v1547 = vld [vmem:[%s3 + $0x160] sm:$0xff]
  %v1548 = vld [vmem:[%s3 + $0x168] sm:$0xff]
  %v1549 = vld [vmem:[%s3 + $0x170] sm:$0xff]
  %v1550 = vld [vmem:[%s3 + $0x178] sm:$0xff]
  %v1551 = vld [vmem:[%s3 + $0x180] sm:$0xff]
  %v1552 = vld [vmem:[%s3 + $0x188] sm:$0xff]
  %v1553 = vld [vmem:[%s3 + $0x190] sm:$0xff]
  %v1554 = vld [vmem:[%s3 + $0x198] sm:$0xff]
  %v1555 = vld [vmem:[%s3 + $0x1a0] sm:$0xff]
  %v1556 = vld [vmem:[%s3 + $0x1a8] sm:$0xff]
  %v1557 = vld [vmem:[%s3 + $0x1b0] sm:$0xff]
  %v1558 = vld [vmem:[%s3 + $0x1b8] sm:$0xff]
  %v1559 = vld [vmem:[%s3 + $0x1c0] sm:$0xff]
  %v1560 = vld [vmem:[%s3 + $0x1c8] sm:$0xff]
  %v1561 = vld [vmem:[%s3 + $0x1d0] sm:$0xff]
  %v1562 = vld [vmem:[%s3 + $0x1d8] sm:$0xff]
  %v1563 = vld [vmem:[%s3 + $0x1e0] sm:$0xff]
  %v1564 = vld [vmem:[%s3 + $0x1e8] sm:$0xff]
  %v1565 = vld [vmem:[%s3 + $0x1f0] sm:$0xff]
  %v1566 = vld [vmem:[%s3 + $0x1f8] sm:$0xff]
  %1567 = vmatprep.subr.mxu0 %v1564
  %1568 = vmatpush1.msra.mxu0 %v1563
  %1569 = vmatprep.subr.mxu0 %v1560
  %1570 = vmatpush1.msra.mxu0 %v1559
  %1571 = vmatprep.subr.mxu0 %v1556
  %1572 = vmatpush1.msra.mxu0 %v1555
  %1573 = vmatprep.subr.mxu0 %v1552
  %1574 = vmatpush1.msra.mxu0 %v1551
  %1575 = vmatprep.subr.mxu0 %v1548
  %1576 = vmatpush1.msra.mxu0 %v1547
  %1577 = vmatprep.subr.mxu0 %v1544
  %1578 = vmatpush1.msra.mxu0 %v1543
  %1579 = vmatprep.subr.mxu0 %v1540
  %1580 = vmatpush1.msra.mxu0 %v1539
  %1581 = vmatprep.subr.mxu0 %v1536
  %1582 = vmatpush1.msra.mxu0 %v1535
  %1583 = vmatprep.subr.mxu0 %v1532
  %1584 = vmatpush1.msra.mxu0 %v1531
  %1585 = vmatprep.subr.mxu0 %v1528
  %1586 = vmatpush1.msra.mxu0 %v1527
  %1587 = vmatprep.subr.mxu0 %v1524
  %1588 = vmatpush1.msra.mxu0 %v1523
  %1589 = vmatprep.subr.mxu0 %v1520
  %1590 = vmatpush1.msra.mxu0 %v1519
  %1591 = vmatprep.subr.mxu0 %v1516
  %1592 = vmatpush1.msra.mxu0 %v1515
  %1593 = vmatprep.subr.mxu0 %v1512
  %1594 = vmatpush1.msra.mxu0 %v1511
  %1595 = vmatprep.subr.mxu0 %v1508
  %1596 = vmatpush1.msra.mxu0 %v1507
  %1597 = vmatprep.subr.mxu0 %v1504
  %1598 = vmatpush1.msra.mxu0 %v1503
  %1599 = vmatprep.subr.mxu0 0.0
  %1600 = vmatpush2.msra.mxu0 0.0
  %1601 = vmatprep.subr.mxu0 0.0
  %1602 = vmatpush2.msra.mxu0 0.0
  %1603 = vmatprep.subr.mxu0 0.0
  %1604 = vmatpush2.msra.mxu0 0.0
  %1605 = vmatprep.subr.mxu0 0.0
  %1606 = vmatpush2.msra.mxu0 0.0
  %1607 = vmatprep.subr.mxu0 0.0
  %1608 = vmatpush2.msra.mxu0 0.0
  %1609 = vmatprep.subr.mxu0 0.0
  %1610 = vmatpush2.msra.mxu0 0.0
  %1611 = vmatprep.subr.mxu0 0.0
  %1612 = vmatpush2.msra.mxu0 0.0
  %1613 = vmatprep.subr.mxu0 0.0
  %1614 = vmatpush2.msra.mxu0 0.0
  %1615 = vmatprep.subr.mxu0 0.0
  %1616 = vmatpush2.msra.mxu0 0.0
  %1617 = vmatprep.subr.mxu0 0.0
  %1618 = vmatpush2.msra.mxu0 0.0
  %1619 = vmatprep.subr.mxu0 0.0
  %1620 = vmatpush2.msra.mxu0 0.0
  %1621 = vmatprep.subr.mxu0 0.0
  %1622 = vmatpush2.msra.mxu0 0.0
  %1623 = vmatprep.subr.mxu0 0.0
  %1624 = vmatpush2.msra.mxu0 0.0
  %1625 = vmatprep.subr.mxu0 0.0
  %1626 = vmatpush2.msra.mxu0 0.0
  %1627 = vmatprep.subr.mxu0 0.0
  %1628 = vmatpush2.msra.mxu0 0.0
  %1629 = vmatprep.subr.mxu0 0.0
  %1630 = vmatpush2.msra.mxu0 0.0
  %1631 = vmatprep.mubr.f32.mxu0 0.0
  %1632 = vmatmul.mubr.f32.gmra.mxu0 %v1497
  %v1633 = vpop.f32.mrf.mxu0
  %v1634 = vadd.f32 0.0, %v1633
  %v1635 = vpop.f32.mrf.mxu0
  %v1636 = vadd.f32 0.0, %v1635
  %1637 = vdwg.mxu0
  %1638 = vmatprep.subr.mxu0 %v1566
  %1639 = vmatpush1.msra.mxu0 %v1565
  %1640 = vmatprep.subr.mxu0 %v1562
  %1641 = vmatpush1.msra.mxu0 %v1561
  %1642 = vmatprep.subr.mxu0 %v1558
  %1643 = vmatpush1.msra.mxu0 %v1557
  %1644 = vmatprep.subr.mxu0 %v1554
  %1645 = vmatpush1.msra.mxu0 %v1553
  %1646 = vmatprep.subr.mxu0 %v1550
  %1647 = vmatpush1.msra.mxu0 %v1549
  %1648 = vmatprep.subr.mxu0 %v1546
  %1649 = vmatpush1.msra.mxu0 %v1545
  %1650 = vmatprep.subr.mxu0 %v1542
  %1651 = vmatpush1.msra.mxu0 %v1541
  %1652 = vmatprep.subr.mxu0 %v1538
  %1653 = vmatpush1.msra.mxu0 %v1537
  %1654 = vmatprep.subr.mxu0 %v1534
  %1655 = vmatpush1.msra.mxu0 %v1533
  %1656 = vmatprep.subr.mxu0 %v1530
  %1657 = vmatpush1.msra.mxu0 %v1529
  %1658 = vmatprep.subr.mxu0 %v1526
  %1659 = vmatpush1.msra.mxu0 %v1525
  %1660 = vmatprep.subr.mxu0 %v1522
  %1661 = vmatpush1.msra.mxu0 %v1521
  %1662 = vmatprep.subr.mxu0 %v1518
  %1663 = vmatpush1.msra.mxu0 %v1517
  %1664 = vmatprep.subr.mxu0 %v1514
  %1665 = vmatpush1.msra.mxu0 %v1513
  %1666 = vmatprep.subr.mxu0 %v1510
  %1667 = vmatpush1.msra.mxu0 %v1509
  %1668 = vmatprep.subr.mxu0 %v1506
  %1669 = vmatpush1.msra.mxu0 %v1505
  %1670 = vmatprep.subr.mxu0 0.0
  %1671 = vmatpush2.msra.mxu0 0.0
  %1672 = vmatprep.subr.mxu0 0.0
  %1673 = vmatpush2.msra.mxu0 0.0
  %1674 = vmatprep.subr.mxu0 0.0
  %1675 = vmatpush2.msra.mxu0 0.0
  %1676 = vmatprep.subr.mxu0 0.0
  %1677 = vmatpush2.msra.mxu0 0.0
  %1678 = vmatprep.subr.mxu0 0.0
  %1679 = vmatpush2.msra.mxu0 0.0
  %1680 = vmatprep.subr.mxu0 0.0
  %1681 = vmatpush2.msra.mxu0 0.0
  %1682 = vmatprep.subr.mxu0 0.0
  %1683 = vmatpush2.msra.mxu0 0.0
  %1684 = vmatprep.subr.mxu0 0.0
  %1685 = vmatpush2.msra.mxu0 0.0
  %1686 = vmatprep.subr.mxu0 0.0
  %1687 = vmatpush2.msra.mxu0 0.0
  %1688 = vmatprep.subr.mxu0 0.0
  %1689 = vmatpush2.msra.mxu0 0.0
  %1690 = vmatprep.subr.mxu0 0.0
  %1691 = vmatpush2.msra.mxu0 0.0
  %1692 = vmatprep.subr.mxu0 0.0
  %1693 = vmatpush2.msra.mxu0 0.0
  %1694 = vmatprep.subr.mxu0 0.0
  %1695 = vmatpush2.msra.mxu0 0.0
  %1696 = vmatprep.subr.mxu0 0.0
  %1697 = vmatpush2.msra.mxu0 0.0
  %1698 = vmatprep.subr.mxu0 0.0
  %1699 = vmatpush2.msra.mxu0 0.0
  %1700 = vmatprep.subr.mxu0 0.0
  %1701 = vmatpush2.msra.mxu0 0.0
  %1702 = vmatprep.mubr.f32.mxu0 0.0
  %1703 = vmatmul.mubr.f32.gmra.mxu0 %v1497
  %v1704 = vpop.f32.mrf.mxu0
  %v1705 = vadd.f32 0.0, %v1704
  %v1706 = vpop.f32.mrf.mxu0
  %v1707 = vadd.f32 0.0, %v1706
  %1708 = vdwg.mxu0
  %v1709 = vadd.f32 %v1499, %v1634
  %v1710 = vadd.f32 %v1500, %v1636
  %v1711 = vadd.f32 %v1501, %v1705
  %v1712 = vadd.f32 %v1502, %v1707
  %v1713 = vxor.u32 %v1709, 2147483648
  %v1714 = vmul.f32 %v1713, 1.442695
  %v1715 = vpow.pop %v1714
  %v1716 = vadd.f32 %v1715, 1.0
  %v1717 = vrcp.pop %v1716
  %v1718 = vmul.f32 1.0, %v1717
  %v1719 = vxor.u32 %v1710, 2147483648
  %v1720 = vmul.f32 %v1719, 1.442695
  %v1721 = vpow.pop %v1720
  %v1722 = vadd.f32 %v1721, 1.0
  %v1723 = vrcp.pop %v1722
  %v1724 = vmul.f32 1.0, %v1723
  %v1725 = vtanh.pop %v1711
  %v1726 = vxor.u32 %v1712, 2147483648
  %v1727 = vmul.f32 %v1726, 1.442695
  %v1728 = vpow.pop %v1727
  %v1729 = vadd.f32 %v1728, 1.0
  %v1730 = vrcp.pop %v1729
  %v1731 = vmul.f32 1.0, %v1730
  %v1732 = vmul.f32 %v1724, %v1495
  %v1733 = vmul.f32 %v1718, %v1725
  %v1734 = vadd.f32 %v1732, %v1733
  %v1735 = vtanh.pop %v1734
  %v1736 = vmul.f32 %v1731, %v1735
  %1737 = vst [vmem:[%s5 + $0x20] sm:$0xff] %v1736
  %v1738 = vld [vmem:[#allocation2 + $0xa0] sm:$0xff]
  %v1739 = vld [vmem:[#allocation2 + $0xa8] sm:$0xff]
  %v1740 = vld [vmem:[#allocation2 + $0xb0] sm:$0xff]
  %v1741 = vld [vmem:[#allocation2 + $0xb8] sm:$0xff]
  %v1742 = vld [vmem:[%s3] sm:$0xff]
  %v1743 = vld [vmem:[%s3 + $0x8] sm:$0xff]
  %v1744 = vld [vmem:[%s3 + $0x10] sm:$0xff]
  %v1745 = vld [vmem:[%s3 + $0x18] sm:$0xff]
  %v1746 = vld [vmem:[%s3 + $0x20] sm:$0xff]
  %v1747 = vld [vmem:[%s3 + $0x28] sm:$0xff]
  %v1748 = vld [vmem:[%s3 + $0x30] sm:$0xff]
  %v1749 = vld [vmem:[%s3 + $0x38] sm:$0xff]
  %v1750 = vld [vmem:[%s3 + $0x40] sm:$0xff]
  %v1751 = vld [vmem:[%s3 + $0x48] sm:$0xff]
  %v1752 = vld [vmem:[%s3 + $0x50] sm:$0xff]
  %v1753 = vld [vmem:[%s3 + $0x58] sm:$0xff]
  %v1754 = vld [vmem:[%s3 + $0x60] sm:$0xff]
  %v1755 = vld [vmem:[%s3 + $0x68] sm:$0xff]
  %v1756 = vld [vmem:[%s3 + $0x70] sm:$0xff]
  %v1757 = vld [vmem:[%s3 + $0x78] sm:$0xff]
  %v1758 = vld [vmem:[%s3 + $0x80] sm:$0xff]
  %v1759 = vld [vmem:[%s3 + $0x88] sm:$0xff]
  %v1760 = vld [vmem:[%s3 + $0x90] sm:$0xff]
  %v1761 = vld [vmem:[%s3 + $0x98] sm:$0xff]
  %v1762 = vld [vmem:[%s3 + $0xa0] sm:$0xff]
  %v1763 = vld [vmem:[%s3 + $0xa8] sm:$0xff]
  %v1764 = vld [vmem:[%s3 + $0xb0] sm:$0xff]
  %v1765 = vld [vmem:[%s3 + $0xb8] sm:$0xff]
  %v1766 = vld [vmem:[%s3 + $0xc0] sm:$0xff]
  %v1767 = vld [vmem:[%s3 + $0xc8] sm:$0xff]
  %v1768 = vld [vmem:[%s3 + $0xd0] sm:$0xff]
  %v1769 = vld [vmem:[%s3 + $0xd8] sm:$0xff]
  %v1770 = vld [vmem:[%s3 + $0xe0] sm:$0xff]
  %v1771 = vld [vmem:[%s3 + $0xe8] sm:$0xff]
  %v1772 = vld [vmem:[%s3 + $0xf0] sm:$0xff]
  %v1773 = vld [vmem:[%s3 + $0xf8] sm:$0xff]
  %v1774 = vld [vmem:[%s3 + $0x100] sm:$0xff]
  %v1775 = vld [vmem:[%s3 + $0x108] sm:$0xff]
  %v1776 = vld [vmem:[%s3 + $0x110] sm:$0xff]
  %v1777 = vld [vmem:[%s3 + $0x118] sm:$0xff]
  %v1778 = vld [vmem:[%s3 + $0x120] sm:$0xff]
  %v1779 = vld [vmem:[%s3 + $0x128] sm:$0xff]
  %v1780 = vld [vmem:[%s3 + $0x130] sm:$0xff]
  %v1781 = vld [vmem:[%s3 + $0x138] sm:$0xff]
  %v1782 = vld [vmem:[%s3 + $0x140] sm:$0xff]
  %v1783 = vld [vmem:[%s3 + $0x148] sm:$0xff]
  %v1784 = vld [vmem:[%s3 + $0x150] sm:$0xff]
  %v1785 = vld [vmem:[%s3 + $0x158] sm:$0xff]
  %v1786 = vld [vmem:[%s3 + $0x160] sm:$0xff]
  %v1787 = vld [vmem:[%s3 + $0x168] sm:$0xff]
  %v1788 = vld [vmem:[%s3 + $0x170] sm:$0xff]
  %v1789 = vld [vmem:[%s3 + $0x178] sm:$0xff]
  %v1790 = vld [vmem:[%s3 + $0x180] sm:$0xff]
  %v1791 = vld [vmem:[%s3 + $0x188] sm:$0xff]
  %v1792 = vld [vmem:[%s3 + $0x190] sm:$0xff]
  %v1793 = vld [vmem:[%s3 + $0x198] sm:$0xff]
  %v1794 = vld [vmem:[%s3 + $0x1a0] sm:$0xff]
  %v1795 = vld [vmem:[%s3 + $0x1a8] sm:$0xff]
  %v1796 = vld [vmem:[%s3 + $0x1b0] sm:$0xff]
  %v1797 = vld [vmem:[%s3 + $0x1b8] sm:$0xff]
  %v1798 = vld [vmem:[%s3 + $0x1c0] sm:$0xff]
  %v1799 = vld [vmem:[%s3 + $0x1c8] sm:$0xff]
  %v1800 = vld [vmem:[%s3 + $0x1d0] sm:$0xff]
  %v1801 = vld [vmem:[%s3 + $0x1d8] sm:$0xff]
  %v1802 = vld [vmem:[%s3 + $0x1e0] sm:$0xff]
  %v1803 = vld [vmem:[%s3 + $0x1e8] sm:$0xff]
  %v1804 = vld [vmem:[%s3 + $0x1f0] sm:$0xff]
  %v1805 = vld [vmem:[%s3 + $0x1f8] sm:$0xff]
  %1806 = vmatprep.subr.mxu0 %v1803
  %1807 = vmatpush1.msra.mxu0 %v1802
  %1808 = vmatprep.subr.mxu0 %v1799
  %1809 = vmatpush1.msra.mxu0 %v1798
  %1810 = vmatprep.subr.mxu0 %v1795
  %1811 = vmatpush1.msra.mxu0 %v1794
  %1812 = vmatprep.subr.mxu0 %v1791
  %1813 = vmatpush1.msra.mxu0 %v1790
  %1814 = vmatprep.subr.mxu0 %v1787
  %1815 = vmatpush1.msra.mxu0 %v1786
  %1816 = vmatprep.subr.mxu0 %v1783
  %1817 = vmatpush1.msra.mxu0 %v1782
  %1818 = vmatprep.subr.mxu0 %v1779
  %1819 = vmatpush1.msra.mxu0 %v1778
  %1820 = vmatprep.subr.mxu0 %v1775
  %1821 = vmatpush1.msra.mxu0 %v1774
  %1822 = vmatprep.subr.mxu0 %v1771
  %1823 = vmatpush1.msra.mxu0 %v1770
  %1824 = vmatprep.subr.mxu0 %v1767
  %1825 = vmatpush1.msra.mxu0 %v1766
  %1826 = vmatprep.subr.mxu0 %v1763
  %1827 = vmatpush1.msra.mxu0 %v1762
  %1828 = vmatprep.subr.mxu0 %v1759
  %1829 = vmatpush1.msra.mxu0 %v1758
  %1830 = vmatprep.subr.mxu0 %v1755
  %1831 = vmatpush1.msra.mxu0 %v1754
  %1832 = vmatprep.subr.mxu0 %v1751
  %1833 = vmatpush1.msra.mxu0 %v1750
  %1834 = vmatprep.subr.mxu0 %v1747
  %1835 = vmatpush1.msra.mxu0 %v1746
  %1836 = vmatprep.subr.mxu0 %v1743
  %1837 = vmatpush1.msra.mxu0 %v1742
  %1838 = vmatprep.subr.mxu0 0.0
  %1839 = vmatpush2.msra.mxu0 0.0
  %1840 = vmatprep.subr.mxu0 0.0
  %1841 = vmatpush2.msra.mxu0 0.0
  %1842 = vmatprep.subr.mxu0 0.0
  %1843 = vmatpush2.msra.mxu0 0.0
  %1844 = vmatprep.subr.mxu0 0.0
  %1845 = vmatpush2.msra.mxu0 0.0
  %1846 = vmatprep.subr.mxu0 0.0
  %1847 = vmatpush2.msra.mxu0 0.0
  %1848 = vmatprep.subr.mxu0 0.0
  %1849 = vmatpush2.msra.mxu0 0.0
  %1850 = vmatprep.subr.mxu0 0.0
  %1851 = vmatpush2.msra.mxu0 0.0
  %1852 = vmatprep.subr.mxu0 0.0
  %1853 = vmatpush2.msra.mxu0 0.0
  %1854 = vmatprep.subr.mxu0 0.0
  %1855 = vmatpush2.msra.mxu0 0.0
  %1856 = vmatprep.subr.mxu0 0.0
  %1857 = vmatpush2.msra.mxu0 0.0
  %1858 = vmatprep.subr.mxu0 0.0
  %1859 = vmatpush2.msra.mxu0 0.0
  %1860 = vmatprep.subr.mxu0 0.0
  %1861 = vmatpush2.msra.mxu0 0.0
  %1862 = vmatprep.subr.mxu0 0.0
  %1863 = vmatpush2.msra.mxu0 0.0
  %1864 = vmatprep.subr.mxu0 0.0
  %1865 = vmatpush2.msra.mxu0 0.0
  %1866 = vmatprep.subr.mxu0 0.0
  %1867 = vmatpush2.msra.mxu0 0.0
  %1868 = vmatprep.subr.mxu0 0.0
  %1869 = vmatpush2.msra.mxu0 0.0
  %1870 = vmatprep.mubr.f32.mxu0 0.0
  %1871 = vmatmul.mubr.f32.gmra.mxu0 %v1736
  %v1872 = vpop.f32.mrf.mxu0
  %v1873 = vadd.f32 0.0, %v1872
  %v1874 = vpop.f32.mrf.mxu0
  %v1875 = vadd.f32 0.0, %v1874
  %1876 = vdwg.mxu0
  %1877 = vmatprep.subr.mxu0 %v1805
  %1878 = vmatpush1.msra.mxu0 %v1804
  %1879 = vmatprep.subr.mxu0 %v1801
  %1880 = vmatpush1.msra.mxu0 %v1800
  %1881 = vmatprep.subr.mxu0 %v1797
  %1882 = vmatpush1.msra.mxu0 %v1796
  %1883 = vmatprep.subr.mxu0 %v1793
  %1884 = vmatpush1.msra.mxu0 %v1792
  %1885 = vmatprep.subr.mxu0 %v1789
  %1886 = vmatpush1.msra.mxu0 %v1788
  %1887 = vmatprep.subr.mxu0 %v1785
  %1888 = vmatpush1.msra.mxu0 %v1784
  %1889 = vmatprep.subr.mxu0 %v1781
  %1890 = vmatpush1.msra.mxu0 %v1780
  %1891 = vmatprep.subr.mxu0 %v1777
  %1892 = vmatpush1.msra.mxu0 %v1776
  %1893 = vmatprep.subr.mxu0 %v1773
  %1894 = vmatpush1.msra.mxu0 %v1772
  %1895 = vmatprep.subr.mxu0 %v1769
  %1896 = vmatpush1.msra.mxu0 %v1768
  %1897 = vmatprep.subr.mxu0 %v1765
  %1898 = vmatpush1.msra.mxu0 %v1764
  %1899 = vmatprep.subr.mxu0 %v1761
  %1900 = vmatpush1.msra.mxu0 %v1760
  %1901 = vmatprep.subr.mxu0 %v1757
  %1902 = vmatpush1.msra.mxu0 %v1756
  %1903 = vmatprep.subr.mxu0 %v1753
  %1904 = vmatpush1.msra.mxu0 %v1752
  %1905 = vmatprep.subr.mxu0 %v1749
  %1906 = vmatpush1.msra.mxu0 %v1748
  %1907 = vmatprep.subr.mxu0 %v1745
  %1908 = vmatpush1.msra.mxu0 %v1744
  %1909 = vmatprep.subr.mxu0 0.0
  %1910 = vmatpush2.msra.mxu0 0.0
  %1911 = vmatprep.subr.mxu0 0.0
  %1912 = vmatpush2.msra.mxu0 0.0
  %1913 = vmatprep.subr.mxu0 0.0
  %1914 = vmatpush2.msra.mxu0 0.0
  %1915 = vmatprep.subr.mxu0 0.0
  %1916 = vmatpush2.msra.mxu0 0.0
  %1917 = vmatprep.subr.mxu0 0.0
  %1918 = vmatpush2.msra.mxu0 0.0
  %1919 = vmatprep.subr.mxu0 0.0
  %1920 = vmatpush2.msra.mxu0 0.0
  %1921 = vmatprep.subr.mxu0 0.0
  %1922 = vmatpush2.msra.mxu0 0.0
  %1923 = vmatprep.subr.mxu0 0.0
  %1924 = vmatpush2.msra.mxu0 0.0
  %1925 = vmatprep.subr.mxu0 0.0
  %1926 = vmatpush2.msra.mxu0 0.0
  %1927 = vmatprep.subr.mxu0 0.0
  %1928 = vmatpush2.msra.mxu0 0.0
  %1929 = vmatprep.subr.mxu0 0.0
  %1930 = vmatpush2.msra.mxu0 0.0
  %1931 = vmatprep.subr.mxu0 0.0
  %1932 = vmatpush2.msra.mxu0 0.0
  %1933 = vmatprep.subr.mxu0 0.0
  %1934 = vmatpush2.msra.mxu0 0.0
  %1935 = vmatprep.subr.mxu0 0.0
  %1936 = vmatpush2.msra.mxu0 0.0
  %1937 = vmatprep.subr.mxu0 0.0
  %1938 = vmatpush2.msra.mxu0 0.0
  %1939 = vmatprep.subr.mxu0 0.0
  %1940 = vmatpush2.msra.mxu0 0.0
  %1941 = vmatprep.mubr.f32.mxu0 0.0
  %1942 = vmatmul.mubr.f32.gmra.mxu0 %v1736
  %v1943 = vpop.f32.mrf.mxu0
  %v1944 = vadd.f32 0.0, %v1943
  %v1945 = vpop.f32.mrf.mxu0
  %v1946 = vadd.f32 0.0, %v1945
  %1947 = vdwg.mxu0
  %v1948 = vadd.f32 %v1738, %v1873
  %v1949 = vadd.f32 %v1739, %v1875
  %v1950 = vadd.f32 %v1740, %v1944
  %v1951 = vadd.f32 %v1741, %v1946
  %v1952 = vxor.u32 %v1948, 2147483648
  %v1953 = vmul.f32 %v1952, 1.442695
  %v1954 = vpow.pop %v1953
  %v1955 = vadd.f32 %v1954, 1.0
  %v1956 = vrcp.pop %v1955
  %v1957 = vmul.f32 1.0, %v1956
  %v1958 = vxor.u32 %v1949, 2147483648
  %v1959 = vmul.f32 %v1958, 1.442695
  %v1960 = vpow.pop %v1959
  %v1961 = vadd.f32 %v1960, 1.0
  %v1962 = vrcp.pop %v1961
  %v1963 = vmul.f32 1.0, %v1962
  %v1964 = vtanh.pop %v1950
  %v1965 = vxor.u32 %v1951, 2147483648
  %v1966 = vmul.f32 %v1965, 1.442695
  %v1967 = vpow.pop %v1966
  %v1968 = vadd.f32 %v1967, 1.0
  %v1969 = vrcp.pop %v1968
  %v1970 = vmul.f32 1.0, %v1969
  %v1971 = vmul.f32 %v1963, %v1734
  %v1972 = vmul.f32 %v1957, %v1964
  %v1973 = vadd.f32 %v1971, %v1972
  %v1974 = vtanh.pop %v1973
  %v1975 = vmul.f32 %v1970, %v1974
  %1976 = vst [vmem:[%s5 + $0x28] sm:$0xff] %v1975
  %v1977 = vld [vmem:[#allocation2 + $0xc0] sm:$0xff]
  %v1978 = vld [vmem:[#allocation2 + $0xc8] sm:$0xff]
  %v1979 = vld [vmem:[#allocation2 + $0xd0] sm:$0xff]
  %v1980 = vld [vmem:[#allocation2 + $0xd8] sm:$0xff]
  %v1981 = vld [vmem:[%s3] sm:$0xff]
  %v1982 = vld [vmem:[%s3 + $0x8] sm:$0xff]
  %v1983 = vld [vmem:[%s3 + $0x10] sm:$0xff]
  %v1984 = vld [vmem:[%s3 + $0x18] sm:$0xff]
  %v1985 = vld [vmem:[%s3 + $0x20] sm:$0xff]
  %v1986 = vld [vmem:[%s3 + $0x28] sm:$0xff]
  %v1987 = vld [vmem:[%s3 + $0x30] sm:$0xff]
  %v1988 = vld [vmem:[%s3 + $0x38] sm:$0xff]
  %v1989 = vld [vmem:[%s3 + $0x40] sm:$0xff]
  %v1990 = vld [vmem:[%s3 + $0x48] sm:$0xff]
  %v1991 = vld [vmem:[%s3 + $0x50] sm:$0xff]
  %v1992 = vld [vmem:[%s3 + $0x58] sm:$0xff]
  %v1993 = vld [vmem:[%s3 + $0x60] sm:$0xff]
  %v1994 = vld [vmem:[%s3 + $0x68] sm:$0xff]
  %v1995 = vld [vmem:[%s3 + $0x70] sm:$0xff]
  %v1996 = vld [vmem:[%s3 + $0x78] sm:$0xff]
  %v1997 = vld [vmem:[%s3 + $0x80] sm:$0xff]
  %v1998 = vld [vmem:[%s3 + $0x88] sm:$0xff]
  %v1999 = vld [vmem:[%s3 + $0x90] sm:$0xff]
  %v2000 = vld [vmem:[%s3 + $0x98] sm:$0xff]
  %v2001 = vld [vmem:[%s3 + $0xa0] sm:$0xff]
  %v2002 = vld [vmem:[%s3 + $0xa8] sm:$0xff]
  %v2003 = vld [vmem:[%s3 + $0xb0] sm:$0xff]
  %v2004 = vld [vmem:[%s3 + $0xb8] sm:$0xff]
  %v2005 = vld [vmem:[%s3 + $0xc0] sm:$0xff]
  %v2006 = vld [vmem:[%s3 + $0xc8] sm:$0xff]
  %v2007 = vld [vmem:[%s3 + $0xd0] sm:$0xff]
  %v2008 = vld [vmem:[%s3 + $0xd8] sm:$0xff]
  %v2009 = vld [vmem:[%s3 + $0xe0] sm:$0xff]
  %v2010 = vld [vmem:[%s3 + $0xe8] sm:$0xff]
  %v2011 = vld [vmem:[%s3 + $0xf0] sm:$0xff]
  %v2012 = vld [vmem:[%s3 + $0xf8] sm:$0xff]
  %v2013 = vld [vmem:[%s3 + $0x100] sm:$0xff]
  %v2014 = vld [vmem:[%s3 + $0x108] sm:$0xff]
  %v2015 = vld [vmem:[%s3 + $0x110] sm:$0xff]
  %v2016 = vld [vmem:[%s3 + $0x118] sm:$0xff]
  %v2017 = vld [vmem:[%s3 + $0x120] sm:$0xff]
  %v2018 = vld [vmem:[%s3 + $0x128] sm:$0xff]
  %v2019 = vld [vmem:[%s3 + $0x130] sm:$0xff]
  %v2020 = vld [vmem:[%s3 + $0x138] sm:$0xff]
  %v2021 = vld [vmem:[%s3 + $0x140] sm:$0xff]
  %v2022 = vld [vmem:[%s3 + $0x148] sm:$0xff]
  %v2023 = vld [vmem:[%s3 + $0x150] sm:$0xff]
  %v2024 = vld [vmem:[%s3 + $0x158] sm:$0xff]
  %v2025 = vld [vmem:[%s3 + $0x160] sm:$0xff]
  %v2026 = vld [vmem:[%s3 + $0x168] sm:$0xff]
  %v2027 = vld [vmem:[%s3 + $0x170] sm:$0xff]
  %v2028 = vld [vmem:[%s3 + $0x178] sm:$0xff]
  %v2029 = vld [vmem:[%s3 + $0x180] sm:$0xff]
  %v2030 = vld [vmem:[%s3 + $0x188] sm:$0xff]
  %v2031 = vld [vmem:[%s3 + $0x190] sm:$0xff]
  %v2032 = vld [vmem:[%s3 + $0x198] sm:$0xff]
  %v2033 = vld [vmem:[%s3 + $0x1a0] sm:$0xff]
  %v2034 = vld [vmem:[%s3 + $0x1a8] sm:$0xff]
  %v2035 = vld [vmem:[%s3 + $0x1b0] sm:$0xff]
  %v2036 = vld [vmem:[%s3 + $0x1b8] sm:$0xff]
  %v2037 = vld [vmem:[%s3 + $0x1c0] sm:$0xff]
  %v2038 = vld [vmem:[%s3 + $0x1c8] sm:$0xff]
  %v2039 = vld [vmem:[%s3 + $0x1d0] sm:$0xff]
  %v2040 = vld [vmem:[%s3 + $0x1d8] sm:$0xff]
  %v2041 = vld [vmem:[%s3 + $0x1e0] sm:$0xff]
  %v2042 = vld [vmem:[%s3 + $0x1e8] sm:$0xff]
  %v2043 = vld [vmem:[%s3 + $0x1f0] sm:$0xff]
  %v2044 = vld [vmem:[%s3 + $0x1f8] sm:$0xff]
  %2045 = vmatprep.subr.mxu0 %v2042
  %2046 = vmatpush1.msra.mxu0 %v2041
  %2047 = vmatprep.subr.mxu0 %v2038
  %2048 = vmatpush1.msra.mxu0 %v2037
  %2049 = vmatprep.subr.mxu0 %v2034
  %2050 = vmatpush1.msra.mxu0 %v2033
  %2051 = vmatprep.subr.mxu0 %v2030
  %2052 = vmatpush1.msra.mxu0 %v2029
  %2053 = vmatprep.subr.mxu0 %v2026
  %2054 = vmatpush1.msra.mxu0 %v2025
  %2055 = vmatprep.subr.mxu0 %v2022
  %2056 = vmatpush1.msra.mxu0 %v2021
  %2057 = vmatprep.subr.mxu0 %v2018
  %2058 = vmatpush1.msra.mxu0 %v2017
  %2059 = vmatprep.subr.mxu0 %v2014
  %2060 = vmatpush1.msra.mxu0 %v2013
  %2061 = vmatprep.subr.mxu0 %v2010
  %2062 = vmatpush1.msra.mxu0 %v2009
  %2063 = vmatprep.subr.mxu0 %v2006
  %2064 = vmatpush1.msra.mxu0 %v2005
  %2065 = vmatprep.subr.mxu0 %v2002
  %2066 = vmatpush1.msra.mxu0 %v2001
  %2067 = vmatprep.subr.mxu0 %v1998
  %2068 = vmatpush1.msra.mxu0 %v1997
  %2069 = vmatprep.subr.mxu0 %v1994
  %2070 = vmatpush1.msra.mxu0 %v1993
  %2071 = vmatprep.subr.mxu0 %v1990
  %2072 = vmatpush1.msra.mxu0 %v1989
  %2073 = vmatprep.subr.mxu0 %v1986
  %2074 = vmatpush1.msra.mxu0 %v1985
  %2075 = vmatprep.subr.mxu0 %v1982
  %2076 = vmatpush1.msra.mxu0 %v1981
  %2077 = vmatprep.subr.mxu0 0.0
  %2078 = vmatpush2.msra.mxu0 0.0
  %2079 = vmatprep.subr.mxu0 0.0
  %2080 = vmatpush2.msra.mxu0 0.0
  %2081 = vmatprep.subr.mxu0 0.0
  %2082 = vmatpush2.msra.mxu0 0.0
  %2083 = vmatprep.subr.mxu0 0.0
  %2084 = vmatpush2.msra.mxu0 0.0
  %2085 = vmatprep.subr.mxu0 0.0
  %2086 = vmatpush2.msra.mxu0 0.0
  %2087 = vmatprep.subr.mxu0 0.0
  %2088 = vmatpush2.msra.mxu0 0.0
  %2089 = vmatprep.subr.mxu0 0.0
  %2090 = vmatpush2.msra.mxu0 0.0
  %2091 = vmatprep.subr.mxu0 0.0
  %2092 = vmatpush2.msra.mxu0 0.0
  %2093 = vmatprep.subr.mxu0 0.0
  %2094 = vmatpush2.msra.mxu0 0.0
  %2095 = vmatprep.subr.mxu0 0.0
  %2096 = vmatpush2.msra.mxu0 0.0
  %2097 = vmatprep.subr.mxu0 0.0
  %2098 = vmatpush2.msra.mxu0 0.0
  %2099 = vmatprep.subr.mxu0 0.0
  %2100 = vmatpush2.msra.mxu0 0.0
  %2101 = vmatprep.subr.mxu0 0.0
  %2102 = vmatpush2.msra.mxu0 0.0
  %2103 = vmatprep.subr.mxu0 0.0
  %2104 = vmatpush2.msra.mxu0 0.0
  %2105 = vmatprep.subr.mxu0 0.0
  %2106 = vmatpush2.msra.mxu0 0.0
  %2107 = vmatprep.subr.mxu0 0.0
  %2108 = vmatpush2.msra.mxu0 0.0
  %2109 = vmatprep.mubr.f32.mxu0 0.0
  %2110 = vmatmul.mubr.f32.gmra.mxu0 %v1975
  %v2111 = vpop.f32.mrf.mxu0
  %v2112 = vadd.f32 0.0, %v2111
  %v2113 = vpop.f32.mrf.mxu0
  %v2114 = vadd.f32 0.0, %v2113
  %2115 = vdwg.mxu0
  %2116 = vmatprep.subr.mxu0 %v2044
  %2117 = vmatpush1.msra.mxu0 %v2043
  %2118 = vmatprep.subr.mxu0 %v2040
  %2119 = vmatpush1.msra.mxu0 %v2039
  %2120 = vmatprep.subr.mxu0 %v2036
  %2121 = vmatpush1.msra.mxu0 %v2035
  %2122 = vmatprep.subr.mxu0 %v2032
  %2123 = vmatpush1.msra.mxu0 %v2031
  %2124 = vmatprep.subr.mxu0 %v2028
  %2125 = vmatpush1.msra.mxu0 %v2027
  %2126 = vmatprep.subr.mxu0 %v2024
  %2127 = vmatpush1.msra.mxu0 %v2023
  %2128 = vmatprep.subr.mxu0 %v2020
  %2129 = vmatpush1.msra.mxu0 %v2019
  %2130 = vmatprep.subr.mxu0 %v2016
  %2131 = vmatpush1.msra.mxu0 %v2015
  %2132 = vmatprep.subr.mxu0 %v2012
  %2133 = vmatpush1.msra.mxu0 %v2011
  %2134 = vmatprep.subr.mxu0 %v2008
  %2135 = vmatpush1.msra.mxu0 %v2007
  %2136 = vmatprep.subr.mxu0 %v2004
  %2137 = vmatpush1.msra.mxu0 %v2003
  %2138 = vmatprep.subr.mxu0 %v2000
  %2139 = vmatpush1.msra.mxu0 %v1999
  %2140 = vmatprep.subr.mxu0 %v1996
  %2141 = vmatpush1.msra.mxu0 %v1995
  %2142 = vmatprep.subr.mxu0 %v1992
  %2143 = vmatpush1.msra.mxu0 %v1991
  %2144 = vmatprep.subr.mxu0 %v1988
  %2145 = vmatpush1.msra.mxu0 %v1987
  %2146 = vmatprep.subr.mxu0 %v1984
  %2147 = vmatpush1.msra.mxu0 %v1983
  %2148 = vmatprep.subr.mxu0 0.0
  %2149 = vmatpush2.msra.mxu0 0.0
  %2150 = vmatprep.subr.mxu0 0.0
  %2151 = vmatpush2.msra.mxu0 0.0
  %2152 = vmatprep.subr.mxu0 0.0
  %2153 = vmatpush2.msra.mxu0 0.0
  %2154 = vmatprep.subr.mxu0 0.0
  %2155 = vmatpush2.msra.mxu0 0.0
  %2156 = vmatprep.subr.mxu0 0.0
  %2157 = vmatpush2.msra.mxu0 0.0
  %2158 = vmatprep.subr.mxu0 0.0
  %2159 = vmatpush2.msra.mxu0 0.0
  %2160 = vmatprep.subr.mxu0 0.0
  %2161 = vmatpush2.msra.mxu0 0.0
  %2162 = vmatprep.subr.mxu0 0.0
  %2163 = vmatpush2.msra.mxu0 0.0
  %2164 = vmatprep.subr.mxu0 0.0
  %2165 = vmatpush2.msra.mxu0 0.0
  %2166 = vmatprep.subr.mxu0 0.0
  %2167 = vmatpush2.msra.mxu0 0.0
  %2168 = vmatprep.subr.mxu0 0.0
  %2169 = vmatpush2.msra.mxu0 0.0
  %2170 = vmatprep.subr.mxu0 0.0
  %2171 = vmatpush2.msra.mxu0 0.0
  %2172 = vmatprep.subr.mxu0 0.0
  %2173 = vmatpush2.msra.mxu0 0.0
  %2174 = vmatprep.subr.mxu0 0.0
  %2175 = vmatpush2.msra.mxu0 0.0
  %2176 = vmatprep.subr.mxu0 0.0
  %2177 = vmatpush2.msra.mxu0 0.0
  %2178 = vmatprep.subr.mxu0 0.0
  %2179 = vmatpush2.msra.mxu0 0.0
  %2180 = vmatprep.mubr.f32.mxu0 0.0
  %2181 = vmatmul.mubr.f32.gmra.mxu0 %v1975
  %v2182 = vpop.f32.mrf.mxu0
  %v2183 = vadd.f32 0.0, %v2182
  %v2184 = vpop.f32.mrf.mxu0
  %v2185 = vadd.f32 0.0, %v2184
  %2186 = vdwg.mxu0
  %v2187 = vadd.f32 %v1977, %v2112
  %v2188 = vadd.f32 %v1978, %v2114
  %v2189 = vadd.f32 %v1979, %v2183
  %v2190 = vadd.f32 %v1980, %v2185
  %v2191 = vxor.u32 %v2187, 2147483648
  %v2192 = vmul.f32 %v2191, 1.442695
  %v2193 = vpow.pop %v2192
  %v2194 = vadd.f32 %v2193, 1.0
  %v2195 = vrcp.pop %v2194
  %v2196 = vmul.f32 1.0, %v2195
  %v2197 = vxor.u32 %v2188, 2147483648
  %v2198 = vmul.f32 %v2197, 1.442695
  %v2199 = vpow.pop %v2198
  %v2200 = vadd.f32 %v2199, 1.0
  %v2201 = vrcp.pop %v2200
  %v2202 = vmul.f32 1.0, %v2201
  %v2203 = vtanh.pop %v2189
  %v2204 = vxor.u32 %v2190, 2147483648
  %v2205 = vmul.f32 %v2204, 1.442695
  %v2206 = vpow.pop %v2205
  %v2207 = vadd.f32 %v2206, 1.0
  %v2208 = vrcp.pop %v2207
  %v2209 = vmul.f32 1.0, %v2208
  %v2210 = vmul.f32 %v2202, %v1973
  %v2211 = vmul.f32 %v2196, %v2203
  %v2212 = vadd.f32 %v2210, %v2211
  %v2213 = vtanh.pop %v2212
  %v2214 = vmul.f32 %v2209, %v2213
  %2215 = vst [vmem:[%s5 + $0x30] sm:$0xff] %v2214
  %v2216 = vld [vmem:[#allocation2 + $0xe0] sm:$0xff]
  %v2217 = vld [vmem:[#allocation2 + $0xe8] sm:$0xff]
  %v2218 = vld [vmem:[#allocation2 + $0xf0] sm:$0xff]
  %v2219 = vld [vmem:[#allocation2 + $0xf8] sm:$0xff]
  %v2220 = vld [vmem:[%s3] sm:$0xff]
  %v2221 = vld [vmem:[%s3 + $0x8] sm:$0xff]
  %v2222 = vld [vmem:[%s3 + $0x10] sm:$0xff]
  %v2223 = vld [vmem:[%s3 + $0x18] sm:$0xff]
  %v2224 = vld [vmem:[%s3 + $0x20] sm:$0xff]
  %v2225 = vld [vmem:[%s3 + $0x28] sm:$0xff]
  %v2226 = vld [vmem:[%s3 + $0x30] sm:$0xff]
  %v2227 = vld [vmem:[%s3 + $0x38] sm:$0xff]
  %v2228 = vld [vmem:[%s3 + $0x40] sm:$0xff]
  %v2229 = vld [vmem:[%s3 + $0x48] sm:$0xff]
  %v2230 = vld [vmem:[%s3 + $0x50] sm:$0xff]
  %v2231 = vld [vmem:[%s3 + $0x58] sm:$0xff]
  %v2232 = vld [vmem:[%s3 + $0x60] sm:$0xff]
  %v2233 = vld [vmem:[%s3 + $0x68] sm:$0xff]
  %v2234 = vld [vmem:[%s3 + $0x70] sm:$0xff]
  %v2235 = vld [vmem:[%s3 + $0x78] sm:$0xff]
  %v2236 = vld [vmem:[%s3 + $0x80] sm:$0xff]
  %v2237 = vld [vmem:[%s3 + $0x88] sm:$0xff]
  %v2238 = vld [vmem:[%s3 + $0x90] sm:$0xff]
  %v2239 = vld [vmem:[%s3 + $0x98] sm:$0xff]
  %v2240 = vld [vmem:[%s3 + $0xa0] sm:$0xff]
  %v2241 = vld [vmem:[%s3 + $0xa8] sm:$0xff]
  %v2242 = vld [vmem:[%s3 + $0xb0] sm:$0xff]
  %v2243 = vld [vmem:[%s3 + $0xb8] sm:$0xff]
  %v2244 = vld [vmem:[%s3 + $0xc0] sm:$0xff]
  %v2245 = vld [vmem:[%s3 + $0xc8] sm:$0xff]
  %v2246 = vld [vmem:[%s3 + $0xd0] sm:$0xff]
  %v2247 = vld [vmem:[%s3 + $0xd8] sm:$0xff]
  %v2248 = vld [vmem:[%s3 + $0xe0] sm:$0xff]
  %v2249 = vld [vmem:[%s3 + $0xe8] sm:$0xff]
  %v2250 = vld [vmem:[%s3 + $0xf0] sm:$0xff]
  %v2251 = vld [vmem:[%s3 + $0xf8] sm:$0xff]
  %v2252 = vld [vmem:[%s3 + $0x100] sm:$0xff]
  %v2253 = vld [vmem:[%s3 + $0x108] sm:$0xff]
  %v2254 = vld [vmem:[%s3 + $0x110] sm:$0xff]
  %v2255 = vld [vmem:[%s3 + $0x118] sm:$0xff]
  %v2256 = vld [vmem:[%s3 + $0x120] sm:$0xff]
  %v2257 = vld [vmem:[%s3 + $0x128] sm:$0xff]
  %v2258 = vld [vmem:[%s3 + $0x130] sm:$0xff]
  %v2259 = vld [vmem:[%s3 + $0x138] sm:$0xff]
  %v2260 = vld [vmem:[%s3 + $0x140] sm:$0xff]
  %v2261 = vld [vmem:[%s3 + $0x148] sm:$0xff]
  %v2262 = vld [vmem:[%s3 + $0x150] sm:$0xff]
  %v2263 = vld [vmem:[%s3 + $0x158] sm:$0xff]
  %v2264 = vld [vmem:[%s3 + $0x160] sm:$0xff]
  %v2265 = vld [vmem:[%s3 + $0x168] sm:$0xff]
  %v2266 = vld [vmem:[%s3 + $0x170] sm:$0xff]
  %v2267 = vld [vmem:[%s3 + $0x178] sm:$0xff]
  %v2268 = vld [vmem:[%s3 + $0x180] sm:$0xff]
  %v2269 = vld [vmem:[%s3 + $0x188] sm:$0xff]
  %v2270 = vld [vmem:[%s3 + $0x190] sm:$0xff]
  %v2271 = vld [vmem:[%s3 + $0x198] sm:$0xff]
  %v2272 = vld [vmem:[%s3 + $0x1a0] sm:$0xff]
  %v2273 = vld [vmem:[%s3 + $0x1a8] sm:$0xff]
  %v2274 = vld [vmem:[%s3 + $0x1b0] sm:$0xff]
  %v2275 = vld [vmem:[%s3 + $0x1b8] sm:$0xff]
  %v2276 = vld [vmem:[%s3 + $0x1c0] sm:$0xff]
  %v2277 = vld [vmem:[%s3 + $0x1c8] sm:$0xff]
  %v2278 = vld [vmem:[%s3 + $0x1d0] sm:$0xff]
  %v2279 = vld [vmem:[%s3 + $0x1d8] sm:$0xff]
  %v2280 = vld [vmem:[%s3 + $0x1e0] sm:$0xff]
  %v2281 = vld [vmem:[%s3 + $0x1e8] sm:$0xff]
  %v2282 = vld [vmem:[%s3 + $0x1f0] sm:$0xff]
  %v2283 = vld [vmem:[%s3 + $0x1f8] sm:$0xff]
  %2284 = vmatprep.subr.mxu0 %v2281
  %2285 = vmatpush1.msra.mxu0 %v2280
  %2286 = vmatprep.subr.mxu0 %v2277
  %2287 = vmatpush1.msra.mxu0 %v2276
  %2288 = vmatprep.subr.mxu0 %v2273
  %2289 = vmatpush1.msra.mxu0 %v2272
  %2290 = vmatprep.subr.mxu0 %v2269
  %2291 = vmatpush1.msra.mxu0 %v2268
  %2292 = vmatprep.subr.mxu0 %v2265
  %2293 = vmatpush1.msra.mxu0 %v2264
  %2294 = vmatprep.subr.mxu0 %v2261
  %2295 = vmatpush1.msra.mxu0 %v2260
  %2296 = vmatprep.subr.mxu0 %v2257
  %2297 = vmatpush1.msra.mxu0 %v2256
  %2298 = vmatprep.subr.mxu0 %v2253
  %2299 = vmatpush1.msra.mxu0 %v2252
  %2300 = vmatprep.subr.mxu0 %v2249
  %2301 = vmatpush1.msra.mxu0 %v2248
  %2302 = vmatprep.subr.mxu0 %v2245
  %2303 = vmatpush1.msra.mxu0 %v2244
  %2304 = vmatprep.subr.mxu0 %v2241
  %2305 = vmatpush1.msra.mxu0 %v2240
  %2306 = vmatprep.subr.mxu0 %v2237
  %2307 = vmatpush1.msra.mxu0 %v2236
  %2308 = vmatprep.subr.mxu0 %v2233
  %2309 = vmatpush1.msra.mxu0 %v2232
  %2310 = vmatprep.subr.mxu0 %v2229
  %2311 = vmatpush1.msra.mxu0 %v2228
  %2312 = vmatprep.subr.mxu0 %v2225
  %2313 = vmatpush1.msra.mxu0 %v2224
  %2314 = vmatprep.subr.mxu0 %v2221
  %2315 = vmatpush1.msra.mxu0 %v2220
  %2316 = vmatprep.subr.mxu0 0.0
  %2317 = vmatpush2.msra.mxu0 0.0
  %2318 = vmatprep.subr.mxu0 0.0
  %2319 = vmatpush2.msra.mxu0 0.0
  %2320 = vmatprep.subr.mxu0 0.0
  %2321 = vmatpush2.msra.mxu0 0.0
  %2322 = vmatprep.subr.mxu0 0.0
  %2323 = vmatpush2.msra.mxu0 0.0
  %2324 = vmatprep.subr.mxu0 0.0
  %2325 = vmatpush2.msra.mxu0 0.0
  %2326 = vmatprep.subr.mxu0 0.0
  %2327 = vmatpush2.msra.mxu0 0.0
  %2328 = vmatprep.subr.mxu0 0.0
  %2329 = vmatpush2.msra.mxu0 0.0
  %2330 = vmatprep.subr.mxu0 0.0
  %2331 = vmatpush2.msra.mxu0 0.0
  %2332 = vmatprep.subr.mxu0 0.0
  %2333 = vmatpush2.msra.mxu0 0.0
  %2334 = vmatprep.subr.mxu0 0.0
  %2335 = vmatpush2.msra.mxu0 0.0
  %2336 = vmatprep.subr.mxu0 0.0
  %2337 = vmatpush2.msra.mxu0 0.0
  %2338 = vmatprep.subr.mxu0 0.0
  %2339 = vmatpush2.msra.mxu0 0.0
  %2340 = vmatprep.subr.mxu0 0.0
  %2341 = vmatpush2.msra.mxu0 0.0
  %2342 = vmatprep.subr.mxu0 0.0
  %2343 = vmatpush2.msra.mxu0 0.0
  %2344 = vmatprep.subr.mxu0 0.0
  %2345 = vmatpush2.msra.mxu0 0.0
  %2346 = vmatprep.subr.mxu0 0.0
  %2347 = vmatpush2.msra.mxu0 0.0
  %2348 = vmatprep.mubr.f32.mxu0 0.0
  %2349 = vmatmul.mubr.f32.gmra.mxu0 %v2214
  %v2350 = vpop.f32.mrf.mxu0
  %v2351 = vadd.f32 0.0, %v2350
  %v2352 = vpop.f32.mrf.mxu0
  %v2353 = vadd.f32 0.0, %v2352
  %2354 = vdwg.mxu0
  %2355 = vmatprep.subr.mxu0 %v2283
  %2356 = vmatpush1.msra.mxu0 %v2282
  %2357 = vmatprep.subr.mxu0 %v2279
  %2358 = vmatpush1.msra.mxu0 %v2278
  %2359 = vmatprep.subr.mxu0 %v2275
  %2360 = vmatpush1.msra.mxu0 %v2274
  %2361 = vmatprep.subr.mxu0 %v2271
  %2362 = vmatpush1.msra.mxu0 %v2270
  %2363 = vmatprep.subr.mxu0 %v2267
  %2364 = vmatpush1.msra.mxu0 %v2266
  %2365 = vmatprep.subr.mxu0 %v2263
  %2366 = vmatpush1.msra.mxu0 %v2262
  %2367 = vmatprep.subr.mxu0 %v2259
  %2368 = vmatpush1.msra.mxu0 %v2258
  %2369 = vmatprep.subr.mxu0 %v2255
  %2370 = vmatpush1.msra.mxu0 %v2254
  %2371 = vmatprep.subr.mxu0 %v2251
  %2372 = vmatpush1.msra.mxu0 %v2250
  %2373 = vmatprep.subr.mxu0 %v2247
  %2374 = vmatpush1.msra.mxu0 %v2246
  %2375 = vmatprep.subr.mxu0 %v2243
  %2376 = vmatpush1.msra.mxu0 %v2242
  %2377 = vmatprep.subr.mxu0 %v2239
  %2378 = vmatpush1.msra.mxu0 %v2238
  %2379 = vmatprep.subr.mxu0 %v2235
  %2380 = vmatpush1.msra.mxu0 %v2234
  %2381 = vmatprep.subr.mxu0 %v2231
  %2382 = vmatpush1.msra.mxu0 %v2230
  %2383 = vmatprep.subr.mxu0 %v2227
  %2384 = vmatpush1.msra.mxu0 %v2226
  %2385 = vmatprep.subr.mxu0 %v2223
  %2386 = vmatpush1.msra.mxu0 %v2222
  %2387 = vmatprep.subr.mxu0 0.0
  %2388 = vmatpush2.msra.mxu0 0.0
  %2389 = vmatprep.subr.mxu0 0.0
  %2390 = vmatpush2.msra.mxu0 0.0
  %2391 = vmatprep.subr.mxu0 0.0
  %2392 = vmatpush2.msra.mxu0 0.0
  %2393 = vmatprep.subr.mxu0 0.0
  %2394 = vmatpush2.msra.mxu0 0.0
  %2395 = vmatprep.subr.mxu0 0.0
  %2396 = vmatpush2.msra.mxu0 0.0
  %2397 = vmatprep.subr.mxu0 0.0
  %2398 = vmatpush2.msra.mxu0 0.0
  %2399 = vmatprep.subr.mxu0 0.0
  %2400 = vmatpush2.msra.mxu0 0.0
  %2401 = vmatprep.subr.mxu0 0.0
  %2402 = vmatpush2.msra.mxu0 0.0
  %2403 = vmatprep.subr.mxu0 0.0
  %2404 = vmatpush2.msra.mxu0 0.0
  %2405 = vmatprep.subr.mxu0 0.0
  %2406 = vmatpush2.msra.mxu0 0.0
  %2407 = vmatprep.subr.mxu0 0.0
  %2408 = vmatpush2.msra.mxu0 0.0
  %2409 = vmatprep.subr.mxu0 0.0
  %2410 = vmatpush2.msra.mxu0 0.0
  %2411 = vmatprep.subr.mxu0 0.0
  %2412 = vmatpush2.msra.mxu0 0.0
  %2413 = vmatprep.subr.mxu0 0.0
  %2414 = vmatpush2.msra.mxu0 0.0
  %2415 = vmatprep.subr.mxu0 0.0
  %2416 = vmatpush2.msra.mxu0 0.0
  %2417 = vmatprep.subr.mxu0 0.0
  %2418 = vmatpush2.msra.mxu0 0.0
  %2419 = vmatprep.mubr.f32.mxu0 0.0
  %2420 = vmatmul.mubr.f32.gmra.mxu0 %v2214
  %v2421 = vpop.f32.mrf.mxu0
  %v2422 = vadd.f32 0.0, %v2421
  %v2423 = vpop.f32.mrf.mxu0
  %v2424 = vadd.f32 0.0, %v2423
  %2425 = vdwg.mxu0
  %v2426 = vadd.f32 %v2216, %v2351
  %v2427 = vadd.f32 %v2217, %v2353
  %v2428 = vadd.f32 %v2218, %v2422
  %v2429 = vadd.f32 %v2219, %v2424
  %v2430 = vxor.u32 %v2426, 2147483648
  %v2431 = vmul.f32 %v2430, 1.442695
  %v2432 = vpow.pop %v2431
  %v2433 = vadd.f32 %v2432, 1.0
  %v2434 = vrcp.pop %v2433
  %v2435 = vmul.f32 1.0, %v2434
  %v2436 = vxor.u32 %v2427, 2147483648
  %v2437 = vmul.f32 %v2436, 1.442695
  %v2438 = vpow.pop %v2437
  %v2439 = vadd.f32 %v2438, 1.0
  %v2440 = vrcp.pop %v2439
  %v2441 = vmul.f32 1.0, %v2440
  %v2442 = vtanh.pop %v2428
  %v2443 = vxor.u32 %v2429, 2147483648
  %v2444 = vmul.f32 %v2443, 1.442695
  %v2445 = vpow.pop %v2444
  %v2446 = vadd.f32 %v2445, 1.0
  %v2447 = vrcp.pop %v2446
  %v2448 = vmul.f32 1.0, %v2447
  %v2449 = vmul.f32 %v2441, %v2212
  %v2450 = vmul.f32 %v2435, %v2442
  %v2451 = vadd.f32 %v2449, %v2450
  %v2452 = vtanh.pop %v2451
  %v2453 = vmul.f32 %v2448, %v2452
  %2454 = vst [vmem:[%s5 + $0x38] sm:$0xff] %v2453
  // Predicated region
  $region22: #{joke_generator_forward.2} parent=0 // pred_check
    _
  $region23: #{joke_generator_forward.2} parent=0 // pred_check_branch
    %2456 = sbr.rel (0) target = $region25
  $region24: #{joke_generator_forward.2} parent=0 // pred_region
    _
  $region25: #{joke_generator_forward.2} parent=0 // pred_fallthru
    _
  // Predicated region
  $region26: #{joke_generator_forward.2} parent=0 // pred_check
    _
  $region27: #{joke_generator_forward.2} parent=0 // pred_check_branch
    %2458 = sbr.rel (0) target = $region29
  $region28: #{joke_generator_forward.2} parent=0 // pred_region
    _
  $region29: #{joke_generator_forward.2} parent=0 // pred_fallthru
    _

</llo_original>
